<compile_context>
chip_gen: v7x
topology: tpu7x:2x2x1
jax: 0.10.0
libtpu: 0.0.40
codegen_flags: <defaults>
</compile_context>

<pallas_src>
import functools
from types import SimpleNamespace

import numpy as np

import jax
import jax.numpy as jnp
from jax import lax
from jax.experimental import pallas as pl
from jax.experimental.pallas import tpu as pltpu

_EPS = 1e-8
_POOL_BLOCK_BYTES = 4 * 1024 * 1024   # VMEM budget for one pooling input block
_EVAL_BLOCK_BYTES = 4 * 1024 * 1024   # VMEM budget per eval grid step (all inputs)
_VMEM_LIMIT_BYTES = 48 * 1024 * 1024  # safe on v5e/v6e (128 MiB) and v7x (64 MiB)


# ----------------------------------------------------------------------------
# Small helper: pack a few scalars into the lanes of a lane-dense output block.
# ----------------------------------------------------------------------------
def _pack_lanes(shape, *vals):
    lane = lax.broadcasted_iota(jnp.int32, shape, len(shape) - 1)
    acc = jnp.zeros(shape, jnp.float32)
    for k, v in enumerate(vals):
        acc = acc + jnp.where(lane == k, v, 0.0)
    return acc


# ----------------------------------------------------------------------------
# Kernel 1: adaptive average pooling (divisible windows).
#   Source reshaped to (B*C*h, sh*W); both the H- and W-direction windows are
#   folded into one (sh*W, w) averaging matrix (mean factor included), so the
#   kernel is a single MXU matmul over fully lane-dense blocks.  The matmul
#   mixes only within a row, so garbage in ragged-tail padded rows never leaks
#   into valid output rows (those rows are discarded by the output bounds).
# ----------------------------------------------------------------------------
def _pool_kernel(x_ref, p_ref, o_ref):
    o_ref[...] = jnp.dot(x_ref[...].astype(jnp.float32), p_ref[...],
                         preferred_element_type=jnp.float32,
                         precision=lax.Precision.HIGHEST)  # HIGH also fits 2e-3 tol


def _adaptive_pool(x, h, w):
    """adaptive_avg_pool2d(x, (h, w)) for H % h == 0 and W % w == 0."""
    B, C, H, W = x.shape
    # TODO(synk): general adaptive_avg_pool2d (non-divisible windows) not implemented.
    assert H % h == 0 and W % w == 0, "non-divisible adaptive_avg_pool2d unsupported"
    sh, sw = H // h, W // w
    rows = B * C * h
    shw = sh * W
    x2 = x.reshape(rows, shw)                              # contiguous collapse

    row_bytes = shw * 4
    tn = max(8, (_POOL_BLOCK_BYTES // max(row_bytes, 1)) // 8 * 8)
    if tn >= rows:
        if rows >= 16:          # keep >= 2 grid steps so both v7x TCs get work
            tn = (((rows + 1) // 2) + 7) // 8 * 8
        else:
            tn = rows
    grid_n = pl.cdiv(rows, tn)

    # (sh*W, w) block-averaging matrix with 1/(sh*sw) folded in.
    cols = np.arange(shw, dtype=np.int64) % W
    p_mat = jnp.asarray(
        (cols[:, None] // sw == np.arange(w, dtype=np.int64)[None, :]).astype(np.float32)
        / float(sh * sw))

    out = pl.pallas_call(
        _pool_kernel,
        grid=(grid_n,),
        in_specs=[pl.BlockSpec((tn, shw), lambda i: (i, 0)),
                  pl.BlockSpec((shw, w), lambda i: (0, 0))],
        out_specs=pl.BlockSpec((tn, w), lambda i: (i, 0)),
        out_shape=jax.ShapeDtypeStruct((rows, w), jnp.float32),
        compiler_params=pltpu.CompilerParams(
            dimension_semantics=("parallel",),
            vmem_limit_bytes=_VMEM_LIMIT_BYTES),
    )(x2, p_mat)
    return out.reshape(B, C, h, w)


def _build_pyramid(target, scales):
    """Pooled-target pyramid, computed once, progressively (coarse from fine)."""
    if not scales:
        return {}
    _, _, H, W = target.shape
    needed = sorted(set(scales), key=lambda s: (-(s[0] * s[1]), -s[0]))
    levels = [((H, W), target)]
    pyr = {}
    for (h, w) in needed:
        best = None
        for (Hs, Ws), arr in levels:        # smallest already-computed divisible source
            if Hs % h == 0 and Ws % w == 0:
                if best is None or Hs * Ws < best[0][0] * best[0][1]:
                    best = ((Hs, Ws), arr)
        assert best is not None, "non-divisible adaptive_avg_pool2d unsupported"
        (Hs, Ws), arr = best
        pooled = arr if (Hs == h and Ws == w) else _adaptive_pool(arr, h, w)
        pyr[(h, w)] = pooled
        levels.append(((h, w), pooled))
    return pyr


# ----------------------------------------------------------------------------
# Kernel 2: single fused training-loss kernel over ALL pyramid scales.
#   Grid over batch ("parallel").  For every scale: one combined pooled target
#   ref (flow channels || occ channels, flow already * model_div_flow) plus the
#   fine/coarse flow and occ prediction refs, all as 4-D (1, C, h, w) blocks
#   (sublanes filled by h, lanes by w).  Emits per-batch partial sums packed
#   into a lane-dense (1, 1, 128*k) output block.
# ----------------------------------------------------------------------------
def _fused_loss_kernel(*refs, groups, cf, nv):
    out_ref = refs[-1]
    in_refs = refs[:-1]
    vals = []
    idx = 0
    for (n_flow, n_occ) in groups:
        tgt = in_refs[idx][...].astype(jnp.float32)          # (1, cf+co, h, w)
        idx += 1
        if n_flow:
            ft = tgt[:, :cf]                                  # flow target slice
            for _ in range(n_flow):
                p = in_refs[idx][...].astype(jnp.float32)
                idx += 1
                res = ft - p
                vals.append(jnp.sum(jnp.sqrt(jnp.sum(res * res, axis=1))))
        if n_occ:
            yt = tgt[:, cf:]                                  # occ target slice
            omt = 1.0 - yt
            st = jnp.sum(yt)
            smt = jnp.sum(omt)
            for _ in range(n_occ):
                yp = jax.nn.sigmoid(in_refs[idx][...].astype(jnp.float32))
                idx += 1
                omp = 1.0 - yp
                tp = -jnp.sum(yt * jnp.log(yp + _EPS))
                fn = -jnp.sum(omt * jnp.log(omp + _EPS))
                d_tp = st + jnp.sum(yp) + _EPS
                d_fn = smt + jnp.sum(omp) + _EPS
                vals.append(tp / d_tp + fn / d_fn)
    out_ref[...] = _pack_lanes((1, 1, nv), *vals)


# ----------------------------------------------------------------------------
# Kernel 3: fused eval metrics (EPE mean + F1 counts).
#   Grid (batch "parallel", H-tiles "arbitrary"); 4-D (1, C, TH, W) blocks;
#   partial sums accumulated directly in the resident lane-dense output block.
# ----------------------------------------------------------------------------
def _eval_kernel(fp_ref, ft_ref, ot_ref, op_ref, o_ref, *, H, TH, NV):
    t = pl.program_id(1)

    @pl.when(t == 0)
    def _():
        o_ref[...] = jnp.zeros_like(o_ref)

    fp = fp_ref[...].astype(jnp.float32)                     # (1, Cf, TH, W)
    ft = ft_ref[...].astype(jnp.float32)
    res = ft - fp
    epe = jnp.sqrt(jnp.sum(res * res, axis=1, keepdims=True))  # (1, 1, TH, W)
    valid_e = (t * TH + lax.broadcasted_iota(jnp.int32, epe.shape, 2)) < H
    epe_s = jnp.sum(jnp.where(valid_e, epe, 0.0))            # mask before sum

    yt = ot_ref[...].astype(jnp.float32)                     # (1, Co, TH, W)
    # round(sigmoid(x)) == (x >= 0) except exactly at x == 0 (measure zero).
    yp = (op_ref[...].astype(jnp.float32) >= 0.0).astype(jnp.float32)
    valid_o = (t * TH + lax.broadcasted_iota(jnp.int32, yt.shape, 2)) < H
    yt = jnp.where(valid_o, yt, 0.0)
    yp = jnp.where(valid_o, yp, 0.0)
    tp = jnp.sum(yp * yt)
    sp = jnp.sum(yp)
    st = jnp.sum(yt)

    o_ref[...] += _pack_lanes((1, 1, NV), epe_s, tp, sp, st)


def _eval_metrics(flow_pred, flow_tgt, occ_tgt, occ_logits):
    B, Cf, H, W = flow_pred.shape
    Co_p = occ_logits.shape[1]
    Co_t = occ_tgt.shape[1]
    NV = 128

    row_bytes = (2 * Cf + Co_p + Co_t) * W * 4
    th = max(8, (_EVAL_BLOCK_BYTES // max(row_bytes * 2, 1)) // 8 * 8)
    if th >= H:
        th, nt = H, 1
    else:
        nt = pl.cdiv(H, th)

    out = pl.pallas_call(
        functools.partial(_eval_kernel, H=H, TH=th, NV=NV),
        grid=(B, nt),
        in_specs=[pl.BlockSpec((1, Cf, th, W), lambda b, t: (b, 0, t, 0)),
                  pl.BlockSpec((1, Cf, th, W), lambda b, t: (b, 0, t, 0)),
                  pl.BlockSpec((1, Co_t, th, W), lambda b, t: (b, 0, t, 0)),
                  pl.BlockSpec((1, Co_p, th, W), lambda b, t: (b, 0, t, 0))],
        out_specs=pl.BlockSpec((1, 1, NV), lambda b, t: (b, 0, 0)),
        out_shape=jax.ShapeDtypeStruct((B, 1, NV), jnp.float32),
        compiler_params=pltpu.CompilerParams(
            dimension_semantics=("parallel", "arbitrary"),
            vmem_limit_bytes=_VMEM_LIMIT_BYTES),
    )(flow_pred, flow_tgt, occ_tgt, occ_logits)

    epe_mean = jnp.sum(out[:, 0, 0]) / (B * H * W)
    # TODO(synk): F1 assumes a single occlusion channel for the per-(B,C) mean.
    tp, sp, st = out[:, 0, 1], out[:, 0, 2], out[:, 0, 3]
    beta2 = 1.0
    precision = tp / (sp + _EPS)
    recall = tp / (st + _EPS)
    f1 = jnp.mean(precision * recall / (precision * beta2 + recall + _EPS)
                  * (1.0 + beta2))
    return epe_mean, f1


# ----------------------------------------------------------------------------
# Module equivalent
# ----------------------------------------------------------------------------
class MultiScaleEPE_PWC_Occ_upsample:
    def __init__(self, args):
        self._args = args
        self._batch_size = args.batch_size
        self._weights = [0.32, 0.08, 0.02, 0.01, 0.005, 0.00125, 0.0003125]
        self.training = True                      # nn.Module default

    def __call__(self, output_dict, target_dict):
        loss_dict = {}
        if self.training:
            output_flo = list(output_dict['flow'])
            output_occ = list(output_dict['occ'])
            flo_coarse = list(output_dict['flow_coarse'])
            occ_coarse = list(output_dict['occ_coarse'])
            target1 = target_dict['target1']
            target_occ1 = target_dict['target_occ1']
            B, cf, H, W = target1.shape
            co = target_occ1.shape[1]
            assert target_occ1.shape[2:] == target1.shape[2:], \
                "flow/occ targets must share spatial size"
            div_flow = float(self._args.model_div_flow)

            # Combined, pre-scaled target (div_flow fused into the concat):
            # full-resolution targets read from HBM once per pyramid build.
            combined = jnp.concatenate(
                [div_flow * target1.astype(jnp.float32),
                 target_occ1.astype(jnp.float32)], axis=1)

            # Flat term list: (kind, level index, is_coarse, prediction)
            terms = []
            for i, p in enumerate(output_flo):
                terms.append(('flow', i, False, p))
                if i < len(flo_coarse):
                    terms.append(('flow', i, True, flo_coarse[i]))
            for i, p in enumerate(output_occ):
                terms.append(('occ', i, False, p))
                if i < len(occ_coarse):
                    terms.append(('occ', i, True, occ_coarse[i]))

            fine_f, coarse_f, fine_o, coarse_o = {}, {}, {}, {}
            if terms:
                scales = sorted({tuple(t[3].shape[2:]) for t in terms},
                                key=lambda s: -(s[0] * s[1]))
                pyr = _build_pyramid(combined, scales)

                # Group terms by scale: one combined target ref + preds.
                groups, operands, in_specs, term_meta = [], [], [], []
                lane = 0
                for (h, w) in scales:
                    fl = [t for t in terms
                          if t[0] == 'flow' and tuple(t[3].shape[2:]) == (h, w)]
                    oc = [t for t in terms
                          if t[0] == 'occ' and tuple(t[3].shape[2:]) == (h, w)]
                    operands.append(pyr[(h, w)])
                    in_specs.append(pl.BlockSpec((1, cf + co, h, w),
                                                 lambda b: (b, 0, 0, 0)))
                    for (_, i, is_c, p) in fl + oc:
                        operands.append(p)
                        in_specs.append(pl.BlockSpec((1, p.shape[1], h, w),
                                                     lambda b: (b, 0, 0, 0)))
                        term_meta.append((lane, _kind := ('flow' if (_, i, is_c, p) in fl else 'occ'),
                                          i, is_c, h, w)) if False else None
                    # (explicit loops below keep ordering identical to the kernel)
                    for (_, i, is_c, p) in fl:
                        term_meta.append((lane, 'flow', i, is_c, h, w))
                        lane += 1
                    for (_, i, is_c, p) in oc:
                        term_meta.append((lane, 'occ', i, is_c, h, w))
                        lane += 1
                    groups.append((len(fl), len(oc)))

                n_terms = lane
                nv = max(128, ((n_terms + 127) // 128) * 128)
                out = pl.pallas_call(
                    functools.partial(_fused_loss_kernel,
                                      groups=tuple(groups), cf=cf, nv=nv),
                    grid=(B,),
                    in_specs=in_specs,
                    out_specs=pl.BlockSpec((1, 1, nv), lambda b: (b, 0, 0)),
                    out_shape=jax.ShapeDtypeStruct((B, 1, nv), jnp.float32),
                    compiler_params=pltpu.CompilerParams(
                        dimension_semantics=("parallel",),
                        vmem_limit_bytes=_VMEM_LIMIT_BYTES),
                )(*operands)
                sums = jnp.sum(out[:, 0, :], axis=0)          # (nv,)

                for (ln, kind, i, is_c, h, w) in term_meta:
                    v = sums[ln]
                    if kind == 'occ':
                        v = v * (h * w * 0.5)
                        (coarse_o if is_c else fine_o)[i] = v
                    else:
                        (coarse_f if is_c else fine_f)[i] = v

            flow_loss = jnp.float32(0.0)
            for i in range(len(output_flo)):
                w_i = self._weights[i]
                if i in coarse_f:
                    flow_loss = flow_loss + (w_i * coarse_f[i] + w_i * fine_f[i]) / 2
                else:
                    flow_loss = flow_loss + w_i * fine_f[i]

            occ_loss = jnp.float32(0.0)
            for i in range(len(output_occ)):
                w_i = self._weights[i]
                if i in coarse_o:
                    occ_loss = occ_loss + (w_i * coarse_o[i] + w_i * fine_o[i]) / 2
                else:
                    occ_loss = occ_loss + w_i * fine_o[i]

            f_loss = lax.stop_gradient(flow_loss)              # .detach()
            o_loss = lax.stop_gradient(occ_loss)
            # NOTE: the original PyTorch `(f_loss.data > o_loss.data).numpy` is a
            # truthy bound-method access, so the first branch is ALWAYS taken.
            # Reproduced here.  (o_l_w is NaN/Inf if occ_loss == 0, as in torch.)
            f_l_w = 1.0
            o_l_w = f_loss / o_loss
            loss_dict['flow_loss'] = flow_loss / self._batch_size
            loss_dict['occ_loss'] = occ_loss / self._batch_size
            loss_dict['total_loss'] = (flow_loss * f_l_w
                                       + occ_loss * o_l_w) / self._batch_size
        else:
            epe, f1 = _eval_metrics(output_dict['flow'], target_dict['target1'],
                                    target_dict['target_occ1'], output_dict['occ'])
            loss_dict['epe'] = epe
            loss_dict['F1'] = f1
        return loss_dict


# ----------------------------------------------------------------------------
# Pure-JAX reference (correctness check only)
# ----------------------------------------------------------------------------
def _reference_losses(output_dict, target_dict, args):
    weights = [0.32, 0.08, 0.02, 0.01, 0.005, 0.00125, 0.0003125]

    def down(x, h, w):
        B, C, H, W = x.shape
        return x.reshape(B, C, h, H // h, w, W // w).mean(axis=(3, 5))

    def epe_sum(pred, tgt_full):
        _, _, h, w = pred.shape
        t = down(tgt_full, h, w)
        return jnp.sum(jnp.sqrt(jnp.sum((t - pred) ** 2, axis=1)))

    def bal(logits, tgt_full):
        eps = 1e-8
        _, _, h, w = logits.shape
        yp = jax.nn.sigmoid(logits)
        yt = down(tgt_full, h, w)
        tp = -(yt * jnp.log(yp + eps)).sum(axis=(1, 2, 3))
        fn = -((1 - yt) * jnp.log(1 - yp + eps)).sum(axis=(1, 2, 3))
        dtp = yt.sum(axis=(1, 2, 3)) + yp.sum(axis=(1, 2, 3)) + eps
        dfn = (1 - yt).sum(axis=(1, 2, 3)) + (1 - yp).sum(axis=(1, 2, 3)) + eps
        return ((tp / dtp).sum() + (fn / dfn).sum()) * h * w * 0.5

    tf_ = args.model_div_flow * target_dict['target1']
    to_ = target_dict['target_occ1']

    flow_loss = 0.0
    for i, o in enumerate(output_dict['flow']):
        if i < len(output_dict['flow_coarse']):
            flow_loss = flow_loss + (weights[i] * epe_sum(output_dict['flow_coarse'][i], tf_)
                                     + weights[i] * epe_sum(o, tf_)) / 2
        else:
            flow_loss = flow_loss + weights[i] * epe_sum(o, tf_)

    occ_loss = 0.0
    for i, o in enumerate(output_dict['occ']):
        if i < len(output_dict['occ_coarse']):
            occ_loss = occ_loss + (weights[i] * bal(output_dict['occ_coarse'][i], to_)
                                   + weights[i] * bal(o, to_)) / 2
        else:
            occ_loss = occ_loss + weights[i] * bal(o, to_)

    B = args.batch_size
    return {'flow_loss': flow_loss / B,
            'occ_loss': occ_loss / B,
            'total_loss': (flow_loss * 1.0 + occ_loss * (flow_loss / occ_loss)) / B}


# ----------------------------------------------------------------------------
if __name__ == "__main__":
    key = jax.random.PRNGKey(0)
    B, H, W = 2, 96, 224
    args = SimpleNamespace(batch_size=B, model_div_flow=0.05)

    scales = [(24, 56), (12, 28), (6, 14)]
    n_coarse = 2
    keys = iter(jax.random.split(key, 20))

    output_flo = [jax.random.normal(next(keys), (B, 2, h, w), jnp.float32)
                  for (h, w) in scales]
    output_flo_coarse = [jax.random.normal(next(keys), (B, 2, h, w), jnp.float32)
                         for (h, w) in scales[:n_coarse]]
    output_occ = [jax.random.normal(next(keys), (B, 1, h, w), jnp.float32)
                  for (h, w) in scales]
    output_occ_coarse = [jax.random.normal(next(keys), (B, 1, h, w), jnp.float32)
                         for (h, w) in scales[:n_coarse]]
    target1 = jax.random.normal(next(keys), (B, 2, H, W), jnp.float32) * 5.0
    target_occ1 = jnp.round(jax.random.uniform(next(keys), (B, 1, H, W), jnp.float32))

    flow_full = jax.random.normal(next(keys), (B, 2, H, W), jnp.float32) * 5.0
    occ_full = jax.random.normal(next(keys), (B, 1, H, W), jnp.float32)

    output_dict = {'flow': output_flo, 'occ': output_occ,
                   'flow_coarse': output_flo_coarse, 'occ_coarse': output_occ_coarse}
    target_dict = {'target1': target1, 'target_occ1': target_occ1}

    loss_fn = MultiScaleEPE_PWC_Occ_upsample(args)

    # training branch (default self.training = True)
    loss_dict = loss_fn(output_dict, target_dict)
    loss_dict = jax.tree_util.tree_map(jax.block_until_ready, loss_dict)

    ref = _reference_losses(output_dict, target_dict, args)
    for k in ('flow_loss', 'occ_loss', 'total_loss'):
        np.testing.assert_allclose(np.asarray(loss_dict[k]), np.asarray(ref[k]),
                                   rtol=2e-3, atol=2e-3)

    # eval branch
    loss_fn.training = False
    eval_dict = loss_fn({'flow': flow_full, 'occ': occ_full}, target_dict)
    eval_dict = jax.tree_util.tree_map(jax.block_until_ready, eval_dict)

    eps = 1e-8
    epe_ref = jnp.mean(jnp.sqrt(jnp.sum((target1 - flow_full) ** 2, axis=1)))
    yp = jnp.round(jax.nn.sigmoid(occ_full))
    yt = target_occ1
    tp = jnp.sum(yp * yt, axis=(2, 3))
    prec = tp / (jnp.sum(yp, axis=(2, 3)) + eps)
    rec = tp / (jnp.sum(yt, axis=(2, 3)) + eps)
    f1_ref = jnp.mean(prec * rec / (prec + rec + eps) * 2.0)
    np.testing.assert_allclose(np.asarray(eval_dict['epe']), np.asarray(epe_ref),
                               rtol=2e-3, atol=2e-3)
    np.testing.assert_allclose(np.asarray(eval_dict['F1']), np.asarray(f1_ref),
                               rtol=2e-3, atol=2e-3)

    print("KERNEL_OK")
</pallas_src>

<mosaic_0001>
module attributes {stable_mosaic.version = 11 : i64} {
  func.func @_pool_kernel(%arg0: i32, %arg1: memref<72x896xf32, #tpu.memory_space<vmem>>, %arg2: memref<896x56xf32, #tpu.memory_space<vmem>>, %arg3: memref<72x56xf32, #tpu.memory_space<vmem>>) attributes {dimension_semantics = [#tpu.dimension_semantics<parallel>], iteration_bounds = array<i64: 2>, scalar_prefetch = 0 : i64, scratch_operands = 0 : i64, tpu.core_type = #tpu.core_type<tc>, window_params = [{transform_indices = @transform_0, window_bounds = array<i64: 72, 896>}, {pipeline_mode = #tpu.pipeline_mode<synchronous>, transform_indices = @transform_1, window_bounds = array<i64: 896, 56>}, {transform_indices = @transform_2, window_bounds = array<i64: 72, 56>}]} {
    %c0 = arith.constant 0 : index
    %c0_0 = arith.constant 0 : index
    %0 = vector.load %arg1[%c0, %c0_0] : memref<72x896xf32, #tpu.memory_space<vmem>>, vector<72x896xf32>
    %c0_1 = arith.constant 0 : index
    %c0_2 = arith.constant 0 : index
    %1 = vector.load %arg2[%c0_1, %c0_2] : memref<896x56xf32, #tpu.memory_space<vmem>>, vector<896x56xf32>
    %cst = arith.constant dense<0.000000e+00> : vector<72x56xf32>
    %2 = tpu.matmul %0, %1, %cst {dimension_numbers = #tpu.dot_dimension_numbers<[1], [0], [0], [1], [0, 0, 1, 1], [], []>, precision = #tpu.contract_precision<fp32>} : vector<72x896xf32>, vector<896x56xf32>, vector<72x56xf32> -> vector<72x56xf32>
    %c0_3 = arith.constant 0 : index
    %c0_4 = arith.constant 0 : index
    %3 = vector.load %arg3[%c0_3, %c0_4] : memref<72x56xf32, #tpu.memory_space<vmem>>, vector<72x56xf32>
    tpu.vector_store %arg3[%c0_3, %c0_4], %2 {strides = array<i32>} : memref<72x56xf32, #tpu.memory_space<vmem>>, vector<72x56xf32>,
    return
  }
  func.func @transform_0(%arg0: i32) -> (i32, i32) {
    %c0_i32 = arith.constant 0 : i32
    %c0_i32_0 = arith.constant 0 : i32
    return %arg0, %c0_i32 : i32, i32
  }
  func.func @transform_1(%arg0: i32) -> (i32, i32) {
    %c0_i32 = arith.constant 0 : i32
    %c0_i32_0 = arith.constant 0 : i32
    %c0_i32_1 = arith.constant 0 : i32
    return %c0_i32, %c0_i32_0 : i32, i32
  }
  func.func @transform_2(%arg0: i32) -> (i32, i32) {
    %c0_i32 = arith.constant 0 : i32
    %c0_i32_0 = arith.constant 0 : i32
    return %arg0, %c0_i32 : i32, i32
  }
}

</mosaic_0001>

<llo_original>
// kernel: tpu_custom_call.1
$region0: #{tpu_custom_call.1}
  #allocation0 [shape = 'u32[]', space=smem, size = 0x4, offset = 0x4, fixed_abs, tag = 'smem constant byte address 0x4 - core index']
  #allocation1 [shape = 'u32[144,128]{1,0:T(1,128)}', space=vmem, size = 0x12000, scoped, tag = 'internal scratch']
  %s0 = inlined_call_operand.vmem [shape: f32[144,896], index: 0, kind: input, shape index: {}]
  %s1 = inlined_call_operand.vmem [shape: f32[896,56], index: 1, kind: input, shape index: {}]
  %s2 = inlined_call_operand.vmem [shape: f32[144,56], index: 2, kind: output, shape index: {}]
  %s3 = sld [smem:[#allocation0]]
  $region41: #{tpu_custom_call.1} parent=0
    _
  %s5 = ssub.s32 1, %s3
  %s6 = scalar_select 0, %s5, %s3
  loop: start=0, step=1, limit=4
  $region2: #{tpu_custom_call.1} parent=0 // loop_pre_header
    _
  $region3: #{tpu_custom_call.1} parent=0 // loop_header
    %s8 = sphi 0, %s12
    %p9 = scmp.ge.s32.totalorder %s8, 4
    %s18 = sphi 0, %s20
    %s21 = sphi 0, %s18
    %s22 = sphi 0, %s21
    %s38 = sphi 0, %s22
    %s42 = sphi 0, %s42
    %s44 = sphi 0, %s42
    %s45 = sphi 0, %s44
    %s59 = sphi 0, %s45
    %s65 = sphi 0, %s67
    %s68 = sphi 0, %s65
    %s69 = sphi 0, %s68
    %s85 = sphi 0, %s69
  $region4: #{tpu_custom_call.1} parent=0 // loop_header_branch
    %11 = sbr.rel (%p9) target = $region8
  $region5: #{tpu_custom_call.1} parent=0 // loop_body
    %s13 = ssub.s32 %s8, 1
    %s14 = ssub.s32 %s8, 2
    %s15 = sadd.s32 %s8, 1
    %s16 = ssub.s32 %s8, %s15
    %p17 = scmp.eq.s32.totalorder %s16, 0
    %s19 = sadd.s32 %s18, 1
    %s20 = scalar_select %p17, %s18, %s19
    %p23 = pneg %p17
    %p24 = scmp.eq.s32.totalorder %s8, 1
    %p25 = por %p23, %p24
    %p26 = scmp.ne.s32.totalorder %s18, %s21
    %p27 = scmp.eq.s32.totalorder %s8, 0
    %p28 = por %p26, %p27
    %p29 = scmp.ne.s32.totalorder %s18, %s21
    %p30 = scmp.eq.s32.totalorder %s13, 1
    %p31 = por %p29, %p30
    %p32 = scmp.ne.s32.totalorder %s21, %s22
    %p33 = scmp.eq.s32.totalorder %s13, 0
    %p34 = por %p32, %p33
    %p35 = scmp.ne.s32.totalorder %s21, %s22
    %p36 = scmp.eq.s32.totalorder %s14, 1
    %p37 = por %p35, %p36
    %p39 = scmp.ne.s32.totalorder %s22, %s38
    %p40 = scmp.eq.s32.totalorder %s14, 0
    %p41 = por %p39, %p40
    %s43 = sadd.s32 %s42, 1
    %p46 = scmp.eq.s32.totalorder %s8, 1
    %p47 = scmp.ne.s32.totalorder %s42, %s44
    %p48 = scmp.eq.s32.totalorder %s8, 0
    %p49 = por %p47, %p48
    %p50 = scmp.ne.s32.totalorder %s42, %s44
    %p51 = scmp.eq.s32.totalorder %s13, 1
    %p52 = por %p50, %p51
    %p53 = scmp.ne.s32.totalorder %s44, %s45
    %p54 = scmp.eq.s32.totalorder %s13, 0
    %p55 = por %p53, %p54
    %p56 = scmp.ne.s32.totalorder %s44, %s45
    %p57 = scmp.eq.s32.totalorder %s14, 1
    %p58 = por %p56, %p57
    %p60 = scmp.ne.s32.totalorder %s45, %s59
    %p61 = scmp.eq.s32.totalorder %s14, 0
    %p62 = por %p60, %p61
    %s63 = ssub.s32 %s8, %s15
    %p64 = scmp.eq.s32.totalorder %s63, 0
    %s66 = sadd.s32 %s65, 1
    %s67 = scalar_select %p64, %s65, %s66
    %p70 = pneg %p64
    %p71 = scmp.eq.s32.totalorder %s8, 1
    %p72 = por %p70, %p71
    %p73 = scmp.ne.s32.totalorder %s65, %s68
    %p74 = scmp.eq.s32.totalorder %s8, 0
    %p75 = por %p73, %p74
    %p76 = scmp.ne.s32.totalorder %s65, %s68
    %p77 = scmp.eq.s32.totalorder %s13, 1
    %p78 = por %p76, %p77
    %p79 = scmp.ne.s32.totalorder %s68, %s69
    %p80 = scmp.eq.s32.totalorder %s13, 0
    %p81 = por %p79, %p80
    %p82 = scmp.ne.s32.totalorder %s68, %s69
    %p83 = scmp.eq.s32.totalorder %s14, 1
    %p84 = por %p82, %p83
    %p86 = scmp.ne.s32.totalorder %s69, %s85
    %p87 = scmp.eq.s32.totalorder %s14, 0
    %p88 = por %p86, %p87
    %p89 = scmp.le.s32.totalorder 1, %s8
    %p90 = scmp.lt.s32.totalorder %s8, 3
    %p91 = pnand %p89, %p90
    %p92 = pneg %p91
    // Predicated region
    $region9: #{tpu_custom_call.1} parent=5 // pred_check
      _
    $region10: #{tpu_custom_call.1} parent=5 // pred_check_branch
      %94 = sbr.rel (%p91) target = $region12
    $region11: #{tpu_custom_call.1} parent=5 // pred_region
      %s95 = ssub.s32 %s8, 1
      // Predicated region
      $region13: #{tpu_custom_call.1} parent=11 // pred_check
        %p96 = pneg %p55
      $region14: #{tpu_custom_call.1} parent=11 // pred_check_branch
        %98 = sbr.rel (%p96) target = $region16
      $region15: #{tpu_custom_call.1} parent=11 // pred_region
        _
      $region16: #{tpu_custom_call.1} parent=11 // pred_fallthru
        _
    $region12: #{tpu_custom_call.1} parent=5 // pred_fallthru
      _
    %p99 = scmp.lt.s32.totalorder %s8, 2
    // Predicated region
    $region17: #{tpu_custom_call.1} parent=5 // pred_check
      %p100 = pneg %p99
    $region18: #{tpu_custom_call.1} parent=5 // pred_check_branch
      %102 = sbr.rel (%p100) target = $region20
    $region19: #{tpu_custom_call.1} parent=5 // pred_region
      // Predicated region
      $region21: #{tpu_custom_call.1} parent=19 // pred_check
        %p103 = pneg %p28
      $region22: #{tpu_custom_call.1} parent=19 // pred_check_branch
        %105 = sbr.rel (%p103) target = $region24
      $region23: #{tpu_custom_call.1} parent=19 // pred_region
        %s106 = smul.u32 9, %s8
        %p107 = scmp.lt.s32.totalorder %s106, 17
        %s108 = scalar_select %p107, %s106, 17
        %s109 = smul.addr %s108, 7
        %s110 = smul.addr %s109, 8
        %s111 = scalar_lea.vmem %s0, %s110
        %s112 = smul.u32 9, %s8
      $region24: #{tpu_custom_call.1} parent=19 // pred_fallthru
        _
    $region20: #{tpu_custom_call.1} parent=5 // pred_fallthru
      _
    %p113 = scmp.le.s32.totalorder 1, %s8
    %p114 = scmp.lt.s32.totalorder %s8, 3
    %p115 = pnand %p113, %p114
    %p116 = pneg %p115
    // Predicated region
    $region25: #{tpu_custom_call.1} parent=5 // pred_check
      _
    $region26: #{tpu_custom_call.1} parent=5 // pred_check_branch
      %118 = sbr.rel (%p115) target = $region28
    $region27: #{tpu_custom_call.1} parent=5 // pred_region
      %s119 = ssub.s32 %s8, 1
      %s120 = smul.u32 9, %s13
      %p121 = scmp.lt.s32.totalorder %s120, 17
      %s122 = scalar_select %p121, %s120, 17
      %s123 = smul.addr %s122, 7
      %s124 = smul.addr %s123, 8
      %s125 = scalar_lea.vmem %s0, %s124
      %p126 = pneg %p34
      %p127 = pneg %p31
      %p128 = pneg %p55
      %p129 = pneg %p52
      %p130 = pneg %p81
      %p131 = pneg %p78
      %s132 = smul.u32 9, %s13
      %p133 = scmp.lt.s32.totalorder %s132, 17
      %s134 = scalar_select %p133, %s132, 17
      %s135 = smul.addr %s134, 8
      %s136 = scalar_lea.vmem %s2, %s135
      %s137 = smul.u32 9, %s13
      %p138 = scmp.lt.s32.totalorder %s137, 17
      %s139 = scalar_select %p138, %s137, 17
      %s140 = smul.addr %s139, 7
      %s141 = smul.addr %s140, 8
      %s142 = scalar_lea.vmem %s0, %s141
      %s143 = smul.u32 9, %s13
      %s144 = smul.u32 9, %s13
      %p145 = scmp.lt.s32.totalorder %s144, 17
      %s146 = scalar_select %p145, %s144, 17
      %s147 = smul.addr %s146, 8
      %s148 = scalar_lea.vmem %s2, %s147
      %s149 = smul.u32 9, %s13
      %v150 = vld [vmem:[%s142] sm:$0xff]
      %v151 = vld [vmem:[%s142 + $0x8] sm:$0xff]
      %v152 = vld [vmem:[%s142 + $0x10] sm:$0xff]
      %v153 = vld [vmem:[%s142 + $0x18] sm:$0xff]
      %v154 = vld [vmem:[%s142 + $0x20] sm:$0xff]
      %v155 = vld [vmem:[%s142 + $0x28] sm:$0xff]
      %v156 = vld [vmem:[%s142 + $0x30] sm:$0xff]
      %v157 = vld [vmem:[%s142 + $0x38] sm:$0xff]
      %v158 = vld [vmem:[%s142 + $0x40] sm:$0xff]
      %v159 = vld [vmem:[%s142 + $0x48] sm:$0xff]
      %v160 = vld [vmem:[%s142 + $0x50] sm:$0xff]
      %v161 = vld [vmem:[%s142 + $0x58] sm:$0xff]
      %v162 = vld [vmem:[%s142 + $0x60] sm:$0xff]
      %v163 = vld [vmem:[%s142 + $0x68] sm:$0xff]
      %v164 = vld [vmem:[%s142 + $0x70] sm:$0xff]
      %v165 = vld [vmem:[%s142 + $0x78] sm:$0xff]
      %v166 = vld [vmem:[%s142 + $0x80] sm:$0xff]
      %v167 = vld [vmem:[%s142 + $0x88] sm:$0xff]
      %v168 = vld [vmem:[%s142 + $0x90] sm:$0xff]
      %v169 = vld [vmem:[%s142 + $0x98] sm:$0xff]
      %v170 = vld [vmem:[%s142 + $0xa0] sm:$0xff]
      %v171 = vld [vmem:[%s142 + $0xa8] sm:$0xff]
      %v172 = vld [vmem:[%s142 + $0xb0] sm:$0xff]
      %v173 = vld [vmem:[%s142 + $0xb8] sm:$0xff]
      %v174 = vld [vmem:[%s142 + $0xc0] sm:$0xff]
      %v175 = vld [vmem:[%s142 + $0xc8] sm:$0xff]
      %v176 = vld [vmem:[%s142 + $0xd0] sm:$0xff]
      %v177 = vld [vmem:[%s142 + $0xd8] sm:$0xff]
      %v178 = vld [vmem:[%s142 + $0xe0] sm:$0xff]
      %v179 = vld [vmem:[%s142 + $0xe8] sm:$0xff]
      %v180 = vld [vmem:[%s142 + $0xf0] sm:$0xff]
      %v181 = vld [vmem:[%s142 + $0xf8] sm:$0xff]
      %v182 = vld [vmem:[%s142 + $0x100] sm:$0xff]
      %v183 = vld [vmem:[%s142 + $0x108] sm:$0xff]
      %v184 = vld [vmem:[%s142 + $0x110] sm:$0xff]
      %v185 = vld [vmem:[%s142 + $0x118] sm:$0xff]
      %v186 = vld [vmem:[%s142 + $0x120] sm:$0xff]
      %v187 = vld [vmem:[%s142 + $0x128] sm:$0xff]
      %v188 = vld [vmem:[%s142 + $0x130] sm:$0xff]
      %v189 = vld [vmem:[%s142 + $0x138] sm:$0xff]
      %v190 = vld [vmem:[%s142 + $0x140] sm:$0xff]
      %v191 = vld [vmem:[%s142 + $0x148] sm:$0xff]
      %v192 = vld [vmem:[%s142 + $0x150] sm:$0xff]
      %v193 = vld [vmem:[%s142 + $0x158] sm:$0xff]
      %v194 = vld [vmem:[%s142 + $0x160] sm:$0xff]
      %v195 = vld [vmem:[%s142 + $0x168] sm:$0xff]
      %v196 = vld [vmem:[%s142 + $0x170] sm:$0xff]
      %v197 = vld [vmem:[%s142 + $0x178] sm:$0xff]
      %v198 = vld [vmem:[%s142 + $0x180] sm:$0xff]
      %v199 = vld [vmem:[%s142 + $0x188] sm:$0xff]
      %v200 = vld [vmem:[%s142 + $0x190] sm:$0xff]
      %v201 = vld [vmem:[%s142 + $0x198] sm:$0xff]
      %v202 = vld [vmem:[%s142 + $0x1a0] sm:$0xff]
      %v203 = vld [vmem:[%s142 + $0x1a8] sm:$0xff]
      %v204 = vld [vmem:[%s142 + $0x1b0] sm:$0xff]
      %v205 = vld [vmem:[%s142 + $0x1b8] sm:$0xff]
      %v206 = vld [vmem:[%s142 + $0x1c0] sm:$0xff]
      %v207 = vld [vmem:[%s142 + $0x1c8] sm:$0xff]
      %v208 = vld [vmem:[%s142 + $0x1d0] sm:$0xff]
      %v209 = vld [vmem:[%s142 + $0x1d8] sm:$0xff]
      %v210 = vld [vmem:[%s142 + $0x1e0] sm:$0xff]
      %v211 = vld [vmem:[%s142 + $0x1e8] sm:$0xff]
      %v212 = vld [vmem:[%s142 + $0x1f0] sm:$0xff]
      %v213 = vld [vmem:[%s1] sm:$0xff]
      %v214 = vld [vmem:[%s1 + $0x8] sm:$0xff]
      %v215 = vld [vmem:[%s1 + $0x10] sm:$0xff]
      %v216 = vld [vmem:[%s1 + $0x18] sm:$0xff]
      %v217 = vld [vmem:[%s1 + $0x20] sm:$0xff]
      %v218 = vld [vmem:[%s1 + $0x28] sm:$0xff]
      %v219 = vld [vmem:[%s1 + $0x30] sm:$0xff]
      %v220 = vld [vmem:[%s1 + $0x38] sm:$0xff]
      %v221 = vld [vmem:[%s1 + $0x40] sm:$0xff]
      %v222 = vld [vmem:[%s1 + $0x48] sm:$0xff]
      %v223 = vld [vmem:[%s1 + $0x50] sm:$0xff]
      %v224 = vld [vmem:[%s1 + $0x58] sm:$0xff]
      %v225 = vld [vmem:[%s1 + $0x60] sm:$0xff]
      %v226 = vld [vmem:[%s1 + $0x68] sm:$0xff]
      %v227 = vld [vmem:[%s1 + $0x70] sm:$0xff]
      %v228 = vld [vmem:[%s1 + $0x78] sm:$0xff]
      %v229 = vld [vmem:[%s1 + $0x80] sm:$0xff]
      %v230 = vld [vmem:[%s1 + $0x88] sm:$0xff]
      %v231 = vld [vmem:[%s1 + $0x90] sm:$0xff]
      %v232 = vld [vmem:[%s1 + $0x98] sm:$0xff]
      %v233 = vld [vmem:[%s1 + $0xa0] sm:$0xff]
      %v234 = vld [vmem:[%s1 + $0xa8] sm:$0xff]
      %v235 = vld [vmem:[%s1 + $0xb0] sm:$0xff]
      %v236 = vld [vmem:[%s1 + $0xb8] sm:$0xff]
      %v237 = vld [vmem:[%s1 + $0xc0] sm:$0xff]
      %v238 = vld [vmem:[%s1 + $0xc8] sm:$0xff]
      %v239 = vld [vmem:[%s1 + $0xd0] sm:$0xff]
      %v240 = vld [vmem:[%s1 + $0xd8] sm:$0xff]
      %v241 = vld [vmem:[%s1 + $0xe0] sm:$0xff]
      %v242 = vld [vmem:[%s1 + $0xe8] sm:$0xff]
      %v243 = vld [vmem:[%s1 + $0xf0] sm:$0xff]
      %v244 = vld [vmem:[%s1 + $0xf8] sm:$0xff]
      %v245 = vld [vmem:[%s1 + $0x100] sm:$0xff]
      %v246 = vld [vmem:[%s1 + $0x108] sm:$0xff]
      %v247 = vld [vmem:[%s1 + $0x110] sm:$0xff]
      %v248 = vld [vmem:[%s1 + $0x118] sm:$0xff]
      %v249 = vld [vmem:[%s1 + $0x120] sm:$0xff]
      %v250 = vld [vmem:[%s1 + $0x128] sm:$0xff]
      %v251 = vld [vmem:[%s1 + $0x130] sm:$0xff]
      %v252 = vld [vmem:[%s1 + $0x138] sm:$0xff]
      %v253 = vld [vmem:[%s1 + $0x140] sm:$0xff]
      %v254 = vld [vmem:[%s1 + $0x148] sm:$0xff]
      %v255 = vld [vmem:[%s1 + $0x150] sm:$0xff]
      %v256 = vld [vmem:[%s1 + $0x158] sm:$0xff]
      %v257 = vld [vmem:[%s1 + $0x160] sm:$0xff]
      %v258 = vld [vmem:[%s1 + $0x168] sm:$0xff]
      %v259 = vld [vmem:[%s1 + $0x170] sm:$0xff]
      %v260 = vld [vmem:[%s1 + $0x178] sm:$0xff]
      %v261 = vld [vmem:[%s1 + $0x180] sm:$0xff]
      %v262 = vld [vmem:[%s1 + $0x188] sm:$0xff]
      %v263 = vld [vmem:[%s1 + $0x190] sm:$0xff]
      %v264 = vld [vmem:[%s1 + $0x198] sm:$0xff]
      %v265 = vld [vmem:[%s1 + $0x1a0] sm:$0xff]
      %v266 = vld [vmem:[%s1 + $0x1a8] sm:$0xff]
      %v267 = vld [vmem:[%s1 + $0x1b0] sm:$0xff]
      %v268 = vld [vmem:[%s1 + $0x1b8] sm:$0xff]
      %v269 = vld [vmem:[%s1 + $0x1c0] sm:$0xff]
      %v270 = vld [vmem:[%s1 + $0x1c8] sm:$0xff]
      %v271 = vld [vmem:[%s1 + $0x1d0] sm:$0xff]
      %v272 = vld [vmem:[%s1 + $0x1d8] sm:$0xff]
      %v273 = vld [vmem:[%s1 + $0x1e0] sm:$0xff]
      %v274 = vld [vmem:[%s1 + $0x1e8] sm:$0xff]
      %v275 = vld [vmem:[%s1 + $0x1f0] sm:$0xff]
      %v276 = vld [vmem:[%s1 + $0x1f8] sm:$0xff]
      %v277 = vld [vmem:[%s1 + $0x200] sm:$0xff]
      %v278 = vld [vmem:[%s1 + $0x208] sm:$0xff]
      %v279 = vld [vmem:[%s1 + $0x210] sm:$0xff]
      %v280 = vld [vmem:[%s1 + $0x218] sm:$0xff]
      %v281 = vld [vmem:[%s1 + $0x220] sm:$0xff]
      %v282 = vld [vmem:[%s1 + $0x228] sm:$0xff]
      %v283 = vld [vmem:[%s1 + $0x230] sm:$0xff]
      %v284 = vld [vmem:[%s1 + $0x238] sm:$0xff]
      %v285 = vld [vmem:[%s1 + $0x240] sm:$0xff]
      %v286 = vld [vmem:[%s1 + $0x248] sm:$0xff]
      %v287 = vld [vmem:[%s1 + $0x250] sm:$0xff]
      %v288 = vld [vmem:[%s1 + $0x258] sm:$0xff]
      %v289 = vld [vmem:[%s1 + $0x260] sm:$0xff]
      %v290 = vld [vmem:[%s1 + $0x268] sm:$0xff]
      %v291 = vld [vmem:[%s1 + $0x270] sm:$0xff]
      %v292 = vld [vmem:[%s1 + $0x278] sm:$0xff]
      %v293 = vld [vmem:[%s1 + $0x280] sm:$0xff]
      %v294 = vld [vmem:[%s1 + $0x288] sm:$0xff]
      %v295 = vld [vmem:[%s1 + $0x290] sm:$0xff]
      %v296 = vld [vmem:[%s1 + $0x298] sm:$0xff]
      %v297 = vld [vmem:[%s1 + $0x2a0] sm:$0xff]
      %v298 = vld [vmem:[%s1 + $0x2a8] sm:$0xff]
      %v299 = vld [vmem:[%s1 + $0x2b0] sm:$0xff]
      %v300 = vld [vmem:[%s1 + $0x2b8] sm:$0xff]
      %v301 = vld [vmem:[%s1 + $0x2c0] sm:$0xff]
      %v302 = vld [vmem:[%s1 + $0x2c8] sm:$0xff]
      %v303 = vld [vmem:[%s1 + $0x2d0] sm:$0xff]
      %v304 = vld [vmem:[%s1 + $0x2d8] sm:$0xff]
      %v305 = vld [vmem:[%s1 + $0x2e0] sm:$0xff]
      %v306 = vld [vmem:[%s1 + $0x2e8] sm:$0xff]
      %v307 = vld [vmem:[%s1 + $0x2f0] sm:$0xff]
      %v308 = vld [vmem:[%s1 + $0x2f8] sm:$0xff]
      %v309 = vld [vmem:[%s1 + $0x300] sm:$0xff]
      %v310 = vld [vmem:[%s1 + $0x308] sm:$0xff]
      %v311 = vld [vmem:[%s1 + $0x310] sm:$0xff]
      %v312 = vld [vmem:[%s1 + $0x318] sm:$0xff]
      %v313 = vld [vmem:[%s1 + $0x320] sm:$0xff]
      %v314 = vld [vmem:[%s1 + $0x328] sm:$0xff]
      %v315 = vld [vmem:[%s1 + $0x330] sm:$0xff]
      %v316 = vld [vmem:[%s1 + $0x338] sm:$0xff]
      %v317 = vld [vmem:[%s1 + $0x340] sm:$0xff]
      %v318 = vld [vmem:[%s1 + $0x348] sm:$0xff]
      %v319 = vld [vmem:[%s1 + $0x350] sm:$0xff]
      %v320 = vld [vmem:[%s1 + $0x358] sm:$0xff]
      %v321 = vld [vmem:[%s1 + $0x360] sm:$0xff]
      %v322 = vld [vmem:[%s1 + $0x368] sm:$0xff]
      %v323 = vld [vmem:[%s1 + $0x370] sm:$0xff]
      %v324 = vld [vmem:[%s1 + $0x378] sm:$0xff]
      %325 = vmatprep.subr.mxu0 0.0
      %v326 = vand.u32 %v213, 4294901760
      %327 = vmatpush1.msra.mxu0 %v326
      %328 = vmatprep.subr.mxu0 0.0
      %v329 = vand.u32 %v214, 4294901760
      %330 = vmatpush1.msra.mxu0 %v329
      %331 = vmatprep.subr.mxu0 0.0
      %v332 = vand.u32 %v215, 4294901760
      %333 = vmatpush1.msra.mxu0 %v332
      %334 = vmatprep.subr.mxu0 0.0
      %v335 = vand.u32 %v216, 4294901760
      %336 = vmatpush1.msra.mxu0 %v335
      %337 = vmatprep.subr.mxu0 0.0
      %v338 = vand.u32 %v217, 4294901760
      %339 = vmatpush1.msra.mxu0 %v338
      %340 = vmatprep.subr.mxu0 0.0
      %v341 = vand.u32 %v218, 4294901760
      %342 = vmatpush1.msra.mxu0 %v341
      %343 = vmatprep.subr.mxu0 0.0
      %v344 = vand.u32 %v219, 4294901760
      %345 = vmatpush1.msra.mxu0 %v344
      %346 = vmatprep.subr.mxu0 0.0
      %v347 = vand.u32 %v220, 4294901760
      %348 = vmatpush1.msra.mxu0 %v347
      %349 = vmatprep.subr.mxu0 0.0
      %v350 = vand.u32 %v221, 4294901760
      %351 = vmatpush1.msra.mxu0 %v350
      %352 = vmatprep.subr.mxu0 0.0
      %v353 = vand.u32 %v222, 4294901760
      %354 = vmatpush1.msra.mxu0 %v353
      %355 = vmatprep.subr.mxu0 0.0
      %v356 = vand.u32 %v223, 4294901760
      %357 = vmatpush1.msra.mxu0 %v356
      %358 = vmatprep.subr.mxu0 0.0
      %v359 = vand.u32 %v224, 4294901760
      %360 = vmatpush1.msra.mxu0 %v359
      %361 = vmatprep.subr.mxu0 0.0
      %v362 = vand.u32 %v225, 4294901760
      %363 = vmatpush1.msra.mxu0 %v362
      %364 = vmatprep.subr.mxu0 0.0
      %v365 = vand.u32 %v226, 4294901760
      %366 = vmatpush1.msra.mxu0 %v365
      %367 = vmatprep.subr.mxu0 0.0
      %v368 = vand.u32 %v227, 4294901760
      %369 = vmatpush1.msra.mxu0 %v368
      %370 = vmatprep.subr.mxu0 0.0
      %v371 = vand.u32 %v228, 4294901760
      %372 = vmatpush1.msra.mxu0 %v371
      %373 = vmatprep.subr.mxu0 0.0
      %v374 = vand.u32 %v229, 4294901760
      %375 = vmatpush1.msra.mxu0 %v374
      %376 = vmatprep.subr.mxu0 0.0
      %v377 = vand.u32 %v230, 4294901760
      %378 = vmatpush1.msra.mxu0 %v377
      %379 = vmatprep.subr.mxu0 0.0
      %v380 = vand.u32 %v231, 4294901760
      %381 = vmatpush1.msra.mxu0 %v380
      %382 = vmatprep.subr.mxu0 0.0
      %v383 = vand.u32 %v232, 4294901760
      %384 = vmatpush1.msra.mxu0 %v383
      %385 = vmatprep.subr.mxu0 0.0
      %v386 = vand.u32 %v233, 4294901760
      %387 = vmatpush1.msra.mxu0 %v386
      %388 = vmatprep.subr.mxu0 0.0
      %v389 = vand.u32 %v234, 4294901760
      %390 = vmatpush1.msra.mxu0 %v389
      %391 = vmatprep.subr.mxu0 0.0
      %v392 = vand.u32 %v235, 4294901760
      %393 = vmatpush1.msra.mxu0 %v392
      %394 = vmatprep.subr.mxu0 0.0
      %v395 = vand.u32 %v236, 4294901760
      %396 = vmatpush1.msra.mxu0 %v395
      %397 = vmatprep.subr.mxu0 0.0
      %v398 = vand.u32 %v237, 4294901760
      %399 = vmatpush1.msra.mxu0 %v398
      %400 = vmatprep.subr.mxu0 0.0
      %v401 = vand.u32 %v238, 4294901760
      %402 = vmatpush1.msra.mxu0 %v401
      %403 = vmatprep.subr.mxu0 0.0
      %v404 = vand.u32 %v239, 4294901760
      %405 = vmatpush1.msra.mxu0 %v404
      %406 = vmatprep.subr.mxu0 0.0
      %v407 = vand.u32 %v240, 4294901760
      %408 = vmatpush1.msra.mxu0 %v407
      %409 = vmatprep.subr.mxu0 0.0
      %v410 = vand.u32 %v241, 4294901760
      %411 = vmatpush1.msra.mxu0 %v410
      %412 = vmatprep.subr.mxu0 0.0
      %v413 = vand.u32 %v242, 4294901760
      %414 = vmatpush1.msra.mxu0 %v413
      %415 = vmatprep.subr.mxu0 0.0
      %v416 = vand.u32 %v243, 4294901760
      %417 = vmatpush1.msra.mxu0 %v416
      %418 = vmatprep.subr.mxu0 0.0
      %v419 = vand.u32 %v244, 4294901760
      %420 = vmatpush1.msra.mxu0 %v419
      %v421 = vand.u32 %v151, 4294901760
      %v422 = vsub.f32 %v151, %v421
      %v423 = vand.u32 %v422, 4294901760
      %v424 = vsub.f32 %v422, %v423
      %v425 = vand.u32 %v424, 4294901760
      %426 = vmatprep.mubr.f32.mxu0 %v425
      %v427 = vand.u32 %v150, 4294901760
      %v428 = vsub.f32 %v150, %v427
      %v429 = vand.u32 %v428, 4294901760
      %v430 = vsub.f32 %v428, %v429
      %v431 = vand.u32 %v430, 4294901760
      %432 = vmatmul.mubr.f32.gmra.mrb[0].mxu0 %v431
      %v433 = vpop.f32.mrb[0].mxu0
      %v434 = vadd.f32 0.0, %v433
      %v435 = vpop.f32.mrb[0].mxu0
      %v436 = vand.u32 %v158, 4294901760
      %v437 = vsub.f32 %v158, %v436
      %v438 = vand.u32 %v437, 4294901760
      %v439 = vsub.f32 %v437, %v438
      %v440 = vand.u32 %v439, 4294901760
      %441 = vmatprep.mubr.f32.mxu0 %v440
      %v442 = vand.u32 %v157, 4294901760
      %v443 = vsub.f32 %v157, %v442
      %v444 = vand.u32 %v443, 4294901760
      %v445 = vsub.f32 %v443, %v444
      %v446 = vand.u32 %v445, 4294901760
      %447 = vmatmul.mubr.f32.gmra.mrb[0].mxu0 %v446
      %v448 = vpop.f32.mrb[0].mxu0
      %v449 = vadd.f32 0.0, %v448
      %v450 = vpop.f32.mrb[0].mxu0
      %v451 = vand.u32 %v165, 4294901760
      %v452 = vsub.f32 %v165, %v451
      %v453 = vand.u32 %v452, 4294901760
      %v454 = vsub.f32 %v452, %v453
      %v455 = vand.u32 %v454, 4294901760
      %456 = vmatprep.mubr.f32.mxu0 %v455
      %v457 = vand.u32 %v164, 4294901760
      %v458 = vsub.f32 %v164, %v457
      %v459 = vand.u32 %v458, 4294901760
      %v460 = vsub.f32 %v458, %v459
      %v461 = vand.u32 %v460, 4294901760
      %462 = vmatmul.mubr.f32.gmra.mrb[0].mxu0 %v461
      %v463 = vpop.f32.mrb[0].mxu0
      %v464 = vadd.f32 0.0, %v463
      %v465 = vpop.f32.mrb[0].mxu0
      %v466 = vand.u32 %v172, 4294901760
      %v467 = vsub.f32 %v172, %v466
      %v468 = vand.u32 %v467, 4294901760
      %v469 = vsub.f32 %v467, %v468
      %v470 = vand.u32 %v469, 4294901760
      %471 = vmatprep.mubr.f32.mxu0 %v470
      %v472 = vand.u32 %v171, 4294901760
      %v473 = vsub.f32 %v171, %v472
      %v474 = vand.u32 %v473, 4294901760
      %v475 = vsub.f32 %v473, %v474
      %v476 = vand.u32 %v475, 4294901760
      %477 = vmatmul.mubr.f32.gmra.mrb[0].mxu0 %v476
      %v478 = vpop.f32.mrb[0].mxu0
      %v479 = vadd.f32 0.0, %v478
      %v480 = vpop.f32.mrb[0].mxu0
      %v481 = vand.u32 %v179, 4294901760
      %v482 = vsub.f32 %v179, %v481
      %v483 = vand.u32 %v482, 4294901760
      %v484 = vsub.f32 %v482, %v483
      %v485 = vand.u32 %v484, 4294901760
      %486 = vmatprep.mubr.f32.mxu0 %v485
      %v487 = vand.u32 %v178, 4294901760
      %v488 = vsub.f32 %v178, %v487
      %v489 = vand.u32 %v488, 4294901760
      %v490 = vsub.f32 %v488, %v489
      %v491 = vand.u32 %v490, 4294901760
      %492 = vmatmul.mubr.f32.gmra.mrb[0].mxu0 %v491
      %v493 = vpop.f32.mrb[0].mxu0
      %v494 = vadd.f32 0.0, %v493
      %v495 = vpop.f32.mrb[0].mxu0
      %v496 = vand.u32 %v186, 4294901760
      %v497 = vsub.f32 %v186, %v496
      %v498 = vand.u32 %v497, 4294901760
      %v499 = vsub.f32 %v497, %v498
      %v500 = vand.u32 %v499, 4294901760
      %501 = vmatprep.mubr.f32.mxu0 %v500
      %v502 = vand.u32 %v185, 4294901760
      %v503 = vsub.f32 %v185, %v502
      %v504 = vand.u32 %v503, 4294901760
      %v505 = vsub.f32 %v503, %v504
      %v506 = vand.u32 %v505, 4294901760
      %507 = vmatmul.mubr.f32.gmra.mrb[0].mxu0 %v506
      %v508 = vpop.f32.mrb[0].mxu0
      %v509 = vadd.f32 0.0, %v508
      %v510 = vpop.f32.mrb[0].mxu0
      %v511 = vand.u32 %v193, 4294901760
      %v512 = vsub.f32 %v193, %v511
      %v513 = vand.u32 %v512, 4294901760
      %v514 = vsub.f32 %v512, %v513
      %v515 = vand.u32 %v514, 4294901760
      %516 = vmatprep.mubr.f32.mxu0 %v515
      %v517 = vand.u32 %v192, 4294901760
      %v518 = vsub.f32 %v192, %v517
      %v519 = vand.u32 %v518, 4294901760
      %v520 = vsub.f32 %v518, %v519
      %v521 = vand.u32 %v520, 4294901760
      %522 = vmatmul.mubr.f32.gmra.mrb[0].mxu0 %v521
      %v523 = vpop.f32.mrb[0].mxu0
      %v524 = vadd.f32 0.0, %v523
      %v525 = vpop.f32.mrb[0].mxu0
      %v526 = vand.u32 %v200, 4294901760
      %v527 = vsub.f32 %v200, %v526
      %v528 = vand.u32 %v527, 4294901760
      %v529 = vsub.f32 %v527, %v528
      %v530 = vand.u32 %v529, 4294901760
      %531 = vmatprep.mubr.f32.mxu0 %v530
      %v532 = vand.u32 %v199, 4294901760
      %v533 = vsub.f32 %v199, %v532
      %v534 = vand.u32 %v533, 4294901760
      %v535 = vsub.f32 %v533, %v534
      %v536 = vand.u32 %v535, 4294901760
      %537 = vmatmul.mubr.f32.gmra.mrb[0].mxu0 %v536
      %v538 = vpop.f32.mrb[0].mxu0
      %v539 = vadd.f32 0.0, %v538
      %v540 = vpop.f32.mrb[0].mxu0
      %v541 = vand.u32 %v207, 4294901760
      %v542 = vsub.f32 %v207, %v541
      %v543 = vand.u32 %v542, 4294901760
      %v544 = vsub.f32 %v542, %v543
      %v545 = vand.u32 %v544, 4294901760
      %546 = vmatprep.mubr.f32.mxu0 %v545
      %v547 = vand.u32 %v206, 4294901760
      %v548 = vsub.f32 %v206, %v547
      %v549 = vand.u32 %v548, 4294901760
      %v550 = vsub.f32 %v548, %v549
      %v551 = vand.u32 %v550, 4294901760
      %552 = vmatmul.mubr.f32.gmra.mrb[0].mxu0 %v551
      %v553 = vpop.f32.mrb[0].mxu0
      %v554 = vadd.f32 0.0, %v553
      %v555 = vpop.f32.mrb[0].mxu0
      %556 = vdwg.mxu0
      %557 = vmatprep.subr.mxu0 0.0
      %v558 = vand.u32 %v213, 4294901760
      %v559 = vsub.f32 %v213, %v558
      %v560 = vand.u32 %v559, 4294901760
      %v561 = vsub.f32 %v559, %v560
      %v562 = vand.u32 %v561, 4294901760
      %563 = vmatpush1.msra.mxu0 %v562
      %564 = vmatprep.subr.mxu0 0.0
      %v565 = vand.u32 %v214, 4294901760
      %v566 = vsub.f32 %v214, %v565
      %v567 = vand.u32 %v566, 4294901760
      %v568 = vsub.f32 %v566, %v567
      %v569 = vand.u32 %v568, 4294901760
      %570 = vmatpush1.msra.mxu0 %v569
      %571 = vmatprep.subr.mxu0 0.0
      %v572 = vand.u32 %v215, 4294901760
      %v573 = vsub.f32 %v215, %v572
      %v574 = vand.u32 %v573, 4294901760
      %v575 = vsub.f32 %v573, %v574
      %v576 = vand.u32 %v575, 4294901760
      %577 = vmatpush1.msra.mxu0 %v576
      %578 = vmatprep.subr.mxu0 0.0
      %v579 = vand.u32 %v216, 4294901760
      %v580 = vsub.f32 %v216, %v579
      %v581 = vand.u32 %v580, 4294901760
      %v582 = vsub.f32 %v580, %v581
      %v583 = vand.u32 %v582, 4294901760
      %584 = vmatpush1.msra.mxu0 %v583
      %585 = vmatprep.subr.mxu0 0.0
      %v586 = vand.u32 %v217, 4294901760
      %v587 = vsub.f32 %v217, %v586
      %v588 = vand.u32 %v587, 4294901760
      %v589 = vsub.f32 %v587, %v588
      %v590 = vand.u32 %v589, 4294901760
      %591 = vmatpush1.msra.mxu0 %v590
      %592 = vmatprep.subr.mxu0 0.0
      %v593 = vand.u32 %v218, 4294901760
      %v594 = vsub.f32 %v218, %v593
      %v595 = vand.u32 %v594, 4294901760
      %v596 = vsub.f32 %v594, %v595
      %v597 = vand.u32 %v596, 4294901760
      %598 = vmatpush1.msra.mxu0 %v597
      %599 = vmatprep.subr.mxu0 0.0
      %v600 = vand.u32 %v219, 4294901760
      %v601 = vsub.f32 %v219, %v600
      %v602 = vand.u32 %v601, 4294901760
      %v603 = vsub.f32 %v601, %v602
      %v604 = vand.u32 %v603, 4294901760
      %605 = vmatpush1.msra.mxu0 %v604
      %606 = vmatprep.subr.mxu0 0.0
      %v607 = vand.u32 %v220, 4294901760
      %v608 = vsub.f32 %v220, %v607
      %v609 = vand.u32 %v608, 4294901760
      %v610 = vsub.f32 %v608, %v609
      %v611 = vand.u32 %v610, 4294901760
      %612 = vmatpush1.msra.mxu0 %v611
      %613 = vmatprep.subr.mxu0 0.0
      %v614 = vand.u32 %v221, 4294901760
      %v615 = vsub.f32 %v221, %v614
      %v616 = vand.u32 %v615, 4294901760
      %v617 = vsub.f32 %v615, %v616
      %v618 = vand.u32 %v617, 4294901760
      %619 = vmatpush1.msra.mxu0 %v618
      %620 = vmatprep.subr.mxu0 0.0
      %v621 = vand.u32 %v222, 4294901760
      %v622 = vsub.f32 %v222, %v621
      %v623 = vand.u32 %v622, 4294901760
      %v624 = vsub.f32 %v622, %v623
      %v625 = vand.u32 %v624, 4294901760
      %626 = vmatpush1.msra.mxu0 %v625
      %627 = vmatprep.subr.mxu0 0.0
      %v628 = vand.u32 %v223, 4294901760
      %v629 = vsub.f32 %v223, %v628
      %v630 = vand.u32 %v629, 4294901760
      %v631 = vsub.f32 %v629, %v630
      %v632 = vand.u32 %v631, 4294901760
      %633 = vmatpush1.msra.mxu0 %v632
      %634 = vmatprep.subr.mxu0 0.0
      %v635 = vand.u32 %v224, 4294901760
      %v636 = vsub.f32 %v224, %v635
      %v637 = vand.u32 %v636, 4294901760
      %v638 = vsub.f32 %v636, %v637
      %v639 = vand.u32 %v638, 4294901760
      %640 = vmatpush1.msra.mxu0 %v639
      %641 = vmatprep.subr.mxu0 0.0
      %v642 = vand.u32 %v225, 4294901760
      %v643 = vsub.f32 %v225, %v642
      %v644 = vand.u32 %v643, 4294901760
      %v645 = vsub.f32 %v643, %v644
      %v646 = vand.u32 %v645, 4294901760
      %647 = vmatpush1.msra.mxu0 %v646
      %648 = vmatprep.subr.mxu0 0.0
      %v649 = vand.u32 %v226, 4294901760
      %v650 = vsub.f32 %v226, %v649
      %v651 = vand.u32 %v650, 4294901760
      %v652 = vsub.f32 %v650, %v651
      %v653 = vand.u32 %v652, 4294901760
      %654 = vmatpush1.msra.mxu0 %v653
      %655 = vmatprep.subr.mxu0 0.0
      %v656 = vand.u32 %v227, 4294901760
      %v657 = vsub.f32 %v227, %v656
      %v658 = vand.u32 %v657, 4294901760
      %v659 = vsub.f32 %v657, %v658
      %v660 = vand.u32 %v659, 4294901760
      %661 = vmatpush1.msra.mxu0 %v660
      %662 = vmatprep.subr.mxu0 0.0
      %v663 = vand.u32 %v228, 4294901760
      %v664 = vsub.f32 %v228, %v663
      %v665 = vand.u32 %v664, 4294901760
      %v666 = vsub.f32 %v664, %v665
      %v667 = vand.u32 %v666, 4294901760
      %668 = vmatpush1.msra.mxu0 %v667
      %669 = vmatprep.subr.mxu0 0.0
      %v670 = vand.u32 %v229, 4294901760
      %v671 = vsub.f32 %v229, %v670
      %v672 = vand.u32 %v671, 4294901760
      %v673 = vsub.f32 %v671, %v672
      %v674 = vand.u32 %v673, 4294901760
      %675 = vmatpush1.msra.mxu0 %v674
      %676 = vmatprep.subr.mxu0 0.0
      %v677 = vand.u32 %v230, 4294901760
      %v678 = vsub.f32 %v230, %v677
      %v679 = vand.u32 %v678, 4294901760
      %v680 = vsub.f32 %v678, %v679
      %v681 = vand.u32 %v680, 4294901760
      %682 = vmatpush1.msra.mxu0 %v681
      %683 = vmatprep.subr.mxu0 0.0
      %v684 = vand.u32 %v231, 4294901760
      %v685 = vsub.f32 %v231, %v684
      %v686 = vand.u32 %v685, 4294901760
      %v687 = vsub.f32 %v685, %v686
      %v688 = vand.u32 %v687, 4294901760
      %689 = vmatpush1.msra.mxu0 %v688
      %690 = vmatprep.subr.mxu0 0.0
      %v691 = vand.u32 %v232, 4294901760
      %v692 = vsub.f32 %v232, %v691
      %v693 = vand.u32 %v692, 4294901760
      %v694 = vsub.f32 %v692, %v693
      %v695 = vand.u32 %v694, 4294901760
      %696 = vmatpush1.msra.mxu0 %v695
      %697 = vmatprep.subr.mxu0 0.0
      %v698 = vand.u32 %v233, 4294901760
      %v699 = vsub.f32 %v233, %v698
      %v700 = vand.u32 %v699, 4294901760
      %v701 = vsub.f32 %v699, %v700
      %v702 = vand.u32 %v701, 4294901760
      %703 = vmatpush1.msra.mxu0 %v702
      %704 = vmatprep.subr.mxu0 0.0
      %v705 = vand.u32 %v234, 4294901760
      %v706 = vsub.f32 %v234, %v705
      %v707 = vand.u32 %v706, 4294901760
      %v708 = vsub.f32 %v706, %v707
      %v709 = vand.u32 %v708, 4294901760
      %710 = vmatpush1.msra.mxu0 %v709
      %711 = vmatprep.subr.mxu0 0.0
      %v712 = vand.u32 %v235, 4294901760
      %v713 = vsub.f32 %v235, %v712
      %v714 = vand.u32 %v713, 4294901760
      %v715 = vsub.f32 %v713, %v714
      %v716 = vand.u32 %v715, 4294901760
      %717 = vmatpush1.msra.mxu0 %v716
      %718 = vmatprep.subr.mxu0 0.0
      %v719 = vand.u32 %v236, 4294901760
      %v720 = vsub.f32 %v236, %v719
      %v721 = vand.u32 %v720, 4294901760
      %v722 = vsub.f32 %v720, %v721
      %v723 = vand.u32 %v722, 4294901760
      %724 = vmatpush1.msra.mxu0 %v723
      %725 = vmatprep.subr.mxu0 0.0
      %v726 = vand.u32 %v237, 4294901760
      %v727 = vsub.f32 %v237, %v726
      %v728 = vand.u32 %v727, 4294901760
      %v729 = vsub.f32 %v727, %v728
      %v730 = vand.u32 %v729, 4294901760
      %731 = vmatpush1.msra.mxu0 %v730
      %732 = vmatprep.subr.mxu0 0.0
      %v733 = vand.u32 %v238, 4294901760
      %v734 = vsub.f32 %v238, %v733
      %v735 = vand.u32 %v734, 4294901760
      %v736 = vsub.f32 %v734, %v735
      %v737 = vand.u32 %v736, 4294901760
      %738 = vmatpush1.msra.mxu0 %v737
      %739 = vmatprep.subr.mxu0 0.0
      %v740 = vand.u32 %v239, 4294901760
      %v741 = vsub.f32 %v239, %v740
      %v742 = vand.u32 %v741, 4294901760
      %v743 = vsub.f32 %v741, %v742
      %v744 = vand.u32 %v743, 4294901760
      %745 = vmatpush1.msra.mxu0 %v744
      %746 = vmatprep.subr.mxu0 0.0
      %v747 = vand.u32 %v240, 4294901760
      %v748 = vsub.f32 %v240, %v747
      %v749 = vand.u32 %v748, 4294901760
      %v750 = vsub.f32 %v748, %v749
      %v751 = vand.u32 %v750, 4294901760
      %752 = vmatpush1.msra.mxu0 %v751
      %753 = vmatprep.subr.mxu0 0.0
      %v754 = vand.u32 %v241, 4294901760
      %v755 = vsub.f32 %v241, %v754
      %v756 = vand.u32 %v755, 4294901760
      %v757 = vsub.f32 %v755, %v756
      %v758 = vand.u32 %v757, 4294901760
      %759 = vmatpush1.msra.mxu0 %v758
      %760 = vmatprep.subr.mxu0 0.0
      %v761 = vand.u32 %v242, 4294901760
      %v762 = vsub.f32 %v242, %v761
      %v763 = vand.u32 %v762, 4294901760
      %v764 = vsub.f32 %v762, %v763
      %v765 = vand.u32 %v764, 4294901760
      %766 = vmatpush1.msra.mxu0 %v765
      %767 = vmatprep.subr.mxu0 0.0
      %v768 = vand.u32 %v243, 4294901760
      %v769 = vsub.f32 %v243, %v768
      %v770 = vand.u32 %v769, 4294901760
      %v771 = vsub.f32 %v769, %v770
      %v772 = vand.u32 %v771, 4294901760
      %773 = vmatpush1.msra.mxu0 %v772
      %774 = vmatprep.subr.mxu0 0.0
      %v775 = vand.u32 %v244, 4294901760
      %v776 = vsub.f32 %v244, %v775
      %v777 = vand.u32 %v776, 4294901760
      %v778 = vsub.f32 %v776, %v777
      %v779 = vand.u32 %v778, 4294901760
      %780 = vmatpush1.msra.mxu0 %v779
      %v781 = vand.u32 %v151, 4294901760
      %782 = vmatprep.mubr.f32.mxu0 %v781
      %v783 = vand.u32 %v150, 4294901760
      %784 = vmatmul.mubr.f32.gmra.mrb[0].mxu0 %v783
      %v785 = vpop.f32.mrb[0].mxu0
      %v786 = vadd.f32 %v434, %v785
      %v787 = vpop.f32.mrb[0].mxu0
      %v788 = vand.u32 %v158, 4294901760
      %789 = vmatprep.mubr.f32.mxu0 %v788
      %v790 = vand.u32 %v157, 4294901760
      %791 = vmatmul.mubr.f32.gmra.mrb[0].mxu0 %v790
      %v792 = vpop.f32.mrb[0].mxu0
      %v793 = vadd.f32 %v449, %v792
      %v794 = vpop.f32.mrb[0].mxu0
      %v795 = vand.u32 %v165, 4294901760
      %796 = vmatprep.mubr.f32.mxu0 %v795
      %v797 = vand.u32 %v164, 4294901760
      %798 = vmatmul.mubr.f32.gmra.mrb[0].mxu0 %v797
      %v799 = vpop.f32.mrb[0].mxu0
      %v800 = vadd.f32 %v464, %v799
      %v801 = vpop.f32.mrb[0].mxu0
      %v802 = vand.u32 %v172, 4294901760
      %803 = vmatprep.mubr.f32.mxu0 %v802
      %v804 = vand.u32 %v171, 4294901760
      %805 = vmatmul.mubr.f32.gmra.mrb[0].mxu0 %v804
      %v806 = vpop.f32.mrb[0].mxu0
      %v807 = vadd.f32 %v479, %v806
      %v808 = vpop.f32.mrb[0].mxu0
      %v809 = vand.u32 %v179, 4294901760
      %810 = vmatprep.mubr.f32.mxu0 %v809
      %v811 = vand.u32 %v178, 4294901760
      %812 = vmatmul.mubr.f32.gmra.mrb[0].mxu0 %v811
      %v813 = vpop.f32.mrb[0].mxu0
      %v814 = vadd.f32 %v494, %v813
      %v815 = vpop.f32.mrb[0].mxu0
      %v816 = vand.u32 %v186, 4294901760
      %817 = vmatprep.mubr.f32.mxu0 %v816
      %v818 = vand.u32 %v185, 4294901760
      %819 = vmatmul.mubr.f32.gmra.mrb[0].mxu0 %v818
      %v820 = vpop.f32.mrb[0].mxu0
      %v821 = vadd.f32 %v509, %v820
      %v822 = vpop.f32.mrb[0].mxu0
      %v823 = vand.u32 %v193, 4294901760
      %824 = vmatprep.mubr.f32.mxu0 %v823
      %v825 = vand.u32 %v192, 4294901760
      %826 = vmatmul.mubr.f32.gmra.mrb[0].mxu0 %v825
      %v827 = vpop.f32.mrb[0].mxu0
      %v828 = vadd.f32 %v524, %v827
      %v829 = vpop.f32.mrb[0].mxu0
      %v830 = vand.u32 %v200, 4294901760
      %831 = vmatprep.mubr.f32.mxu0 %v830
      %v832 = vand.u32 %v199, 4294901760
      %833 = vmatmul.mubr.f32.gmra.mrb[0].mxu0 %v832
      %v834 = vpop.f32.mrb[0].mxu0
      %v835 = vadd.f32 %v539, %v834
      %v836 = vpop.f32.mrb[0].mxu0
      %v837 = vand.u32 %v207, 4294901760
      %838 = vmatprep.mubr.f32.mxu0 %v837
      %v839 = vand.u32 %v206, 4294901760
      %840 = vmatmul.mubr.f32.gmra.mrb[0].mxu0 %v839
      %v841 = vpop.f32.mrb[0].mxu0
      %v842 = vadd.f32 %v554, %v841
      %v843 = vpop.f32.mrb[0].mxu0
      %844 = vdwg.mxu0
      %845 = vmatprep.subr.mxu0 0.0
      %v846 = vand.u32 %v213, 4294901760
      %v847 = vsub.f32 %v213, %v846
      %848 = vmatpush1.msra.mxu0 %v847
      %849 = vmatprep.subr.mxu0 0.0
      %v850 = vand.u32 %v214, 4294901760
      %v851 = vsub.f32 %v214, %v850
      %852 = vmatpush1.msra.mxu0 %v851
      %853 = vmatprep.subr.mxu0 0.0
      %v854 = vand.u32 %v215, 4294901760
      %v855 = vsub.f32 %v215, %v854
      %856 = vmatpush1.msra.mxu0 %v855
      %857 = vmatprep.subr.mxu0 0.0
      %v858 = vand.u32 %v216, 4294901760
      %v859 = vsub.f32 %v216, %v858
      %860 = vmatpush1.msra.mxu0 %v859
      %861 = vmatprep.subr.mxu0 0.0
      %v862 = vand.u32 %v217, 4294901760
      %v863 = vsub.f32 %v217, %v862
      %864 = vmatpush1.msra.mxu0 %v863
      %865 = vmatprep.subr.mxu0 0.0
      %v866 = vand.u32 %v218, 4294901760
      %v867 = vsub.f32 %v218, %v866
      %868 = vmatpush1.msra.mxu0 %v867
      %869 = vmatprep.subr.mxu0 0.0
      %v870 = vand.u32 %v219, 4294901760
      %v871 = vsub.f32 %v219, %v870
      %872 = vmatpush1.msra.mxu0 %v871
      %873 = vmatprep.subr.mxu0 0.0
      %v874 = vand.u32 %v220, 4294901760
      %v875 = vsub.f32 %v220, %v874
      %876 = vmatpush1.msra.mxu0 %v875
      %877 = vmatprep.subr.mxu0 0.0
      %v878 = vand.u32 %v221, 4294901760
      %v879 = vsub.f32 %v221, %v878
      %880 = vmatpush1.msra.mxu0 %v879
      %881 = vmatprep.subr.mxu0 0.0
      %v882 = vand.u32 %v222, 4294901760
      %v883 = vsub.f32 %v222, %v882
      %884 = vmatpush1.msra.mxu0 %v883
      %885 = vmatprep.subr.mxu0 0.0
      %v886 = vand.u32 %v223, 4294901760
      %v887 = vsub.f32 %v223, %v886
      %888 = vmatpush1.msra.mxu0 %v887
      %889 = vmatprep.subr.mxu0 0.0
      %v890 = vand.u32 %v224, 4294901760
      %v891 = vsub.f32 %v224, %v890
      %892 = vmatpush1.msra.mxu0 %v891
      %893 = vmatprep.subr.mxu0 0.0
      %v894 = vand.u32 %v225, 4294901760
      %v895 = vsub.f32 %v225, %v894
      %896 = vmatpush1.msra.mxu0 %v895
      %897 = vmatprep.subr.mxu0 0.0
      %v898 = vand.u32 %v226, 4294901760
      %v899 = vsub.f32 %v226, %v898
      %900 = vmatpush1.msra.mxu0 %v899
      %901 = vmatprep.subr.mxu0 0.0
      %v902 = vand.u32 %v227, 4294901760
      %v903 = vsub.f32 %v227, %v902
      %904 = vmatpush1.msra.mxu0 %v903
      %905 = vmatprep.subr.mxu0 0.0
      %v906 = vand.u32 %v228, 4294901760
      %v907 = vsub.f32 %v228, %v906
      %908 = vmatpush1.msra.mxu0 %v907
      %909 = vmatprep.subr.mxu0 0.0
      %v910 = vand.u32 %v229, 4294901760
      %v911 = vsub.f32 %v229, %v910
      %912 = vmatpush1.msra.mxu0 %v911
      %913 = vmatprep.subr.mxu0 0.0
      %v914 = vand.u32 %v230, 4294901760
      %v915 = vsub.f32 %v230, %v914
      %916 = vmatpush1.msra.mxu0 %v915
      %917 = vmatprep.subr.mxu0 0.0
      %v918 = vand.u32 %v231, 4294901760
      %v919 = vsub.f32 %v231, %v918
      %920 = vmatpush1.msra.mxu0 %v919
      %921 = vmatprep.subr.mxu0 0.0
      %v922 = vand.u32 %v232, 4294901760
      %v923 = vsub.f32 %v232, %v922
      %924 = vmatpush1.msra.mxu0 %v923
      %925 = vmatprep.subr.mxu0 0.0
      %v926 = vand.u32 %v233, 4294901760
      %v927 = vsub.f32 %v233, %v926
      %928 = vmatpush1.msra.mxu0 %v927
      %929 = vmatprep.subr.mxu0 0.0
      %v930 = vand.u32 %v234, 4294901760
      %v931 = vsub.f32 %v234, %v930
      %932 = vmatpush1.msra.mxu0 %v931
      %933 = vmatprep.subr.mxu0 0.0
      %v934 = vand.u32 %v235, 4294901760
      %v935 = vsub.f32 %v235, %v934
      %936 = vmatpush1.msra.mxu0 %v935
      %937 = vmatprep.subr.mxu0 0.0
      %v938 = vand.u32 %v236, 4294901760
      %v939 = vsub.f32 %v236, %v938
      %940 = vmatpush1.msra.mxu0 %v939
      %941 = vmatprep.subr.mxu0 0.0
      %v942 = vand.u32 %v237, 4294901760
      %v943 = vsub.f32 %v237, %v942
      %944 = vmatpush1.msra.mxu0 %v943
      %945 = vmatprep.subr.mxu0 0.0
      %v946 = vand.u32 %v238, 4294901760
      %v947 = vsub.f32 %v238, %v946
      %948 = vmatpush1.msra.mxu0 %v947
      %949 = vmatprep.subr.mxu0 0.0
      %v950 = vand.u32 %v239, 4294901760
      %v951 = vsub.f32 %v239, %v950
      %952 = vmatpush1.msra.mxu0 %v951
      %953 = vmatprep.subr.mxu0 0.0
      %v954 = vand.u32 %v240, 4294901760
      %v955 = vsub.f32 %v240, %v954
      %956 = vmatpush1.msra.mxu0 %v955
      %957 = vmatprep.subr.mxu0 0.0
      %v958 = vand.u32 %v241, 4294901760
      %v959 = vsub.f32 %v241, %v958
      %960 = vmatpush1.msra.mxu0 %v959
      %961 = vmatprep.subr.mxu0 0.0
      %v962 = vand.u32 %v242, 4294901760
      %v963 = vsub.f32 %v242, %v962
      %964 = vmatpush1.msra.mxu0 %v963
      %965 = vmatprep.subr.mxu0 0.0
      %v966 = vand.u32 %v243, 4294901760
      %v967 = vsub.f32 %v243, %v966
      %968 = vmatpush1.msra.mxu0 %v967
      %969 = vmatprep.subr.mxu0 0.0
      %v970 = vand.u32 %v244, 4294901760
      %v971 = vsub.f32 %v244, %v970
      %972 = vmatpush1.msra.mxu0 %v971
      %v973 = vand.u32 %v151, 4294901760
      %v974 = vsub.f32 %v151, %v973
      %975 = vmatprep.mubr.f32.mxu0 %v974
      %v976 = vand.u32 %v150, 4294901760
      %v977 = vsub.f32 %v150, %v976
      %978 = vmatmul.mubr.f32.gmra.mrb[0].mxu0 %v977
      %v979 = vpop.f32.mrb[0].mxu0
      %v980 = vadd.f32 %v786, %v979
      %v981 = vpop.f32.mrb[0].mxu0
      %v982 = vand.u32 %v158, 4294901760
      %v983 = vsub.f32 %v158, %v982
      %984 = vmatprep.mubr.f32.mxu0 %v983
      %v985 = vand.u32 %v157, 4294901760
      %v986 = vsub.f32 %v157, %v985
      %987 = vmatmul.mubr.f32.gmra.mrb[0].mxu0 %v986
      %v988 = vpop.f32.mrb[0].mxu0
      %v989 = vadd.f32 %v793, %v988
      %v990 = vpop.f32.mrb[0].mxu0
      %v991 = vand.u32 %v165, 4294901760
      %v992 = vsub.f32 %v165, %v991
      %993 = vmatprep.mubr.f32.mxu0 %v992
      %v994 = vand.u32 %v164, 4294901760
      %v995 = vsub.f32 %v164, %v994
      %996 = vmatmul.mubr.f32.gmra.mrb[0].mxu0 %v995
      %v997 = vpop.f32.mrb[0].mxu0
      %v998 = vadd.f32 %v800, %v997
      %v999 = vpop.f32.mrb[0].mxu0
      %v1000 = vand.u32 %v172, 4294901760
      %v1001 = vsub.f32 %v172, %v1000
      %1002 = vmatprep.mubr.f32.mxu0 %v1001
      %v1003 = vand.u32 %v171, 4294901760
      %v1004 = vsub.f32 %v171, %v1003
      %1005 = vmatmul.mubr.f32.gmra.mrb[0].mxu0 %v1004
      %v1006 = vpop.f32.mrb[0].mxu0
      %v1007 = vadd.f32 %v807, %v1006
      %v1008 = vpop.f32.mrb[0].mxu0
      %v1009 = vand.u32 %v179, 4294901760
      %v1010 = vsub.f32 %v179, %v1009
      %1011 = vmatprep.mubr.f32.mxu0 %v1010
      %v1012 = vand.u32 %v178, 4294901760
      %v1013 = vsub.f32 %v178, %v1012
      %1014 = vmatmul.mubr.f32.gmra.mrb[0].mxu0 %v1013
      %v1015 = vpop.f32.mrb[0].mxu0
      %v1016 = vadd.f32 %v814, %v1015
      %v1017 = vpop.f32.mrb[0].mxu0
      %v1018 = vand.u32 %v186, 4294901760
      %v1019 = vsub.f32 %v186, %v1018
      %1020 = vmatprep.mubr.f32.mxu0 %v1019
      %v1021 = vand.u32 %v185, 4294901760
      %v1022 = vsub.f32 %v185, %v1021
      %1023 = vmatmul.mubr.f32.gmra.mrb[0].mxu0 %v1022
      %v1024 = vpop.f32.mrb[0].mxu0
      %v1025 = vadd.f32 %v821, %v1024
      %v1026 = vpop.f32.mrb[0].mxu0
      %v1027 = vand.u32 %v193, 4294901760
      %v1028 = vsub.f32 %v193, %v1027
      %1029 = vmatprep.mubr.f32.mxu0 %v1028
      %v1030 = vand.u32 %v192, 4294901760
      %v1031 = vsub.f32 %v192, %v1030
      %1032 = vmatmul.mubr.f32.gmra.mrb[0].mxu0 %v1031
      %v1033 = vpop.f32.mrb[0].mxu0
      %v1034 = vadd.f32 %v828, %v1033
      %v1035 = vpop.f32.mrb[0].mxu0
      %v1036 = vand.u32 %v200, 4294901760
      %v1037 = vsub.f32 %v200, %v1036
      %1038 = vmatprep.mubr.f32.mxu0 %v1037
      %v1039 = vand.u32 %v199, 4294901760
      %v1040 = vsub.f32 %v199, %v1039
      %1041 = vmatmul.mubr.f32.gmra.mrb[0].mxu0 %v1040
      %v1042 = vpop.f32.mrb[0].mxu0
      %v1043 = vadd.f32 %v835, %v1042
      %v1044 = vpop.f32.mrb[0].mxu0
      %v1045 = vand.u32 %v207, 4294901760
      %v1046 = vsub.f32 %v207, %v1045
      %1047 = vmatprep.mubr.f32.mxu0 %v1046
      %v1048 = vand.u32 %v206, 4294901760
      %v1049 = vsub.f32 %v206, %v1048
      %1050 = vmatmul.mubr.f32.gmra.mrb[0].mxu0 %v1049
      %v1051 = vpop.f32.mrb[0].mxu0
      %v1052 = vadd.f32 %v842, %v1051
      %v1053 = vpop.f32.mrb[0].mxu0
      %1054 = vdwg.mxu0
      %1055 = vmatprep.subr.mxu0 0.0
      %v1056 = vand.u32 %v213, 4294901760
      %1057 = vmatpush1.msra.mxu0 %v1056
      %1058 = vmatprep.subr.mxu0 0.0
      %v1059 = vand.u32 %v214, 4294901760
      %1060 = vmatpush1.msra.mxu0 %v1059
      %1061 = vmatprep.subr.mxu0 0.0
      %v1062 = vand.u32 %v215, 4294901760
      %1063 = vmatpush1.msra.mxu0 %v1062
      %1064 = vmatprep.subr.mxu0 0.0
      %v1065 = vand.u32 %v216, 4294901760
      %1066 = vmatpush1.msra.mxu0 %v1065
      %1067 = vmatprep.subr.mxu0 0.0
      %v1068 = vand.u32 %v217, 4294901760
      %1069 = vmatpush1.msra.mxu0 %v1068
      %1070 = vmatprep.subr.mxu0 0.0
      %v1071 = vand.u32 %v218, 4294901760
      %1072 = vmatpush1.msra.mxu0 %v1071
      %1073 = vmatprep.subr.mxu0 0.0
      %v1074 = vand.u32 %v219, 4294901760
      %1075 = vmatpush1.msra.mxu0 %v1074
      %1076 = vmatprep.subr.mxu0 0.0
      %v1077 = vand.u32 %v220, 4294901760
      %1078 = vmatpush1.msra.mxu0 %v1077
      %1079 = vmatprep.subr.mxu0 0.0
      %v1080 = vand.u32 %v221, 4294901760
      %1081 = vmatpush1.msra.mxu0 %v1080
      %1082 = vmatprep.subr.mxu0 0.0
      %v1083 = vand.u32 %v222, 4294901760
      %1084 = vmatpush1.msra.mxu0 %v1083
      %1085 = vmatprep.subr.mxu0 0.0
      %v1086 = vand.u32 %v223, 4294901760
      %1087 = vmatpush1.msra.mxu0 %v1086
      %1088 = vmatprep.subr.mxu0 0.0
      %v1089 = vand.u32 %v224, 4294901760
      %1090 = vmatpush1.msra.mxu0 %v1089
      %1091 = vmatprep.subr.mxu0 0.0
      %v1092 = vand.u32 %v225, 4294901760
      %1093 = vmatpush1.msra.mxu0 %v1092
      %1094 = vmatprep.subr.mxu0 0.0
      %v1095 = vand.u32 %v226, 4294901760
      %1096 = vmatpush1.msra.mxu0 %v1095
      %1097 = vmatprep.subr.mxu0 0.0
      %v1098 = vand.u32 %v227, 4294901760
      %1099 = vmatpush1.msra.mxu0 %v1098
      %1100 = vmatprep.subr.mxu0 0.0
      %v1101 = vand.u32 %v228, 4294901760
      %1102 = vmatpush1.msra.mxu0 %v1101
      %1103 = vmatprep.subr.mxu0 0.0
      %v1104 = vand.u32 %v229, 4294901760
      %1105 = vmatpush1.msra.mxu0 %v1104
      %1106 = vmatprep.subr.mxu0 0.0
      %v1107 = vand.u32 %v230, 4294901760
      %1108 = vmatpush1.msra.mxu0 %v1107
      %1109 = vmatprep.subr.mxu0 0.0
      %v1110 = vand.u32 %v231, 4294901760
      %1111 = vmatpush1.msra.mxu0 %v1110
      %1112 = vmatprep.subr.mxu0 0.0
      %v1113 = vand.u32 %v232, 4294901760
      %1114 = vmatpush1.msra.mxu0 %v1113
      %1115 = vmatprep.subr.mxu0 0.0
      %v1116 = vand.u32 %v233, 4294901760
      %1117 = vmatpush1.msra.mxu0 %v1116
      %1118 = vmatprep.subr.mxu0 0.0
      %v1119 = vand.u32 %v234, 4294901760
      %1120 = vmatpush1.msra.mxu0 %v1119
      %1121 = vmatprep.subr.mxu0 0.0
      %v1122 = vand.u32 %v235, 4294901760
      %1123 = vmatpush1.msra.mxu0 %v1122
      %1124 = vmatprep.subr.mxu0 0.0
      %v1125 = vand.u32 %v236, 4294901760
      %1126 = vmatpush1.msra.mxu0 %v1125
      %1127 = vmatprep.subr.mxu0 0.0
      %v1128 = vand.u32 %v237, 4294901760
      %1129 = vmatpush1.msra.mxu0 %v1128
      %1130 = vmatprep.subr.mxu0 0.0
      %v1131 = vand.u32 %v238, 4294901760
      %1132 = vmatpush1.msra.mxu0 %v1131
      %1133 = vmatprep.subr.mxu0 0.0
      %v1134 = vand.u32 %v239, 4294901760
      %1135 = vmatpush1.msra.mxu0 %v1134
      %1136 = vmatprep.subr.mxu0 0.0
      %v1137 = vand.u32 %v240, 4294901760
      %1138 = vmatpush1.msra.mxu0 %v1137
      %1139 = vmatprep.subr.mxu0 0.0
      %v1140 = vand.u32 %v241, 4294901760
      %1141 = vmatpush1.msra.mxu0 %v1140
      %1142 = vmatprep.subr.mxu0 0.0
      %v1143 = vand.u32 %v242, 4294901760
      %1144 = vmatpush1.msra.mxu0 %v1143
      %1145 = vmatprep.subr.mxu0 0.0
      %v1146 = vand.u32 %v243, 4294901760
      %1147 = vmatpush1.msra.mxu0 %v1146
      %1148 = vmatprep.subr.mxu0 0.0
      %v1149 = vand.u32 %v244, 4294901760
      %1150 = vmatpush1.msra.mxu0 %v1149
      %v1151 = vand.u32 %v151, 4294901760
      %v1152 = vsub.f32 %v151, %v1151
      %v1153 = vand.u32 %v1152, 4294901760
      %1154 = vmatprep.mubr.f32.mxu0 %v1153
      %v1155 = vand.u32 %v150, 4294901760
      %v1156 = vsub.f32 %v150, %v1155
      %v1157 = vand.u32 %v1156, 4294901760
      %1158 = vmatmul.mubr.f32.gmra.mrb[0].mxu0 %v1157
      %v1159 = vpop.f32.mrb[0].mxu0
      %v1160 = vadd.f32 %v980, %v1159
      %v1161 = vpop.f32.mrb[0].mxu0
      %v1162 = vand.u32 %v158, 4294901760
      %v1163 = vsub.f32 %v158, %v1162
      %v1164 = vand.u32 %v1163, 4294901760
      %1165 = vmatprep.mubr.f32.mxu0 %v1164
      %v1166 = vand.u32 %v157, 4294901760
      %v1167 = vsub.f32 %v157, %v1166
      %v1168 = vand.u32 %v1167, 4294901760
      %1169 = vmatmul.mubr.f32.gmra.mrb[0].mxu0 %v1168
      %v1170 = vpop.f32.mrb[0].mxu0
      %v1171 = vadd.f32 %v989, %v1170
      %v1172 = vpop.f32.mrb[0].mxu0
      %v1173 = vand.u32 %v165, 4294901760
      %v1174 = vsub.f32 %v165, %v1173
      %v1175 = vand.u32 %v1174, 4294901760
      %1176 = vmatprep.mubr.f32.mxu0 %v1175
      %v1177 = vand.u32 %v164, 4294901760
      %v1178 = vsub.f32 %v164, %v1177
      %v1179 = vand.u32 %v1178, 4294901760
      %1180 = vmatmul.mubr.f32.gmra.mrb[0].mxu0 %v1179
      %v1181 = vpop.f32.mrb[0].mxu0
      %v1182 = vadd.f32 %v998, %v1181
      %v1183 = vpop.f32.mrb[0].mxu0
      %v1184 = vand.u32 %v172, 4294901760
      %v1185 = vsub.f32 %v172, %v1184
      %v1186 = vand.u32 %v1185, 4294901760
      %1187 = vmatprep.mubr.f32.mxu0 %v1186
      %v1188 = vand.u32 %v171, 4294901760
      %v1189 = vsub.f32 %v171, %v1188
      %v1190 = vand.u32 %v1189, 4294901760
      %1191 = vmatmul.mubr.f32.gmra.mrb[0].mxu0 %v1190
      %v1192 = vpop.f32.mrb[0].mxu0
      %v1193 = vadd.f32 %v1007, %v1192
      %v1194 = vpop.f32.mrb[0].mxu0
      %v1195 = vand.u32 %v179, 4294901760
      %v1196 = vsub.f32 %v179, %v1195
      %v1197 = vand.u32 %v1196, 4294901760
      %1198 = vmatprep.mubr.f32.mxu0 %v1197
      %v1199 = vand.u32 %v178, 4294901760
      %v1200 = vsub.f32 %v178, %v1199
      %v1201 = vand.u32 %v1200, 4294901760
      %1202 = vmatmul.mubr.f32.gmra.mrb[0].mxu0 %v1201
      %v1203 = vpop.f32.mrb[0].mxu0
      %v1204 = vadd.f32 %v1016, %v1203
      %v1205 = vpop.f32.mrb[0].mxu0
      %v1206 = vand.u32 %v186, 4294901760
      %v1207 = vsub.f32 %v186, %v1206
      %v1208 = vand.u32 %v1207, 4294901760
      %1209 = vmatprep.mubr.f32.mxu0 %v1208
      %v1210 = vand.u32 %v185, 4294901760
      %v1211 = vsub.f32 %v185, %v1210
      %v1212 = vand.u32 %v1211, 4294901760
      %1213 = vmatmul.mubr.f32.gmra.mrb[0].mxu0 %v1212
      %v1214 = vpop.f32.mrb[0].mxu0
      %v1215 = vadd.f32 %v1025, %v1214
      %v1216 = vpop.f32.mrb[0].mxu0
      %v1217 = vand.u32 %v193, 4294901760
      %v1218 = vsub.f32 %v193, %v1217
      %v1219 = vand.u32 %v1218, 4294901760
      %1220 = vmatprep.mubr.f32.mxu0 %v1219
      %v1221 = vand.u32 %v192, 4294901760
      %v1222 = vsub.f32 %v192, %v1221
      %v1223 = vand.u32 %v1222, 4294901760
      %1224 = vmatmul.mubr.f32.gmra.mrb[0].mxu0 %v1223
      %v1225 = vpop.f32.mrb[0].mxu0
      %v1226 = vadd.f32 %v1034, %v1225
      %v1227 = vpop.f32.mrb[0].mxu0
      %v1228 = vand.u32 %v200, 4294901760
      %v1229 = vsub.f32 %v200, %v1228
      %v1230 = vand.u32 %v1229, 4294901760
      %1231 = vmatprep.mubr.f32.mxu0 %v1230
      %v1232 = vand.u32 %v199, 4294901760
      %v1233 = vsub.f32 %v199, %v1232
      %v1234 = vand.u32 %v1233, 4294901760
      %1235 = vmatmul.mubr.f32.gmra.mrb[0].mxu0 %v1234
      %v1236 = vpop.f32.mrb[0].mxu0
      %v1237 = vadd.f32 %v1043, %v1236
      %v1238 = vpop.f32.mrb[0].mxu0
      %v1239 = vand.u32 %v207, 4294901760
      %v1240 = vsub.f32 %v207, %v1239
      %v1241 = vand.u32 %v1240, 4294901760
      %1242 = vmatprep.mubr.f32.mxu0 %v1241
      %v1243 = vand.u32 %v206, 4294901760
      %v1244 = vsub.f32 %v206, %v1243
      %v1245 = vand.u32 %v1244, 4294901760
      %1246 = vmatmul.mubr.f32.gmra.mrb[0].mxu0 %v1245
      %v1247 = vpop.f32.mrb[0].mxu0
      %v1248 = vadd.f32 %v1052, %v1247
      %v1249 = vpop.f32.mrb[0].mxu0
      %1250 = vdwg.mxu0
      %1251 = vmatprep.subr.mxu0 0.0
      %v1252 = vand.u32 %v213, 4294901760
      %v1253 = vsub.f32 %v213, %v1252
      %v1254 = vand.u32 %v1253, 4294901760
      %1255 = vmatpush1.msra.mxu0 %v1254
      %1256 = vmatprep.subr.mxu0 0.0
      %v1257 = vand.u32 %v214, 4294901760
      %v1258 = vsub.f32 %v214, %v1257
      %v1259 = vand.u32 %v1258, 4294901760
      %1260 = vmatpush1.msra.mxu0 %v1259
      %1261 = vmatprep.subr.mxu0 0.0
      %v1262 = vand.u32 %v215, 4294901760
      %v1263 = vsub.f32 %v215, %v1262
      %v1264 = vand.u32 %v1263, 4294901760
      %1265 = vmatpush1.msra.mxu0 %v1264
      %1266 = vmatprep.subr.mxu0 0.0
      %v1267 = vand.u32 %v216, 4294901760
      %v1268 = vsub.f32 %v216, %v1267
      %v1269 = vand.u32 %v1268, 4294901760
      %1270 = vmatpush1.msra.mxu0 %v1269
      %1271 = vmatprep.subr.mxu0 0.0
      %v1272 = vand.u32 %v217, 4294901760
      %v1273 = vsub.f32 %v217, %v1272
      %v1274 = vand.u32 %v1273, 4294901760
      %1275 = vmatpush1.msra.mxu0 %v1274
      %1276 = vmatprep.subr.mxu0 0.0
      %v1277 = vand.u32 %v218, 4294901760
      %v1278 = vsub.f32 %v218, %v1277
      %v1279 = vand.u32 %v1278, 4294901760
      %1280 = vmatpush1.msra.mxu0 %v1279
      %1281 = vmatprep.subr.mxu0 0.0
      %v1282 = vand.u32 %v219, 4294901760
      %v1283 = vsub.f32 %v219, %v1282
      %v1284 = vand.u32 %v1283, 4294901760
      %1285 = vmatpush1.msra.mxu0 %v1284
      %1286 = vmatprep.subr.mxu0 0.0
      %v1287 = vand.u32 %v220, 4294901760
      %v1288 = vsub.f32 %v220, %v1287
      %v1289 = vand.u32 %v1288, 4294901760
      %1290 = vmatpush1.msra.mxu0 %v1289
      %1291 = vmatprep.subr.mxu0 0.0
      %v1292 = vand.u32 %v221, 4294901760
      %v1293 = vsub.f32 %v221, %v1292
      %v1294 = vand.u32 %v1293, 4294901760
      %1295 = vmatpush1.msra.mxu0 %v1294
      %1296 = vmatprep.subr.mxu0 0.0
      %v1297 = vand.u32 %v222, 4294901760
      %v1298 = vsub.f32 %v222, %v1297
      %v1299 = vand.u32 %v1298, 4294901760
      %1300 = vmatpush1.msra.mxu0 %v1299
      %1301 = vmatprep.subr.mxu0 0.0
      %v1302 = vand.u32 %v223, 4294901760
      %v1303 = vsub.f32 %v223, %v1302
      %v1304 = vand.u32 %v1303, 4294901760
      %1305 = vmatpush1.msra.mxu0 %v1304
      %1306 = vmatprep.subr.mxu0 0.0
      %v1307 = vand.u32 %v224, 4294901760
      %v1308 = vsub.f32 %v224, %v1307
      %v1309 = vand.u32 %v1308, 4294901760
      %1310 = vmatpush1.msra.mxu0 %v1309
      %1311 = vmatprep.subr.mxu0 0.0
      %v1312 = vand.u32 %v225, 4294901760
      %v1313 = vsub.f32 %v225, %v1312
      %v1314 = vand.u32 %v1313, 4294901760
      %1315 = vmatpush1.msra.mxu0 %v1314
      %1316 = vmatprep.subr.mxu0 0.0
      %v1317 = vand.u32 %v226, 4294901760
      %v1318 = vsub.f32 %v226, %v1317
      %v1319 = vand.u32 %v1318, 4294901760
      %1320 = vmatpush1.msra.mxu0 %v1319
      %1321 = vmatprep.subr.mxu0 0.0
      %v1322 = vand.u32 %v227, 4294901760
      %v1323 = vsub.f32 %v227, %v1322
      %v1324 = vand.u32 %v1323, 4294901760
      %1325 = vmatpush1.msra.mxu0 %v1324
      %1326 = vmatprep.subr.mxu0 0.0
      %v1327 = vand.u32 %v228, 4294901760
      %v1328 = vsub.f32 %v228, %v1327
      %v1329 = vand.u32 %v1328, 4294901760
      %1330 = vmatpush1.msra.mxu0 %v1329
      %1331 = vmatprep.subr.mxu0 0.0
      %v1332 = vand.u32 %v229, 4294901760
      %v1333 = vsub.f32 %v229, %v1332
      %v1334 = vand.u32 %v1333, 4294901760
      %1335 = vmatpush1.msra.mxu0 %v1334
      %1336 = vmatprep.subr.mxu0 0.0
      %v1337 = vand.u32 %v230, 4294901760
      %v1338 = vsub.f32 %v230, %v1337
      %v1339 = vand.u32 %v1338, 4294901760
      %1340 = vmatpush1.msra.mxu0 %v1339
      %1341 = vmatprep.subr.mxu0 0.0
      %v1342 = vand.u32 %v231, 4294901760
      %v1343 = vsub.f32 %v231, %v1342
      %v1344 = vand.u32 %v1343, 4294901760
      %1345 = vmatpush1.msra.mxu0 %v1344
      %1346 = vmatprep.subr.mxu0 0.0
      %v1347 = vand.u32 %v232, 4294901760
      %v1348 = vsub.f32 %v232, %v1347
      %v1349 = vand.u32 %v1348, 4294901760
      %1350 = vmatpush1.msra.mxu0 %v1349
      %1351 = vmatprep.subr.mxu0 0.0
      %v1352 = vand.u32 %v233, 4294901760
      %v1353 = vsub.f32 %v233, %v1352
      %v1354 = vand.u32 %v1353, 4294901760
      %1355 = vmatpush1.msra.mxu0 %v1354
      %1356 = vmatprep.subr.mxu0 0.0
      %v1357 = vand.u32 %v234, 4294901760
      %v1358 = vsub.f32 %v234, %v1357
      %v1359 = vand.u32 %v1358, 4294901760
      %1360 = vmatpush1.msra.mxu0 %v1359
      %1361 = vmatprep.subr.mxu0 0.0
      %v1362 = vand.u32 %v235, 4294901760
      %v1363 = vsub.f32 %v235, %v1362
      %v1364 = vand.u32 %v1363, 4294901760
      %1365 = vmatpush1.msra.mxu0 %v1364
      %1366 = vmatprep.subr.mxu0 0.0
      %v1367 = vand.u32 %v236, 4294901760
      %v1368 = vsub.f32 %v236, %v1367
      %v1369 = vand.u32 %v1368, 4294901760
      %1370 = vmatpush1.msra.mxu0 %v1369
      %1371 = vmatprep.subr.mxu0 0.0
      %v1372 = vand.u32 %v237, 4294901760
      %v1373 = vsub.f32 %v237, %v1372
      %v1374 = vand.u32 %v1373, 4294901760
      %1375 = vmatpush1.msra.mxu0 %v1374
      %1376 = vmatprep.subr.mxu0 0.0
      %v1377 = vand.u32 %v238, 4294901760
      %v1378 = vsub.f32 %v238, %v1377
      %v1379 = vand.u32 %v1378, 4294901760
      %1380 = vmatpush1.msra.mxu0 %v1379
      %1381 = vmatprep.subr.mxu0 0.0
      %v1382 = vand.u32 %v239, 4294901760
      %v1383 = vsub.f32 %v239, %v1382
      %v1384 = vand.u32 %v1383, 4294901760
      %1385 = vmatpush1.msra.mxu0 %v1384
      %1386 = vmatprep.subr.mxu0 0.0
      %v1387 = vand.u32 %v240, 4294901760
      %v1388 = vsub.f32 %v240, %v1387
      %v1389 = vand.u32 %v1388, 4294901760
      %1390 = vmatpush1.msra.mxu0 %v1389
      %1391 = vmatprep.subr.mxu0 0.0
      %v1392 = vand.u32 %v241, 4294901760
      %v1393 = vsub.f32 %v241, %v1392
      %v1394 = vand.u32 %v1393, 4294901760
      %1395 = vmatpush1.msra.mxu0 %v1394
      %1396 = vmatprep.subr.mxu0 0.0
      %v1397 = vand.u32 %v242, 4294901760
      %v1398 = vsub.f32 %v242, %v1397
      %v1399 = vand.u32 %v1398, 4294901760
      %1400 = vmatpush1.msra.mxu0 %v1399
      %1401 = vmatprep.subr.mxu0 0.0
      %v1402 = vand.u32 %v243, 4294901760
      %v1403 = vsub.f32 %v243, %v1402
      %v1404 = vand.u32 %v1403, 4294901760
      %1405 = vmatpush1.msra.mxu0 %v1404
      %1406 = vmatprep.subr.mxu0 0.0
      %v1407 = vand.u32 %v244, 4294901760
      %v1408 = vsub.f32 %v244, %v1407
      %v1409 = vand.u32 %v1408, 4294901760
      %1410 = vmatpush1.msra.mxu0 %v1409
      %v1411 = vand.u32 %v151, 4294901760
      %1412 = vmatprep.mubr.f32.mxu0 %v1411
      %v1413 = vand.u32 %v150, 4294901760
      %1414 = vmatmul.mubr.f32.gmra.mrb[0].mxu0 %v1413
      %v1415 = vpop.f32.mrb[0].mxu0
      %v1416 = vadd.f32 %v1160, %v1415
      %v1417 = vpop.f32.mrb[0].mxu0
      %v1418 = vand.u32 %v158, 4294901760
      %1419 = vmatprep.mubr.f32.mxu0 %v1418
      %v1420 = vand.u32 %v157, 4294901760
      %1421 = vmatmul.mubr.f32.gmra.mrb[0].mxu0 %v1420
      %v1422 = vpop.f32.mrb[0].mxu0
      %v1423 = vadd.f32 %v1171, %v1422
      %v1424 = vpop.f32.mrb[0].mxu0
      %v1425 = vand.u32 %v165, 4294901760
      %1426 = vmatprep.mubr.f32.mxu0 %v1425
      %v1427 = vand.u32 %v164, 4294901760
      %1428 = vmatmul.mubr.f32.gmra.mrb[0].mxu0 %v1427
      %v1429 = vpop.f32.mrb[0].mxu0
      %v1430 = vadd.f32 %v1182, %v1429
      %v1431 = vpop.f32.mrb[0].mxu0
      %v1432 = vand.u32 %v172, 4294901760
      %1433 = vmatprep.mubr.f32.mxu0 %v1432
      %v1434 = vand.u32 %v171, 4294901760
      %1435 = vmatmul.mubr.f32.gmra.mrb[0].mxu0 %v1434
      %v1436 = vpop.f32.mrb[0].mxu0
      %v1437 = vadd.f32 %v1193, %v1436
      %v1438 = vpop.f32.mrb[0].mxu0
      %v1439 = vand.u32 %v179, 4294901760
      %1440 = vmatprep.mubr.f32.mxu0 %v1439
      %v1441 = vand.u32 %v178, 4294901760
      %1442 = vmatmul.mubr.f32.gmra.mrb[0].mxu0 %v1441
      %v1443 = vpop.f32.mrb[0].mxu0
      %v1444 = vadd.f32 %v1204, %v1443
      %v1445 = vpop.f32.mrb[0].mxu0
      %v1446 = vand.u32 %v186, 4294901760
      %1447 = vmatprep.mubr.f32.mxu0 %v1446
      %v1448 = vand.u32 %v185, 4294901760
      %1449 = vmatmul.mubr.f32.gmra.mrb[0].mxu0 %v1448
      %v1450 = vpop.f32.mrb[0].mxu0
      %v1451 = vadd.f32 %v1215, %v1450
      %v1452 = vpop.f32.mrb[0].mxu0
      %v1453 = vand.u32 %v193, 4294901760
      %1454 = vmatprep.mubr.f32.mxu0 %v1453
      %v1455 = vand.u32 %v192, 4294901760
      %1456 = vmatmul.mubr.f32.gmra.mrb[0].mxu0 %v1455
      %v1457 = vpop.f32.mrb[0].mxu0
      %v1458 = vadd.f32 %v1226, %v1457
      %v1459 = vpop.f32.mrb[0].mxu0
      %v1460 = vand.u32 %v200, 4294901760
      %1461 = vmatprep.mubr.f32.mxu0 %v1460
      %v1462 = vand.u32 %v199, 4294901760
      %1463 = vmatmul.mubr.f32.gmra.mrb[0].mxu0 %v1462
      %v1464 = vpop.f32.mrb[0].mxu0
      %v1465 = vadd.f32 %v1237, %v1464
      %v1466 = vpop.f32.mrb[0].mxu0
      %v1467 = vand.u32 %v207, 4294901760
      %1468 = vmatprep.mubr.f32.mxu0 %v1467
      %v1469 = vand.u32 %v206, 4294901760
      %1470 = vmatmul.mubr.f32.gmra.mrb[0].mxu0 %v1469
      %v1471 = vpop.f32.mrb[0].mxu0
      %v1472 = vadd.f32 %v1248, %v1471
      %v1473 = vpop.f32.mrb[0].mxu0
      %1474 = vdwg.mxu0
      %1475 = vmatprep.subr.mxu0 0.0
      %v1476 = vand.u32 %v213, 4294901760
      %1477 = vmatpush1.msra.mxu0 %v1476
      %1478 = vmatprep.subr.mxu0 0.0
      %v1479 = vand.u32 %v214, 4294901760
      %1480 = vmatpush1.msra.mxu0 %v1479
      %1481 = vmatprep.subr.mxu0 0.0
      %v1482 = vand.u32 %v215, 4294901760
      %1483 = vmatpush1.msra.mxu0 %v1482
      %1484 = vmatprep.subr.mxu0 0.0
      %v1485 = vand.u32 %v216, 4294901760
      %1486 = vmatpush1.msra.mxu0 %v1485
      %1487 = vmatprep.subr.mxu0 0.0
      %v1488 = vand.u32 %v217, 4294901760
      %1489 = vmatpush1.msra.mxu0 %v1488
      %1490 = vmatprep.subr.mxu0 0.0
      %v1491 = vand.u32 %v218, 4294901760
      %1492 = vmatpush1.msra.mxu0 %v1491
      %1493 = vmatprep.subr.mxu0 0.0
      %v1494 = vand.u32 %v219, 4294901760
      %1495 = vmatpush1.msra.mxu0 %v1494
      %1496 = vmatprep.subr.mxu0 0.0
      %v1497 = vand.u32 %v220, 4294901760
      %1498 = vmatpush1.msra.mxu0 %v1497
      %1499 = vmatprep.subr.mxu0 0.0
      %v1500 = vand.u32 %v221, 4294901760
      %1501 = vmatpush1.msra.mxu0 %v1500
      %1502 = vmatprep.subr.mxu0 0.0
      %v1503 = vand.u32 %v222, 4294901760
      %1504 = vmatpush1.msra.mxu0 %v1503
      %1505 = vmatprep.subr.mxu0 0.0
      %v1506 = vand.u32 %v223, 4294901760
      %1507 = vmatpush1.msra.mxu0 %v1506
      %1508 = vmatprep.subr.mxu0 0.0
      %v1509 = vand.u32 %v224, 4294901760
      %1510 = vmatpush1.msra.mxu0 %v1509
      %1511 = vmatprep.subr.mxu0 0.0
      %v1512 = vand.u32 %v225, 4294901760
      %1513 = vmatpush1.msra.mxu0 %v1512
      %1514 = vmatprep.subr.mxu0 0.0
      %v1515 = vand.u32 %v226, 4294901760
      %1516 = vmatpush1.msra.mxu0 %v1515
      %1517 = vmatprep.subr.mxu0 0.0
      %v1518 = vand.u32 %v227, 4294901760
      %1519 = vmatpush1.msra.mxu0 %v1518
      %1520 = vmatprep.subr.mxu0 0.0
      %v1521 = vand.u32 %v228, 4294901760
      %1522 = vmatpush1.msra.mxu0 %v1521
      %1523 = vmatprep.subr.mxu0 0.0
      %v1524 = vand.u32 %v229, 4294901760
      %1525 = vmatpush1.msra.mxu0 %v1524
      %1526 = vmatprep.subr.mxu0 0.0
      %v1527 = vand.u32 %v230, 4294901760
      %1528 = vmatpush1.msra.mxu0 %v1527
      %1529 = vmatprep.subr.mxu0 0.0
      %v1530 = vand.u32 %v231, 4294901760
      %1531 = vmatpush1.msra.mxu0 %v1530
      %1532 = vmatprep.subr.mxu0 0.0
      %v1533 = vand.u32 %v232, 4294901760
      %1534 = vmatpush1.msra.mxu0 %v1533
      %1535 = vmatprep.subr.mxu0 0.0
      %v1536 = vand.u32 %v233, 4294901760
      %1537 = vmatpush1.msra.mxu0 %v1536
      %1538 = vmatprep.subr.mxu0 0.0
      %v1539 = vand.u32 %v234, 4294901760
      %1540 = vmatpush1.msra.mxu0 %v1539
      %1541 = vmatprep.subr.mxu0 0.0
      %v1542 = vand.u32 %v235, 4294901760
      %1543 = vmatpush1.msra.mxu0 %v1542
      %1544 = vmatprep.subr.mxu0 0.0
      %v1545 = vand.u32 %v236, 4294901760
      %1546 = vmatpush1.msra.mxu0 %v1545
      %1547 = vmatprep.subr.mxu0 0.0
      %v1548 = vand.u32 %v237, 4294901760
      %1549 = vmatpush1.msra.mxu0 %v1548
      %1550 = vmatprep.subr.mxu0 0.0
      %v1551 = vand.u32 %v238, 4294901760
      %1552 = vmatpush1.msra.mxu0 %v1551
      %1553 = vmatprep.subr.mxu0 0.0
      %v1554 = vand.u32 %v239, 4294901760
      %1555 = vmatpush1.msra.mxu0 %v1554
      %1556 = vmatprep.subr.mxu0 0.0
      %v1557 = vand.u32 %v240, 4294901760
      %1558 = vmatpush1.msra.mxu0 %v1557
      %1559 = vmatprep.subr.mxu0 0.0
      %v1560 = vand.u32 %v241, 4294901760
      %1561 = vmatpush1.msra.mxu0 %v1560
      %1562 = vmatprep.subr.mxu0 0.0
      %v1563 = vand.u32 %v242, 4294901760
      %1564 = vmatpush1.msra.mxu0 %v1563
      %1565 = vmatprep.subr.mxu0 0.0
      %v1566 = vand.u32 %v243, 4294901760
      %1567 = vmatpush1.msra.mxu0 %v1566
      %1568 = vmatprep.subr.mxu0 0.0
      %v1569 = vand.u32 %v244, 4294901760
      %1570 = vmatpush1.msra.mxu0 %v1569
      %v1571 = vand.u32 %v151, 4294901760
      %1572 = vmatprep.mubr.f32.mxu0 %v1571
      %v1573 = vand.u32 %v150, 4294901760
      %1574 = vmatmul.mubr.f32.gmra.mrb[0].mxu0 %v1573
      %v1575 = vpop.f32.mrb[0].mxu0
      %v1576 = vadd.f32 %v1416, %v1575
      %v1577 = vpop.f32.mrb[0].mxu0
      %v1578 = vand.u32 %v158, 4294901760
      %1579 = vmatprep.mubr.f32.mxu0 %v1578
      %v1580 = vand.u32 %v157, 4294901760
      %1581 = vmatmul.mubr.f32.gmra.mrb[0].mxu0 %v1580
      %v1582 = vpop.f32.mrb[0].mxu0
      %v1583 = vadd.f32 %v1423, %v1582
      %v1584 = vpop.f32.mrb[0].mxu0
      %v1585 = vand.u32 %v165, 4294901760
      %1586 = vmatprep.mubr.f32.mxu0 %v1585
      %v1587 = vand.u32 %v164, 4294901760
      %1588 = vmatmul.mubr.f32.gmra.mrb[0].mxu0 %v1587
      %v1589 = vpop.f32.mrb[0].mxu0
      %v1590 = vadd.f32 %v1430, %v1589
      %v1591 = vpop.f32.mrb[0].mxu0
      %v1592 = vand.u32 %v172, 4294901760
      %1593 = vmatprep.mubr.f32.mxu0 %v1592
      %v1594 = vand.u32 %v171, 4294901760
      %1595 = vmatmul.mubr.f32.gmra.mrb[0].mxu0 %v1594
      %v1596 = vpop.f32.mrb[0].mxu0
      %v1597 = vadd.f32 %v1437, %v1596
      %v1598 = vpop.f32.mrb[0].mxu0
      %v1599 = vand.u32 %v179, 4294901760
      %1600 = vmatprep.mubr.f32.mxu0 %v1599
      %v1601 = vand.u32 %v178, 4294901760
      %1602 = vmatmul.mubr.f32.gmra.mrb[0].mxu0 %v1601
      %v1603 = vpop.f32.mrb[0].mxu0
      %v1604 = vadd.f32 %v1444, %v1603
      %v1605 = vpop.f32.mrb[0].mxu0
      %v1606 = vand.u32 %v186, 4294901760
      %1607 = vmatprep.mubr.f32.mxu0 %v1606
      %v1608 = vand.u32 %v185, 4294901760
      %1609 = vmatmul.mubr.f32.gmra.mrb[0].mxu0 %v1608
      %v1610 = vpop.f32.mrb[0].mxu0
      %v1611 = vadd.f32 %v1451, %v1610
      %v1612 = vpop.f32.mrb[0].mxu0
      %v1613 = vand.u32 %v193, 4294901760
      %1614 = vmatprep.mubr.f32.mxu0 %v1613
      %v1615 = vand.u32 %v192, 4294901760
      %1616 = vmatmul.mubr.f32.gmra.mrb[0].mxu0 %v1615
      %v1617 = vpop.f32.mrb[0].mxu0
      %v1618 = vadd.f32 %v1458, %v1617
      %v1619 = vpop.f32.mrb[0].mxu0
      %v1620 = vand.u32 %v200, 4294901760
      %1621 = vmatprep.mubr.f32.mxu0 %v1620
      %v1622 = vand.u32 %v199, 4294901760
      %1623 = vmatmul.mubr.f32.gmra.mrb[0].mxu0 %v1622
      %v1624 = vpop.f32.mrb[0].mxu0
      %v1625 = vadd.f32 %v1465, %v1624
      %v1626 = vpop.f32.mrb[0].mxu0
      %v1627 = vand.u32 %v207, 4294901760
      %1628 = vmatprep.mubr.f32.mxu0 %v1627
      %v1629 = vand.u32 %v206, 4294901760
      %1630 = vmatmul.mubr.f32.gmra.mrb[0].mxu0 %v1629
      %v1631 = vpop.f32.mrb[0].mxu0
      %v1632 = vadd.f32 %v1472, %v1631
      %v1633 = vpop.f32.mrb[0].mxu0
      %1634 = vdwg.mxu0
      %1635 = vmatprep.subr.mxu0 0.0
      %v1636 = vand.u32 %v245, 4294901760
      %1637 = vmatpush1.msra.mxu0 %v1636
      %1638 = vmatprep.subr.mxu0 0.0
      %v1639 = vand.u32 %v246, 4294901760
      %1640 = vmatpush1.msra.mxu0 %v1639
      %1641 = vmatprep.subr.mxu0 0.0
      %v1642 = vand.u32 %v247, 4294901760
      %1643 = vmatpush1.msra.mxu0 %v1642
      %1644 = vmatprep.subr.mxu0 0.0
      %v1645 = vand.u32 %v248, 4294901760
      %1646 = vmatpush1.msra.mxu0 %v1645
      %1647 = vmatprep.subr.mxu0 0.0
      %v1648 = vand.u32 %v249, 4294901760
      %1649 = vmatpush1.msra.mxu0 %v1648
      %1650 = vmatprep.subr.mxu0 0.0
      %v1651 = vand.u32 %v250, 4294901760
      %1652 = vmatpush1.msra.mxu0 %v1651
      %1653 = vmatprep.subr.mxu0 0.0
      %v1654 = vand.u32 %v251, 4294901760
      %1655 = vmatpush1.msra.mxu0 %v1654
      %1656 = vmatprep.subr.mxu0 0.0
      %v1657 = vand.u32 %v252, 4294901760
      %1658 = vmatpush1.msra.mxu0 %v1657
      %1659 = vmatprep.subr.mxu0 0.0
      %v1660 = vand.u32 %v253, 4294901760
      %1661 = vmatpush1.msra.mxu0 %v1660
      %1662 = vmatprep.subr.mxu0 0.0
      %v1663 = vand.u32 %v254, 4294901760
      %1664 = vmatpush1.msra.mxu0 %v1663
      %1665 = vmatprep.subr.mxu0 0.0
      %v1666 = vand.u32 %v255, 4294901760
      %1667 = vmatpush1.msra.mxu0 %v1666
      %1668 = vmatprep.subr.mxu0 0.0
      %v1669 = vand.u32 %v256, 4294901760
      %1670 = vmatpush1.msra.mxu0 %v1669
      %1671 = vmatprep.subr.mxu0 0.0
      %v1672 = vand.u32 %v257, 4294901760
      %1673 = vmatpush1.msra.mxu0 %v1672
      %1674 = vmatprep.subr.mxu0 0.0
      %v1675 = vand.u32 %v258, 4294901760
      %1676 = vmatpush1.msra.mxu0 %v1675
      %1677 = vmatprep.subr.mxu0 0.0
      %v1678 = vand.u32 %v259, 4294901760
      %1679 = vmatpush1.msra.mxu0 %v1678
      %1680 = vmatprep.subr.mxu0 0.0
      %v1681 = vand.u32 %v260, 4294901760
      %1682 = vmatpush1.msra.mxu0 %v1681
      %1683 = vmatprep.subr.mxu0 0.0
      %v1684 = vand.u32 %v261, 4294901760
      %1685 = vmatpush1.msra.mxu0 %v1684
      %1686 = vmatprep.subr.mxu0 0.0
      %v1687 = vand.u32 %v262, 4294901760
      %1688 = vmatpush1.msra.mxu0 %v1687
      %1689 = vmatprep.subr.mxu0 0.0
      %v1690 = vand.u32 %v263, 4294901760
      %1691 = vmatpush1.msra.mxu0 %v1690
      %1692 = vmatprep.subr.mxu0 0.0
      %v1693 = vand.u32 %v264, 4294901760
      %1694 = vmatpush1.msra.mxu0 %v1693
      %1695 = vmatprep.subr.mxu0 0.0
      %v1696 = vand.u32 %v265, 4294901760
      %1697 = vmatpush1.msra.mxu0 %v1696
      %1698 = vmatprep.subr.mxu0 0.0
      %v1699 = vand.u32 %v266, 4294901760
      %1700 = vmatpush1.msra.mxu0 %v1699
      %1701 = vmatprep.subr.mxu0 0.0
      %v1702 = vand.u32 %v267, 4294901760
      %1703 = vmatpush1.msra.mxu0 %v1702
      %1704 = vmatprep.subr.mxu0 0.0
      %v1705 = vand.u32 %v268, 4294901760
      %1706 = vmatpush1.msra.mxu0 %v1705
      %1707 = vmatprep.subr.mxu0 0.0
      %v1708 = vand.u32 %v269, 4294901760
      %1709 = vmatpush1.msra.mxu0 %v1708
      %1710 = vmatprep.subr.mxu0 0.0
      %v1711 = vand.u32 %v270, 4294901760
      %1712 = vmatpush1.msra.mxu0 %v1711
      %1713 = vmatprep.subr.mxu0 0.0
      %v1714 = vand.u32 %v271, 4294901760
      %1715 = vmatpush1.msra.mxu0 %v1714
      %1716 = vmatprep.subr.mxu0 0.0
      %v1717 = vand.u32 %v272, 4294901760
      %1718 = vmatpush1.msra.mxu0 %v1717
      %1719 = vmatprep.subr.mxu0 0.0
      %v1720 = vand.u32 %v273, 4294901760
      %1721 = vmatpush1.msra.mxu0 %v1720
      %1722 = vmatprep.subr.mxu0 0.0
      %v1723 = vand.u32 %v274, 4294901760
      %1724 = vmatpush1.msra.mxu0 %v1723
      %1725 = vmatprep.subr.mxu0 0.0
      %v1726 = vand.u32 %v275, 4294901760
      %1727 = vmatpush1.msra.mxu0 %v1726
      %1728 = vmatprep.subr.mxu0 0.0
      %v1729 = vand.u32 %v276, 4294901760
      %1730 = vmatpush1.msra.mxu0 %v1729
      %v1731 = vand.u32 %v153, 4294901760
      %v1732 = vsub.f32 %v153, %v1731
      %v1733 = vand.u32 %v1732, 4294901760
      %v1734 = vsub.f32 %v1732, %v1733
      %v1735 = vand.u32 %v1734, 4294901760
      %1736 = vmatprep.mubr.f32.mxu0 %v1735
      %v1737 = vand.u32 %v152, 4294901760
      %v1738 = vsub.f32 %v152, %v1737
      %v1739 = vand.u32 %v1738, 4294901760
      %v1740 = vsub.f32 %v1738, %v1739
      %v1741 = vand.u32 %v1740, 4294901760
      %1742 = vmatmul.mubr.f32.gmra.mrb[0].mxu0 %v1741
      %v1743 = vpop.f32.mrb[0].mxu0
      %v1744 = vadd.f32 %v1576, %v1743
      %v1745 = vpop.f32.mrb[0].mxu0
      %v1746 = vand.u32 %v160, 4294901760
      %v1747 = vsub.f32 %v160, %v1746
      %v1748 = vand.u32 %v1747, 4294901760
      %v1749 = vsub.f32 %v1747, %v1748
      %v1750 = vand.u32 %v1749, 4294901760
      %1751 = vmatprep.mubr.f32.mxu0 %v1750
      %v1752 = vand.u32 %v159, 4294901760
      %v1753 = vsub.f32 %v159, %v1752
      %v1754 = vand.u32 %v1753, 4294901760
      %v1755 = vsub.f32 %v1753, %v1754
      %v1756 = vand.u32 %v1755, 4294901760
      %1757 = vmatmul.mubr.f32.gmra.mrb[0].mxu0 %v1756
      %v1758 = vpop.f32.mrb[0].mxu0
      %v1759 = vadd.f32 %v1583, %v1758
      %v1760 = vpop.f32.mrb[0].mxu0
      %v1761 = vand.u32 %v167, 4294901760
      %v1762 = vsub.f32 %v167, %v1761
      %v1763 = vand.u32 %v1762, 4294901760
      %v1764 = vsub.f32 %v1762, %v1763
      %v1765 = vand.u32 %v1764, 4294901760
      %1766 = vmatprep.mubr.f32.mxu0 %v1765
      %v1767 = vand.u32 %v166, 4294901760
      %v1768 = vsub.f32 %v166, %v1767
      %v1769 = vand.u32 %v1768, 4294901760
      %v1770 = vsub.f32 %v1768, %v1769
      %v1771 = vand.u32 %v1770, 4294901760
      %1772 = vmatmul.mubr.f32.gmra.mrb[0].mxu0 %v1771
      %v1773 = vpop.f32.mrb[0].mxu0
      %v1774 = vadd.f32 %v1590, %v1773
      %v1775 = vpop.f32.mrb[0].mxu0
      %v1776 = vand.u32 %v174, 4294901760
      %v1777 = vsub.f32 %v174, %v1776
      %v1778 = vand.u32 %v1777, 4294901760
      %v1779 = vsub.f32 %v1777, %v1778
      %v1780 = vand.u32 %v1779, 4294901760
      %1781 = vmatprep.mubr.f32.mxu0 %v1780
      %v1782 = vand.u32 %v173, 4294901760
      %v1783 = vsub.f32 %v173, %v1782
      %v1784 = vand.u32 %v1783, 4294901760
      %v1785 = vsub.f32 %v1783, %v1784
      %v1786 = vand.u32 %v1785, 4294901760
      %1787 = vmatmul.mubr.f32.gmra.mrb[0].mxu0 %v1786
      %v1788 = vpop.f32.mrb[0].mxu0
      %v1789 = vadd.f32 %v1597, %v1788
      %v1790 = vpop.f32.mrb[0].mxu0
      %v1791 = vand.u32 %v181, 4294901760
      %v1792 = vsub.f32 %v181, %v1791
      %v1793 = vand.u32 %v1792, 4294901760
      %v1794 = vsub.f32 %v1792, %v1793
      %v1795 = vand.u32 %v1794, 4294901760
      %1796 = vmatprep.mubr.f32.mxu0 %v1795
      %v1797 = vand.u32 %v180, 4294901760
      %v1798 = vsub.f32 %v180, %v1797
      %v1799 = vand.u32 %v1798, 4294901760
      %v1800 = vsub.f32 %v1798, %v1799
      %v1801 = vand.u32 %v1800, 4294901760
      %1802 = vmatmul.mubr.f32.gmra.mrb[0].mxu0 %v1801
      %v1803 = vpop.f32.mrb[0].mxu0
      %v1804 = vadd.f32 %v1604, %v1803
      %v1805 = vpop.f32.mrb[0].mxu0
      %v1806 = vand.u32 %v188, 4294901760
      %v1807 = vsub.f32 %v188, %v1806
      %v1808 = vand.u32 %v1807, 4294901760
      %v1809 = vsub.f32 %v1807, %v1808
      %v1810 = vand.u32 %v1809, 4294901760
      %1811 = vmatprep.mubr.f32.mxu0 %v1810
      %v1812 = vand.u32 %v187, 4294901760
      %v1813 = vsub.f32 %v187, %v1812
      %v1814 = vand.u32 %v1813, 4294901760
      %v1815 = vsub.f32 %v1813, %v1814
      %v1816 = vand.u32 %v1815, 4294901760
      %1817 = vmatmul.mubr.f32.gmra.mrb[0].mxu0 %v1816
      %v1818 = vpop.f32.mrb[0].mxu0
      %v1819 = vadd.f32 %v1611, %v1818
      %v1820 = vpop.f32.mrb[0].mxu0
      %v1821 = vand.u32 %v195, 4294901760
      %v1822 = vsub.f32 %v195, %v1821
      %v1823 = vand.u32 %v1822, 4294901760
      %v1824 = vsub.f32 %v1822, %v1823
      %v1825 = vand.u32 %v1824, 4294901760
      %1826 = vmatprep.mubr.f32.mxu0 %v1825
      %v1827 = vand.u32 %v194, 4294901760
      %v1828 = vsub.f32 %v194, %v1827
      %v1829 = vand.u32 %v1828, 4294901760
      %v1830 = vsub.f32 %v1828, %v1829
      %v1831 = vand.u32 %v1830, 4294901760
      %1832 = vmatmul.mubr.f32.gmra.mrb[0].mxu0 %v1831
      %v1833 = vpop.f32.mrb[0].mxu0
      %v1834 = vadd.f32 %v1618, %v1833
      %v1835 = vpop.f32.mrb[0].mxu0
      %v1836 = vand.u32 %v202, 4294901760
      %v1837 = vsub.f32 %v202, %v1836
      %v1838 = vand.u32 %v1837, 4294901760
      %v1839 = vsub.f32 %v1837, %v1838
      %v1840 = vand.u32 %v1839, 4294901760
      %1841 = vmatprep.mubr.f32.mxu0 %v1840
      %v1842 = vand.u32 %v201, 4294901760
      %v1843 = vsub.f32 %v201, %v1842
      %v1844 = vand.u32 %v1843, 4294901760
      %v1845 = vsub.f32 %v1843, %v1844
      %v1846 = vand.u32 %v1845, 4294901760
      %1847 = vmatmul.mubr.f32.gmra.mrb[0].mxu0 %v1846
      %v1848 = vpop.f32.mrb[0].mxu0
      %v1849 = vadd.f32 %v1625, %v1848
      %v1850 = vpop.f32.mrb[0].mxu0
      %v1851 = vand.u32 %v209, 4294901760
      %v1852 = vsub.f32 %v209, %v1851
      %v1853 = vand.u32 %v1852, 4294901760
      %v1854 = vsub.f32 %v1852, %v1853
      %v1855 = vand.u32 %v1854, 4294901760
      %1856 = vmatprep.mubr.f32.mxu0 %v1855
      %v1857 = vand.u32 %v208, 4294901760
      %v1858 = vsub.f32 %v208, %v1857
      %v1859 = vand.u32 %v1858, 4294901760
      %v1860 = vsub.f32 %v1858, %v1859
      %v1861 = vand.u32 %v1860, 4294901760
      %1862 = vmatmul.mubr.f32.gmra.mrb[0].mxu0 %v1861
      %v1863 = vpop.f32.mrb[0].mxu0
      %v1864 = vadd.f32 %v1632, %v1863
      %v1865 = vpop.f32.mrb[0].mxu0
      %1866 = vdwg.mxu0
      %1867 = vmatprep.subr.mxu0 0.0
      %v1868 = vand.u32 %v245, 4294901760
      %v1869 = vsub.f32 %v245, %v1868
      %v1870 = vand.u32 %v1869, 4294901760
      %v1871 = vsub.f32 %v1869, %v1870
      %v1872 = vand.u32 %v1871, 4294901760
      %1873 = vmatpush1.msra.mxu0 %v1872
      %1874 = vmatprep.subr.mxu0 0.0
      %v1875 = vand.u32 %v246, 4294901760
      %v1876 = vsub.f32 %v246, %v1875
      %v1877 = vand.u32 %v1876, 4294901760
      %v1878 = vsub.f32 %v1876, %v1877
      %v1879 = vand.u32 %v1878, 4294901760
      %1880 = vmatpush1.msra.mxu0 %v1879
      %1881 = vmatprep.subr.mxu0 0.0
      %v1882 = vand.u32 %v247, 4294901760
      %v1883 = vsub.f32 %v247, %v1882
      %v1884 = vand.u32 %v1883, 4294901760
      %v1885 = vsub.f32 %v1883, %v1884
      %v1886 = vand.u32 %v1885, 4294901760
      %1887 = vmatpush1.msra.mxu0 %v1886
      %1888 = vmatprep.subr.mxu0 0.0
      %v1889 = vand.u32 %v248, 4294901760
      %v1890 = vsub.f32 %v248, %v1889
      %v1891 = vand.u32 %v1890, 4294901760
      %v1892 = vsub.f32 %v1890, %v1891
      %v1893 = vand.u32 %v1892, 4294901760
      %1894 = vmatpush1.msra.mxu0 %v1893
      %1895 = vmatprep.subr.mxu0 0.0
      %v1896 = vand.u32 %v249, 4294901760
      %v1897 = vsub.f32 %v249, %v1896
      %v1898 = vand.u32 %v1897, 4294901760
      %v1899 = vsub.f32 %v1897, %v1898
      %v1900 = vand.u32 %v1899, 4294901760
      %1901 = vmatpush1.msra.mxu0 %v1900
      %1902 = vmatprep.subr.mxu0 0.0
      %v1903 = vand.u32 %v250, 4294901760
      %v1904 = vsub.f32 %v250, %v1903
      %v1905 = vand.u32 %v1904, 4294901760
      %v1906 = vsub.f32 %v1904, %v1905
      %v1907 = vand.u32 %v1906, 4294901760
      %1908 = vmatpush1.msra.mxu0 %v1907
      %1909 = vmatprep.subr.mxu0 0.0
      %v1910 = vand.u32 %v251, 4294901760
      %v1911 = vsub.f32 %v251, %v1910
      %v1912 = vand.u32 %v1911, 4294901760
      %v1913 = vsub.f32 %v1911, %v1912
      %v1914 = vand.u32 %v1913, 4294901760
      %1915 = vmatpush1.msra.mxu0 %v1914
      %1916 = vmatprep.subr.mxu0 0.0
      %v1917 = vand.u32 %v252, 4294901760
      %v1918 = vsub.f32 %v252, %v1917
      %v1919 = vand.u32 %v1918, 4294901760
      %v1920 = vsub.f32 %v1918, %v1919
      %v1921 = vand.u32 %v1920, 4294901760
      %1922 = vmatpush1.msra.mxu0 %v1921
      %1923 = vmatprep.subr.mxu0 0.0
      %v1924 = vand.u32 %v253, 4294901760
      %v1925 = vsub.f32 %v253, %v1924
      %v1926 = vand.u32 %v1925, 4294901760
      %v1927 = vsub.f32 %v1925, %v1926
      %v1928 = vand.u32 %v1927, 4294901760
      %1929 = vmatpush1.msra.mxu0 %v1928
      %1930 = vmatprep.subr.mxu0 0.0
      %v1931 = vand.u32 %v254, 4294901760
      %v1932 = vsub.f32 %v254, %v1931
      %v1933 = vand.u32 %v1932, 4294901760
      %v1934 = vsub.f32 %v1932, %v1933
      %v1935 = vand.u32 %v1934, 4294901760
      %1936 = vmatpush1.msra.mxu0 %v1935
      %1937 = vmatprep.subr.mxu0 0.0
      %v1938 = vand.u32 %v255, 4294901760
      %v1939 = vsub.f32 %v255, %v1938
      %v1940 = vand.u32 %v1939, 4294901760
      %v1941 = vsub.f32 %v1939, %v1940
      %v1942 = vand.u32 %v1941, 4294901760
      %1943 = vmatpush1.msra.mxu0 %v1942
      %1944 = vmatprep.subr.mxu0 0.0
      %v1945 = vand.u32 %v256, 4294901760
      %v1946 = vsub.f32 %v256, %v1945
      %v1947 = vand.u32 %v1946, 4294901760
      %v1948 = vsub.f32 %v1946, %v1947
      %v1949 = vand.u32 %v1948, 4294901760
      %1950 = vmatpush1.msra.mxu0 %v1949
      %1951 = vmatprep.subr.mxu0 0.0
      %v1952 = vand.u32 %v257, 4294901760
      %v1953 = vsub.f32 %v257, %v1952
      %v1954 = vand.u32 %v1953, 4294901760
      %v1955 = vsub.f32 %v1953, %v1954
      %v1956 = vand.u32 %v1955, 4294901760
      %1957 = vmatpush1.msra.mxu0 %v1956
      %1958 = vmatprep.subr.mxu0 0.0
      %v1959 = vand.u32 %v258, 4294901760
      %v1960 = vsub.f32 %v258, %v1959
      %v1961 = vand.u32 %v1960, 4294901760
      %v1962 = vsub.f32 %v1960, %v1961
      %v1963 = vand.u32 %v1962, 4294901760
      %1964 = vmatpush1.msra.mxu0 %v1963
      %1965 = vmatprep.subr.mxu0 0.0
      %v1966 = vand.u32 %v259, 4294901760
      %v1967 = vsub.f32 %v259, %v1966
      %v1968 = vand.u32 %v1967, 4294901760
      %v1969 = vsub.f32 %v1967, %v1968
      %v1970 = vand.u32 %v1969, 4294901760
      %1971 = vmatpush1.msra.mxu0 %v1970
      %1972 = vmatprep.subr.mxu0 0.0
      %v1973 = vand.u32 %v260, 4294901760
      %v1974 = vsub.f32 %v260, %v1973
      %v1975 = vand.u32 %v1974, 4294901760
      %v1976 = vsub.f32 %v1974, %v1975
      %v1977 = vand.u32 %v1976, 4294901760
      %1978 = vmatpush1.msra.mxu0 %v1977
      %1979 = vmatprep.subr.mxu0 0.0
      %v1980 = vand.u32 %v261, 4294901760
      %v1981 = vsub.f32 %v261, %v1980
      %v1982 = vand.u32 %v1981, 4294901760
      %v1983 = vsub.f32 %v1981, %v1982
      %v1984 = vand.u32 %v1983, 4294901760
      %1985 = vmatpush1.msra.mxu0 %v1984
      %1986 = vmatprep.subr.mxu0 0.0
      %v1987 = vand.u32 %v262, 4294901760
      %v1988 = vsub.f32 %v262, %v1987
      %v1989 = vand.u32 %v1988, 4294901760
      %v1990 = vsub.f32 %v1988, %v1989
      %v1991 = vand.u32 %v1990, 4294901760
      %1992 = vmatpush1.msra.mxu0 %v1991
      %1993 = vmatprep.subr.mxu0 0.0
      %v1994 = vand.u32 %v263, 4294901760
      %v1995 = vsub.f32 %v263, %v1994
      %v1996 = vand.u32 %v1995, 4294901760
      %v1997 = vsub.f32 %v1995, %v1996
      %v1998 = vand.u32 %v1997, 4294901760
      %1999 = vmatpush1.msra.mxu0 %v1998
      %2000 = vmatprep.subr.mxu0 0.0
      %v2001 = vand.u32 %v264, 4294901760
      %v2002 = vsub.f32 %v264, %v2001
      %v2003 = vand.u32 %v2002, 4294901760
      %v2004 = vsub.f32 %v2002, %v2003
      %v2005 = vand.u32 %v2004, 4294901760
      %2006 = vmatpush1.msra.mxu0 %v2005
      %2007 = vmatprep.subr.mxu0 0.0
      %v2008 = vand.u32 %v265, 4294901760
      %v2009 = vsub.f32 %v265, %v2008
      %v2010 = vand.u32 %v2009, 4294901760
      %v2011 = vsub.f32 %v2009, %v2010
      %v2012 = vand.u32 %v2011, 4294901760
      %2013 = vmatpush1.msra.mxu0 %v2012
      %2014 = vmatprep.subr.mxu0 0.0
      %v2015 = vand.u32 %v266, 4294901760
      %v2016 = vsub.f32 %v266, %v2015
      %v2017 = vand.u32 %v2016, 4294901760
      %v2018 = vsub.f32 %v2016, %v2017
      %v2019 = vand.u32 %v2018, 4294901760
      %2020 = vmatpush1.msra.mxu0 %v2019
      %2021 = vmatprep.subr.mxu0 0.0
      %v2022 = vand.u32 %v267, 4294901760
      %v2023 = vsub.f32 %v267, %v2022
      %v2024 = vand.u32 %v2023, 4294901760
      %v2025 = vsub.f32 %v2023, %v2024
      %v2026 = vand.u32 %v2025, 4294901760
      %2027 = vmatpush1.msra.mxu0 %v2026
      %2028 = vmatprep.subr.mxu0 0.0
      %v2029 = vand.u32 %v268, 4294901760
      %v2030 = vsub.f32 %v268, %v2029
      %v2031 = vand.u32 %v2030, 4294901760
      %v2032 = vsub.f32 %v2030, %v2031
      %v2033 = vand.u32 %v2032, 4294901760
      %2034 = vmatpush1.msra.mxu0 %v2033
      %2035 = vmatprep.subr.mxu0 0.0
      %v2036 = vand.u32 %v269, 4294901760
      %v2037 = vsub.f32 %v269, %v2036
      %v2038 = vand.u32 %v2037, 4294901760
      %v2039 = vsub.f32 %v2037, %v2038
      %v2040 = vand.u32 %v2039, 4294901760
      %2041 = vmatpush1.msra.mxu0 %v2040
      %2042 = vmatprep.subr.mxu0 0.0
      %v2043 = vand.u32 %v270, 4294901760
      %v2044 = vsub.f32 %v270, %v2043
      %v2045 = vand.u32 %v2044, 4294901760
      %v2046 = vsub.f32 %v2044, %v2045
      %v2047 = vand.u32 %v2046, 4294901760
      %2048 = vmatpush1.msra.mxu0 %v2047
      %2049 = vmatprep.subr.mxu0 0.0
      %v2050 = vand.u32 %v271, 4294901760
      %v2051 = vsub.f32 %v271, %v2050
      %v2052 = vand.u32 %v2051, 4294901760
      %v2053 = vsub.f32 %v2051, %v2052
      %v2054 = vand.u32 %v2053, 4294901760
      %2055 = vmatpush1.msra.mxu0 %v2054
      %2056 = vmatprep.subr.mxu0 0.0
      %v2057 = vand.u32 %v272, 4294901760
      %v2058 = vsub.f32 %v272, %v2057
      %v2059 = vand.u32 %v2058, 4294901760
      %v2060 = vsub.f32 %v2058, %v2059
      %v2061 = vand.u32 %v2060, 4294901760
      %2062 = vmatpush1.msra.mxu0 %v2061
      %2063 = vmatprep.subr.mxu0 0.0
      %v2064 = vand.u32 %v273, 4294901760
      %v2065 = vsub.f32 %v273, %v2064
      %v2066 = vand.u32 %v2065, 4294901760
      %v2067 = vsub.f32 %v2065, %v2066
      %v2068 = vand.u32 %v2067, 4294901760
      %2069 = vmatpush1.msra.mxu0 %v2068
      %2070 = vmatprep.subr.mxu0 0.0
      %v2071 = vand.u32 %v274, 4294901760
      %v2072 = vsub.f32 %v274, %v2071
      %v2073 = vand.u32 %v2072, 4294901760
      %v2074 = vsub.f32 %v2072, %v2073
      %v2075 = vand.u32 %v2074, 4294901760
      %2076 = vmatpush1.msra.mxu0 %v2075
      %2077 = vmatprep.subr.mxu0 0.0
      %v2078 = vand.u32 %v275, 4294901760
      %v2079 = vsub.f32 %v275, %v2078
      %v2080 = vand.u32 %v2079, 4294901760
      %v2081 = vsub.f32 %v2079, %v2080
      %v2082 = vand.u32 %v2081, 4294901760
      %2083 = vmatpush1.msra.mxu0 %v2082
      %2084 = vmatprep.subr.mxu0 0.0
      %v2085 = vand.u32 %v276, 4294901760
      %v2086 = vsub.f32 %v276, %v2085
      %v2087 = vand.u32 %v2086, 4294901760
      %v2088 = vsub.f32 %v2086, %v2087
      %v2089 = vand.u32 %v2088, 4294901760
      %2090 = vmatpush1.msra.mxu0 %v2089
      %v2091 = vand.u32 %v153, 4294901760
      %2092 = vmatprep.mubr.f32.mxu0 %v2091
      %v2093 = vand.u32 %v152, 4294901760
      %2094 = vmatmul.mubr.f32.gmra.mrb[0].mxu0 %v2093
      %v2095 = vpop.f32.mrb[0].mxu0
      %v2096 = vadd.f32 %v1744, %v2095
      %v2097 = vpop.f32.mrb[0].mxu0
      %v2098 = vand.u32 %v160, 4294901760
      %2099 = vmatprep.mubr.f32.mxu0 %v2098
      %v2100 = vand.u32 %v159, 4294901760
      %2101 = vmatmul.mubr.f32.gmra.mrb[0].mxu0 %v2100
      %v2102 = vpop.f32.mrb[0].mxu0
      %v2103 = vadd.f32 %v1759, %v2102
      %v2104 = vpop.f32.mrb[0].mxu0
      %v2105 = vand.u32 %v167, 4294901760
      %2106 = vmatprep.mubr.f32.mxu0 %v2105
      %v2107 = vand.u32 %v166, 4294901760
      %2108 = vmatmul.mubr.f32.gmra.mrb[0].mxu0 %v2107
      %v2109 = vpop.f32.mrb[0].mxu0
      %v2110 = vadd.f32 %v1774, %v2109
      %v2111 = vpop.f32.mrb[0].mxu0
      %v2112 = vand.u32 %v174, 4294901760
      %2113 = vmatprep.mubr.f32.mxu0 %v2112
      %v2114 = vand.u32 %v173, 4294901760
      %2115 = vmatmul.mubr.f32.gmra.mrb[0].mxu0 %v2114
      %v2116 = vpop.f32.mrb[0].mxu0
      %v2117 = vadd.f32 %v1789, %v2116
      %v2118 = vpop.f32.mrb[0].mxu0
      %v2119 = vand.u32 %v181, 4294901760
      %2120 = vmatprep.mubr.f32.mxu0 %v2119
      %v2121 = vand.u32 %v180, 4294901760
      %2122 = vmatmul.mubr.f32.gmra.mrb[0].mxu0 %v2121
      %v2123 = vpop.f32.mrb[0].mxu0
      %v2124 = vadd.f32 %v1804, %v2123
      %v2125 = vpop.f32.mrb[0].mxu0
      %v2126 = vand.u32 %v188, 4294901760
      %2127 = vmatprep.mubr.f32.mxu0 %v2126
      %v2128 = vand.u32 %v187, 4294901760
      %2129 = vmatmul.mubr.f32.gmra.mrb[0].mxu0 %v2128
      %v2130 = vpop.f32.mrb[0].mxu0
      %v2131 = vadd.f32 %v1819, %v2130
      %v2132 = vpop.f32.mrb[0].mxu0
      %v2133 = vand.u32 %v195, 4294901760
      %2134 = vmatprep.mubr.f32.mxu0 %v2133
      %v2135 = vand.u32 %v194, 4294901760
      %2136 = vmatmul.mubr.f32.gmra.mrb[0].mxu0 %v2135
      %v2137 = vpop.f32.mrb[0].mxu0
      %v2138 = vadd.f32 %v1834, %v2137
      %v2139 = vpop.f32.mrb[0].mxu0
      %v2140 = vand.u32 %v202, 4294901760
      %2141 = vmatprep.mubr.f32.mxu0 %v2140
      %v2142 = vand.u32 %v201, 4294901760
      %2143 = vmatmul.mubr.f32.gmra.mrb[0].mxu0 %v2142
      %v2144 = vpop.f32.mrb[0].mxu0
      %v2145 = vadd.f32 %v1849, %v2144
      %v2146 = vpop.f32.mrb[0].mxu0
      %v2147 = vand.u32 %v209, 4294901760
      %2148 = vmatprep.mubr.f32.mxu0 %v2147
      %v2149 = vand.u32 %v208, 4294901760
      %2150 = vmatmul.mubr.f32.gmra.mrb[0].mxu0 %v2149
      %v2151 = vpop.f32.mrb[0].mxu0
      %v2152 = vadd.f32 %v1864, %v2151
      %v2153 = vpop.f32.mrb[0].mxu0
      %2154 = vdwg.mxu0
      %2155 = vmatprep.subr.mxu0 0.0
      %v2156 = vand.u32 %v245, 4294901760
      %v2157 = vsub.f32 %v245, %v2156
      %2158 = vmatpush1.msra.mxu0 %v2157
      %2159 = vmatprep.subr.mxu0 0.0
      %v2160 = vand.u32 %v246, 4294901760
      %v2161 = vsub.f32 %v246, %v2160
      %2162 = vmatpush1.msra.mxu0 %v2161
      %2163 = vmatprep.subr.mxu0 0.0
      %v2164 = vand.u32 %v247, 4294901760
      %v2165 = vsub.f32 %v247, %v2164
      %2166 = vmatpush1.msra.mxu0 %v2165
      %2167 = vmatprep.subr.mxu0 0.0
      %v2168 = vand.u32 %v248, 4294901760
      %v2169 = vsub.f32 %v248, %v2168
      %2170 = vmatpush1.msra.mxu0 %v2169
      %2171 = vmatprep.subr.mxu0 0.0
      %v2172 = vand.u32 %v249, 4294901760
      %v2173 = vsub.f32 %v249, %v2172
      %2174 = vmatpush1.msra.mxu0 %v2173
      %2175 = vmatprep.subr.mxu0 0.0
      %v2176 = vand.u32 %v250, 4294901760
      %v2177 = vsub.f32 %v250, %v2176
      %2178 = vmatpush1.msra.mxu0 %v2177
      %2179 = vmatprep.subr.mxu0 0.0
      %v2180 = vand.u32 %v251, 4294901760
      %v2181 = vsub.f32 %v251, %v2180
      %2182 = vmatpush1.msra.mxu0 %v2181
      %2183 = vmatprep.subr.mxu0 0.0
      %v2184 = vand.u32 %v252, 4294901760
      %v2185 = vsub.f32 %v252, %v2184
      %2186 = vmatpush1.msra.mxu0 %v2185
      %2187 = vmatprep.subr.mxu0 0.0
      %v2188 = vand.u32 %v253, 4294901760
      %v2189 = vsub.f32 %v253, %v2188
      %2190 = vmatpush1.msra.mxu0 %v2189
      %2191 = vmatprep.subr.mxu0 0.0
      %v2192 = vand.u32 %v254, 4294901760
      %v2193 = vsub.f32 %v254, %v2192
      %2194 = vmatpush1.msra.mxu0 %v2193
      %2195 = vmatprep.subr.mxu0 0.0
      %v2196 = vand.u32 %v255, 4294901760
      %v2197 = vsub.f32 %v255, %v2196
      %2198 = vmatpush1.msra.mxu0 %v2197
      %2199 = vmatprep.subr.mxu0 0.0
      %v2200 = vand.u32 %v256, 4294901760
      %v2201 = vsub.f32 %v256, %v2200
      %2202 = vmatpush1.msra.mxu0 %v2201
      %2203 = vmatprep.subr.mxu0 0.0
      %v2204 = vand.u32 %v257, 4294901760
      %v2205 = vsub.f32 %v257, %v2204
      %2206 = vmatpush1.msra.mxu0 %v2205
      %2207 = vmatprep.subr.mxu0 0.0
      %v2208 = vand.u32 %v258, 4294901760
      %v2209 = vsub.f32 %v258, %v2208
      %2210 = vmatpush1.msra.mxu0 %v2209
      %2211 = vmatprep.subr.mxu0 0.0
      %v2212 = vand.u32 %v259, 4294901760
      %v2213 = vsub.f32 %v259, %v2212
      %2214 = vmatpush1.msra.mxu0 %v2213
      %2215 = vmatprep.subr.mxu0 0.0
      %v2216 = vand.u32 %v260, 4294901760
      %v2217 = vsub.f32 %v260, %v2216
      %2218 = vmatpush1.msra.mxu0 %v2217
      %2219 = vmatprep.subr.mxu0 0.0
      %v2220 = vand.u32 %v261, 4294901760
      %v2221 = vsub.f32 %v261, %v2220
      %2222 = vmatpush1.msra.mxu0 %v2221
      %2223 = vmatprep.subr.mxu0 0.0
      %v2224 = vand.u32 %v262, 4294901760
      %v2225 = vsub.f32 %v262, %v2224
      %2226 = vmatpush1.msra.mxu0 %v2225
      %2227 = vmatprep.subr.mxu0 0.0
      %v2228 = vand.u32 %v263, 4294901760
      %v2229 = vsub.f32 %v263, %v2228
      %2230 = vmatpush1.msra.mxu0 %v2229
      %2231 = vmatprep.subr.mxu0 0.0
      %v2232 = vand.u32 %v264, 4294901760
      %v2233 = vsub.f32 %v264, %v2232
      %2234 = vmatpush1.msra.mxu0 %v2233
      %2235 = vmatprep.subr.mxu0 0.0
      %v2236 = vand.u32 %v265, 4294901760
      %v2237 = vsub.f32 %v265, %v2236
      %2238 = vmatpush1.msra.mxu0 %v2237
      %2239 = vmatprep.subr.mxu0 0.0
      %v2240 = vand.u32 %v266, 4294901760
      %v2241 = vsub.f32 %v266, %v2240
      %2242 = vmatpush1.msra.mxu0 %v2241
      %2243 = vmatprep.subr.mxu0 0.0
      %v2244 = vand.u32 %v267, 4294901760
      %v2245 = vsub.f32 %v267, %v2244
      %2246 = vmatpush1.msra.mxu0 %v2245
      %2247 = vmatprep.subr.mxu0 0.0
      %v2248 = vand.u32 %v268, 4294901760
      %v2249 = vsub.f32 %v268, %v2248
      %2250 = vmatpush1.msra.mxu0 %v2249
      %2251 = vmatprep.subr.mxu0 0.0
      %v2252 = vand.u32 %v269, 4294901760
      %v2253 = vsub.f32 %v269, %v2252
      %2254 = vmatpush1.msra.mxu0 %v2253
      %2255 = vmatprep.subr.mxu0 0.0
      %v2256 = vand.u32 %v270, 4294901760
      %v2257 = vsub.f32 %v270, %v2256
      %2258 = vmatpush1.msra.mxu0 %v2257
      %2259 = vmatprep.subr.mxu0 0.0
      %v2260 = vand.u32 %v271, 4294901760
      %v2261 = vsub.f32 %v271, %v2260
      %2262 = vmatpush1.msra.mxu0 %v2261
      %2263 = vmatprep.subr.mxu0 0.0
      %v2264 = vand.u32 %v272, 4294901760
      %v2265 = vsub.f32 %v272, %v2264
      %2266 = vmatpush1.msra.mxu0 %v2265
      %2267 = vmatprep.subr.mxu0 0.0
      %v2268 = vand.u32 %v273, 4294901760
      %v2269 = vsub.f32 %v273, %v2268
      %2270 = vmatpush1.msra.mxu0 %v2269
      %2271 = vmatprep.subr.mxu0 0.0
      %v2272 = vand.u32 %v274, 4294901760
      %v2273 = vsub.f32 %v274, %v2272
      %2274 = vmatpush1.msra.mxu0 %v2273
      %2275 = vmatprep.subr.mxu0 0.0
      %v2276 = vand.u32 %v275, 4294901760
      %v2277 = vsub.f32 %v275, %v2276
      %2278 = vmatpush1.msra.mxu0 %v2277
      %2279 = vmatprep.subr.mxu0 0.0
      %v2280 = vand.u32 %v276, 4294901760
      %v2281 = vsub.f32 %v276, %v2280
      %2282 = vmatpush1.msra.mxu0 %v2281
      %v2283 = vand.u32 %v153, 4294901760
      %v2284 = vsub.f32 %v153, %v2283
      %2285 = vmatprep.mubr.f32.mxu0 %v2284
      %v2286 = vand.u32 %v152, 4294901760
      %v2287 = vsub.f32 %v152, %v2286
      %2288 = vmatmul.mubr.f32.gmra.mrb[0].mxu0 %v2287
      %v2289 = vpop.f32.mrb[0].mxu0
      %v2290 = vadd.f32 %v2096, %v2289
      %v2291 = vpop.f32.mrb[0].mxu0
      %v2292 = vand.u32 %v160, 4294901760
      %v2293 = vsub.f32 %v160, %v2292
      %2294 = vmatprep.mubr.f32.mxu0 %v2293
      %v2295 = vand.u32 %v159, 4294901760
      %v2296 = vsub.f32 %v159, %v2295
      %2297 = vmatmul.mubr.f32.gmra.mrb[0].mxu0 %v2296
      %v2298 = vpop.f32.mrb[0].mxu0
      %v2299 = vadd.f32 %v2103, %v2298
      %v2300 = vpop.f32.mrb[0].mxu0
      %v2301 = vand.u32 %v167, 4294901760
      %v2302 = vsub.f32 %v167, %v2301
      %2303 = vmatprep.mubr.f32.mxu0 %v2302
      %v2304 = vand.u32 %v166, 4294901760
      %v2305 = vsub.f32 %v166, %v2304
      %2306 = vmatmul.mubr.f32.gmra.mrb[0].mxu0 %v2305
      %v2307 = vpop.f32.mrb[0].mxu0
      %v2308 = vadd.f32 %v2110, %v2307
      %v2309 = vpop.f32.mrb[0].mxu0
      %v2310 = vand.u32 %v174, 4294901760
      %v2311 = vsub.f32 %v174, %v2310
      %2312 = vmatprep.mubr.f32.mxu0 %v2311
      %v2313 = vand.u32 %v173, 4294901760
      %v2314 = vsub.f32 %v173, %v2313
      %2315 = vmatmul.mubr.f32.gmra.mrb[0].mxu0 %v2314
      %v2316 = vpop.f32.mrb[0].mxu0
      %v2317 = vadd.f32 %v2117, %v2316
      %v2318 = vpop.f32.mrb[0].mxu0
      %v2319 = vand.u32 %v181, 4294901760
      %v2320 = vsub.f32 %v181, %v2319
      %2321 = vmatprep.mubr.f32.mxu0 %v2320
      %v2322 = vand.u32 %v180, 4294901760
      %v2323 = vsub.f32 %v180, %v2322
      %2324 = vmatmul.mubr.f32.gmra.mrb[0].mxu0 %v2323
      %v2325 = vpop.f32.mrb[0].mxu0
      %v2326 = vadd.f32 %v2124, %v2325
      %v2327 = vpop.f32.mrb[0].mxu0
      %v2328 = vand.u32 %v188, 4294901760
      %v2329 = vsub.f32 %v188, %v2328
      %2330 = vmatprep.mubr.f32.mxu0 %v2329
      %v2331 = vand.u32 %v187, 4294901760
      %v2332 = vsub.f32 %v187, %v2331
      %2333 = vmatmul.mubr.f32.gmra.mrb[0].mxu0 %v2332
      %v2334 = vpop.f32.mrb[0].mxu0
      %v2335 = vadd.f32 %v2131, %v2334
      %v2336 = vpop.f32.mrb[0].mxu0
      %v2337 = vand.u32 %v195, 4294901760
      %v2338 = vsub.f32 %v195, %v2337
      %2339 = vmatprep.mubr.f32.mxu0 %v2338
      %v2340 = vand.u32 %v194, 4294901760
      %v2341 = vsub.f32 %v194, %v2340
      %2342 = vmatmul.mubr.f32.gmra.mrb[0].mxu0 %v2341
      %v2343 = vpop.f32.mrb[0].mxu0
      %v2344 = vadd.f32 %v2138, %v2343
      %v2345 = vpop.f32.mrb[0].mxu0
      %v2346 = vand.u32 %v202, 4294901760
      %v2347 = vsub.f32 %v202, %v2346
      %2348 = vmatprep.mubr.f32.mxu0 %v2347
      %v2349 = vand.u32 %v201, 4294901760
      %v2350 = vsub.f32 %v201, %v2349
      %2351 = vmatmul.mubr.f32.gmra.mrb[0].mxu0 %v2350
      %v2352 = vpop.f32.mrb[0].mxu0
      %v2353 = vadd.f32 %v2145, %v2352
      %v2354 = vpop.f32.mrb[0].mxu0
      %v2355 = vand.u32 %v209, 4294901760
      %v2356 = vsub.f32 %v209, %v2355
      %2357 = vmatprep.mubr.f32.mxu0 %v2356
      %v2358 = vand.u32 %v208, 4294901760
      %v2359 = vsub.f32 %v208, %v2358
      %2360 = vmatmul.mubr.f32.gmra.mrb[0].mxu0 %v2359
      %v2361 = vpop.f32.mrb[0].mxu0
      %v2362 = vadd.f32 %v2152, %v2361
      %v2363 = vpop.f32.mrb[0].mxu0
      %2364 = vdwg.mxu0
      %2365 = vmatprep.subr.mxu0 0.0
      %v2366 = vand.u32 %v245, 4294901760
      %2367 = vmatpush1.msra.mxu0 %v2366
      %2368 = vmatprep.subr.mxu0 0.0
      %v2369 = vand.u32 %v246, 4294901760
      %2370 = vmatpush1.msra.mxu0 %v2369
      %2371 = vmatprep.subr.mxu0 0.0
      %v2372 = vand.u32 %v247, 4294901760
      %2373 = vmatpush1.msra.mxu0 %v2372
      %2374 = vmatprep.subr.mxu0 0.0
      %v2375 = vand.u32 %v248, 4294901760
      %2376 = vmatpush1.msra.mxu0 %v2375
      %2377 = vmatprep.subr.mxu0 0.0
      %v2378 = vand.u32 %v249, 4294901760
      %2379 = vmatpush1.msra.mxu0 %v2378
      %2380 = vmatprep.subr.mxu0 0.0
      %v2381 = vand.u32 %v250, 4294901760
      %2382 = vmatpush1.msra.mxu0 %v2381
      %2383 = vmatprep.subr.mxu0 0.0
      %v2384 = vand.u32 %v251, 4294901760
      %2385 = vmatpush1.msra.mxu0 %v2384
      %2386 = vmatprep.subr.mxu0 0.0
      %v2387 = vand.u32 %v252, 4294901760
      %2388 = vmatpush1.msra.mxu0 %v2387
      %2389 = vmatprep.subr.mxu0 0.0
      %v2390 = vand.u32 %v253, 4294901760
      %2391 = vmatpush1.msra.mxu0 %v2390
      %2392 = vmatprep.subr.mxu0 0.0
      %v2393 = vand.u32 %v254, 4294901760
      %2394 = vmatpush1.msra.mxu0 %v2393
      %2395 = vmatprep.subr.mxu0 0.0
      %v2396 = vand.u32 %v255, 4294901760
      %2397 = vmatpush1.msra.mxu0 %v2396
      %2398 = vmatprep.subr.mxu0 0.0
      %v2399 = vand.u32 %v256, 4294901760
      %2400 = vmatpush1.msra.mxu0 %v2399
      %2401 = vmatprep.subr.mxu0 0.0
      %v2402 = vand.u32 %v257, 4294901760
      %2403 = vmatpush1.msra.mxu0 %v2402
      %2404 = vmatprep.subr.mxu0 0.0
      %v2405 = vand.u32 %v258, 4294901760
      %2406 = vmatpush1.msra.mxu0 %v2405
      %2407 = vmatprep.subr.mxu0 0.0
      %v2408 = vand.u32 %v259, 4294901760
      %2409 = vmatpush1.msra.mxu0 %v2408
      %2410 = vmatprep.subr.mxu0 0.0
      %v2411 = vand.u32 %v260, 4294901760
      %2412 = vmatpush1.msra.mxu0 %v2411
      %2413 = vmatprep.subr.mxu0 0.0
      %v2414 = vand.u32 %v261, 4294901760
      %2415 = vmatpush1.msra.mxu0 %v2414
      %2416 = vmatprep.subr.mxu0 0.0
      %v2417 = vand.u32 %v262, 4294901760
      %2418 = vmatpush1.msra.mxu0 %v2417
      %2419 = vmatprep.subr.mxu0 0.0
      %v2420 = vand.u32 %v263, 4294901760
      %2421 = vmatpush1.msra.mxu0 %v2420
      %2422 = vmatprep.subr.mxu0 0.0
      %v2423 = vand.u32 %v264, 4294901760
      %2424 = vmatpush1.msra.mxu0 %v2423
      %2425 = vmatprep.subr.mxu0 0.0
      %v2426 = vand.u32 %v265, 4294901760
      %2427 = vmatpush1.msra.mxu0 %v2426
      %2428 = vmatprep.subr.mxu0 0.0
      %v2429 = vand.u32 %v266, 4294901760
      %2430 = vmatpush1.msra.mxu0 %v2429
      %2431 = vmatprep.subr.mxu0 0.0
      %v2432 = vand.u32 %v267, 4294901760
      %2433 = vmatpush1.msra.mxu0 %v2432
      %2434 = vmatprep.subr.mxu0 0.0
      %v2435 = vand.u32 %v268, 4294901760
      %2436 = vmatpush1.msra.mxu0 %v2435
      %2437 = vmatprep.subr.mxu0 0.0
      %v2438 = vand.u32 %v269, 4294901760
      %2439 = vmatpush1.msra.mxu0 %v2438
      %2440 = vmatprep.subr.mxu0 0.0
      %v2441 = vand.u32 %v270, 4294901760
      %2442 = vmatpush1.msra.mxu0 %v2441
      %2443 = vmatprep.subr.mxu0 0.0
      %v2444 = vand.u32 %v271, 4294901760
      %2445 = vmatpush1.msra.mxu0 %v2444
      %2446 = vmatprep.subr.mxu0 0.0
      %v2447 = vand.u32 %v272, 4294901760
      %2448 = vmatpush1.msra.mxu0 %v2447
      %2449 = vmatprep.subr.mxu0 0.0
      %v2450 = vand.u32 %v273, 4294901760
      %2451 = vmatpush1.msra.mxu0 %v2450
      %2452 = vmatprep.subr.mxu0 0.0
      %v2453 = vand.u32 %v274, 4294901760
      %2454 = vmatpush1.msra.mxu0 %v2453
      %2455 = vmatprep.subr.mxu0 0.0
      %v2456 = vand.u32 %v275, 4294901760
      %2457 = vmatpush1.msra.mxu0 %v2456
      %2458 = vmatprep.subr.mxu0 0.0
      %v2459 = vand.u32 %v276, 4294901760
      %2460 = vmatpush1.msra.mxu0 %v2459
      %v2461 = vand.u32 %v153, 4294901760
      %v2462 = vsub.f32 %v153, %v2461
      %v2463 = vand.u32 %v2462, 4294901760
      %2464 = vmatprep.mubr.f32.mxu0 %v2463
      %v2465 = vand.u32 %v152, 4294901760
      %v2466 = vsub.f32 %v152, %v2465
      %v2467 = vand.u32 %v2466, 4294901760
      %2468 = vmatmul.mubr.f32.gmra.mrb[0].mxu0 %v2467
      %v2469 = vpop.f32.mrb[0].mxu0
      %v2470 = vadd.f32 %v2290, %v2469
      %v2471 = vpop.f32.mrb[0].mxu0
      %v2472 = vand.u32 %v160, 4294901760
      %v2473 = vsub.f32 %v160, %v2472
      %v2474 = vand.u32 %v2473, 4294901760
      %2475 = vmatprep.mubr.f32.mxu0 %v2474
      %v2476 = vand.u32 %v159, 4294901760
      %v2477 = vsub.f32 %v159, %v2476
      %v2478 = vand.u32 %v2477, 4294901760
      %2479 = vmatmul.mubr.f32.gmra.mrb[0].mxu0 %v2478
      %v2480 = vpop.f32.mrb[0].mxu0
      %v2481 = vadd.f32 %v2299, %v2480
      %v2482 = vpop.f32.mrb[0].mxu0
      %v2483 = vand.u32 %v167, 4294901760
      %v2484 = vsub.f32 %v167, %v2483
      %v2485 = vand.u32 %v2484, 4294901760
      %2486 = vmatprep.mubr.f32.mxu0 %v2485
      %v2487 = vand.u32 %v166, 4294901760
      %v2488 = vsub.f32 %v166, %v2487
      %v2489 = vand.u32 %v2488, 4294901760
      %2490 = vmatmul.mubr.f32.gmra.mrb[0].mxu0 %v2489
      %v2491 = vpop.f32.mrb[0].mxu0
      %v2492 = vadd.f32 %v2308, %v2491
      %v2493 = vpop.f32.mrb[0].mxu0
      %v2494 = vand.u32 %v174, 4294901760
      %v2495 = vsub.f32 %v174, %v2494
      %v2496 = vand.u32 %v2495, 4294901760
      %2497 = vmatprep.mubr.f32.mxu0 %v2496
      %v2498 = vand.u32 %v173, 4294901760
      %v2499 = vsub.f32 %v173, %v2498
      %v2500 = vand.u32 %v2499, 4294901760
      %2501 = vmatmul.mubr.f32.gmra.mrb[0].mxu0 %v2500
      %v2502 = vpop.f32.mrb[0].mxu0
      %v2503 = vadd.f32 %v2317, %v2502
      %v2504 = vpop.f32.mrb[0].mxu0
      %v2505 = vand.u32 %v181, 4294901760
      %v2506 = vsub.f32 %v181, %v2505
      %v2507 = vand.u32 %v2506, 4294901760
      %2508 = vmatprep.mubr.f32.mxu0 %v2507
      %v2509 = vand.u32 %v180, 4294901760
      %v2510 = vsub.f32 %v180, %v2509
      %v2511 = vand.u32 %v2510, 4294901760
      %2512 = vmatmul.mubr.f32.gmra.mrb[0].mxu0 %v2511
      %v2513 = vpop.f32.mrb[0].mxu0
      %v2514 = vadd.f32 %v2326, %v2513
      %v2515 = vpop.f32.mrb[0].mxu0
      %v2516 = vand.u32 %v188, 4294901760
      %v2517 = vsub.f32 %v188, %v2516
      %v2518 = vand.u32 %v2517, 4294901760
      %2519 = vmatprep.mubr.f32.mxu0 %v2518
      %v2520 = vand.u32 %v187, 4294901760
      %v2521 = vsub.f32 %v187, %v2520
      %v2522 = vand.u32 %v2521, 4294901760
      %2523 = vmatmul.mubr.f32.gmra.mrb[0].mxu0 %v2522
      %v2524 = vpop.f32.mrb[0].mxu0
      %v2525 = vadd.f32 %v2335, %v2524
      %v2526 = vpop.f32.mrb[0].mxu0
      %v2527 = vand.u32 %v195, 4294901760
      %v2528 = vsub.f32 %v195, %v2527
      %v2529 = vand.u32 %v2528, 4294901760
      %2530 = vmatprep.mubr.f32.mxu0 %v2529
      %v2531 = vand.u32 %v194, 4294901760
      %v2532 = vsub.f32 %v194, %v2531
      %v2533 = vand.u32 %v2532, 4294901760
      %2534 = vmatmul.mubr.f32.gmra.mrb[0].mxu0 %v2533
      %v2535 = vpop.f32.mrb[0].mxu0
      %v2536 = vadd.f32 %v2344, %v2535
      %v2537 = vpop.f32.mrb[0].mxu0
      %v2538 = vand.u32 %v202, 4294901760
      %v2539 = vsub.f32 %v202, %v2538
      %v2540 = vand.u32 %v2539, 4294901760
      %2541 = vmatprep.mubr.f32.mxu0 %v2540
      %v2542 = vand.u32 %v201, 4294901760
      %v2543 = vsub.f32 %v201, %v2542
      %v2544 = vand.u32 %v2543, 4294901760
      %2545 = vmatmul.mubr.f32.gmra.mrb[0].mxu0 %v2544
      %v2546 = vpop.f32.mrb[0].mxu0
      %v2547 = vadd.f32 %v2353, %v2546
      %v2548 = vpop.f32.mrb[0].mxu0
      %v2549 = vand.u32 %v209, 4294901760
      %v2550 = vsub.f32 %v209, %v2549
      %v2551 = vand.u32 %v2550, 4294901760
      %2552 = vmatprep.mubr.f32.mxu0 %v2551
      %v2553 = vand.u32 %v208, 4294901760
      %v2554 = vsub.f32 %v208, %v2553
      %v2555 = vand.u32 %v2554, 4294901760
      %2556 = vmatmul.mubr.f32.gmra.mrb[0].mxu0 %v2555
      %v2557 = vpop.f32.mrb[0].mxu0
      %v2558 = vadd.f32 %v2362, %v2557
      %v2559 = vpop.f32.mrb[0].mxu0
      %2560 = vdwg.mxu0
      %2561 = vmatprep.subr.mxu0 0.0
      %v2562 = vand.u32 %v245, 4294901760
      %v2563 = vsub.f32 %v245, %v2562
      %v2564 = vand.u32 %v2563, 4294901760
      %2565 = vmatpush1.msra.mxu0 %v2564
      %2566 = vmatprep.subr.mxu0 0.0
      %v2567 = vand.u32 %v246, 4294901760
      %v2568 = vsub.f32 %v246, %v2567
      %v2569 = vand.u32 %v2568, 4294901760
      %2570 = vmatpush1.msra.mxu0 %v2569
      %2571 = vmatprep.subr.mxu0 0.0
      %v2572 = vand.u32 %v247, 4294901760
      %v2573 = vsub.f32 %v247, %v2572
      %v2574 = vand.u32 %v2573, 4294901760
      %2575 = vmatpush1.msra.mxu0 %v2574
      %2576 = vmatprep.subr.mxu0 0.0
      %v2577 = vand.u32 %v248, 4294901760
      %v2578 = vsub.f32 %v248, %v2577
      %v2579 = vand.u32 %v2578, 4294901760
      %2580 = vmatpush1.msra.mxu0 %v2579
      %2581 = vmatprep.subr.mxu0 0.0
      %v2582 = vand.u32 %v249, 4294901760
      %v2583 = vsub.f32 %v249, %v2582
      %v2584 = vand.u32 %v2583, 4294901760
      %2585 = vmatpush1.msra.mxu0 %v2584
      %2586 = vmatprep.subr.mxu0 0.0
      %v2587 = vand.u32 %v250, 4294901760
      %v2588 = vsub.f32 %v250, %v2587
      %v2589 = vand.u32 %v2588, 4294901760
      %2590 = vmatpush1.msra.mxu0 %v2589
      %2591 = vmatprep.subr.mxu0 0.0
      %v2592 = vand.u32 %v251, 4294901760
      %v2593 = vsub.f32 %v251, %v2592
      %v2594 = vand.u32 %v2593, 4294901760
      %2595 = vmatpush1.msra.mxu0 %v2594
      %2596 = vmatprep.subr.mxu0 0.0
      %v2597 = vand.u32 %v252, 4294901760
      %v2598 = vsub.f32 %v252, %v2597
      %v2599 = vand.u32 %v2598, 4294901760
      %2600 = vmatpush1.msra.mxu0 %v2599
      %2601 = vmatprep.subr.mxu0 0.0
      %v2602 = vand.u32 %v253, 4294901760
      %v2603 = vsub.f32 %v253, %v2602
      %v2604 = vand.u32 %v2603, 4294901760
      %2605 = vmatpush1.msra.mxu0 %v2604
      %2606 = vmatprep.subr.mxu0 0.0
      %v2607 = vand.u32 %v254, 4294901760
      %v2608 = vsub.f32 %v254, %v2607
      %v2609 = vand.u32 %v2608, 4294901760
      %2610 = vmatpush1.msra.mxu0 %v2609
      %2611 = vmatprep.subr.mxu0 0.0
      %v2612 = vand.u32 %v255, 4294901760
      %v2613 = vsub.f32 %v255, %v2612
      %v2614 = vand.u32 %v2613, 4294901760
      %2615 = vmatpush1.msra.mxu0 %v2614
      %2616 = vmatprep.subr.mxu0 0.0
      %v2617 = vand.u32 %v256, 4294901760
      %v2618 = vsub.f32 %v256, %v2617
      %v2619 = vand.u32 %v2618, 4294901760
      %2620 = vmatpush1.msra.mxu0 %v2619
      %2621 = vmatprep.subr.mxu0 0.0
      %v2622 = vand.u32 %v257, 4294901760
      %v2623 = vsub.f32 %v257, %v2622
      %v2624 = vand.u32 %v2623, 4294901760
      %2625 = vmatpush1.msra.mxu0 %v2624
      %2626 = vmatprep.subr.mxu0 0.0
      %v2627 = vand.u32 %v258, 4294901760
      %v2628 = vsub.f32 %v258, %v2627
      %v2629 = vand.u32 %v2628, 4294901760
      %2630 = vmatpush1.msra.mxu0 %v2629
      %2631 = vmatprep.subr.mxu0 0.0
      %v2632 = vand.u32 %v259, 4294901760
      %v2633 = vsub.f32 %v259, %v2632
      %v2634 = vand.u32 %v2633, 4294901760
      %2635 = vmatpush1.msra.mxu0 %v2634
      %2636 = vmatprep.subr.mxu0 0.0
      %v2637 = vand.u32 %v260, 4294901760
      %v2638 = vsub.f32 %v260, %v2637
      %v2639 = vand.u32 %v2638, 4294901760
      %2640 = vmatpush1.msra.mxu0 %v2639
      %2641 = vmatprep.subr.mxu0 0.0
      %v2642 = vand.u32 %v261, 4294901760
      %v2643 = vsub.f32 %v261, %v2642
      %v2644 = vand.u32 %v2643, 4294901760
      %2645 = vmatpush1.msra.mxu0 %v2644
      %2646 = vmatprep.subr.mxu0 0.0
      %v2647 = vand.u32 %v262, 4294901760
      %v2648 = vsub.f32 %v262, %v2647
      %v2649 = vand.u32 %v2648, 4294901760
      %2650 = vmatpush1.msra.mxu0 %v2649
      %2651 = vmatprep.subr.mxu0 0.0
      %v2652 = vand.u32 %v263, 4294901760
      %v2653 = vsub.f32 %v263, %v2652
      %v2654 = vand.u32 %v2653, 4294901760
      %2655 = vmatpush1.msra.mxu0 %v2654
      %2656 = vmatprep.subr.mxu0 0.0
      %v2657 = vand.u32 %v264, 4294901760
      %v2658 = vsub.f32 %v264, %v2657
      %v2659 = vand.u32 %v2658, 4294901760
      %2660 = vmatpush1.msra.mxu0 %v2659
      %2661 = vmatprep.subr.mxu0 0.0
      %v2662 = vand.u32 %v265, 4294901760
      %v2663 = vsub.f32 %v265, %v2662
      %v2664 = vand.u32 %v2663, 4294901760
      %2665 = vmatpush1.msra.mxu0 %v2664
      %2666 = vmatprep.subr.mxu0 0.0
      %v2667 = vand.u32 %v266, 4294901760
      %v2668 = vsub.f32 %v266, %v2667
      %v2669 = vand.u32 %v2668, 4294901760
      %2670 = vmatpush1.msra.mxu0 %v2669
      %2671 = vmatprep.subr.mxu0 0.0
      %v2672 = vand.u32 %v267, 4294901760
      %v2673 = vsub.f32 %v267, %v2672
      %v2674 = vand.u32 %v2673, 4294901760
      %2675 = vmatpush1.msra.mxu0 %v2674
      %2676 = vmatprep.subr.mxu0 0.0
      %v2677 = vand.u32 %v268, 4294901760
      %v2678 = vsub.f32 %v268, %v2677
      %v2679 = vand.u32 %v2678, 4294901760
      %2680 = vmatpush1.msra.mxu0 %v2679
      %2681 = vmatprep.subr.mxu0 0.0
      %v2682 = vand.u32 %v269, 4294901760
      %v2683 = vsub.f32 %v269, %v2682
      %v2684 = vand.u32 %v2683, 4294901760
      %2685 = vmatpush1.msra.mxu0 %v2684
      %2686 = vmatprep.subr.mxu0 0.0
      %v2687 = vand.u32 %v270, 4294901760
      %v2688 = vsub.f32 %v270, %v2687
      %v2689 = vand.u32 %v2688, 4294901760
      %2690 = vmatpush1.msra.mxu0 %v2689
      %2691 = vmatprep.subr.mxu0 0.0
      %v2692 = vand.u32 %v271, 4294901760
      %v2693 = vsub.f32 %v271, %v2692
      %v2694 = vand.u32 %v2693, 4294901760
      %2695 = vmatpush1.msra.mxu0 %v2694
      %2696 = vmatprep.subr.mxu0 0.0
      %v2697 = vand.u32 %v272, 4294901760
      %v2698 = vsub.f32 %v272, %v2697
      %v2699 = vand.u32 %v2698, 4294901760
      %2700 = vmatpush1.msra.mxu0 %v2699
      %2701 = vmatprep.subr.mxu0 0.0
      %v2702 = vand.u32 %v273, 4294901760
      %v2703 = vsub.f32 %v273, %v2702
      %v2704 = vand.u32 %v2703, 4294901760
      %2705 = vmatpush1.msra.mxu0 %v2704
      %2706 = vmatprep.subr.mxu0 0.0
      %v2707 = vand.u32 %v274, 4294901760
      %v2708 = vsub.f32 %v274, %v2707
      %v2709 = vand.u32 %v2708, 4294901760
      %2710 = vmatpush1.msra.mxu0 %v2709
      %2711 = vmatprep.subr.mxu0 0.0
      %v2712 = vand.u32 %v275, 4294901760
      %v2713 = vsub.f32 %v275, %v2712
      %v2714 = vand.u32 %v2713, 4294901760
      %2715 = vmatpush1.msra.mxu0 %v2714
      %2716 = vmatprep.subr.mxu0 0.0
      %v2717 = vand.u32 %v276, 4294901760
      %v2718 = vsub.f32 %v276, %v2717
      %v2719 = vand.u32 %v2718, 4294901760
      %2720 = vmatpush1.msra.mxu0 %v2719
      %v2721 = vand.u32 %v153, 4294901760
      %2722 = vmatprep.mubr.f32.mxu0 %v2721
      %v2723 = vand.u32 %v152, 4294901760
      %2724 = vmatmul.mubr.f32.gmra.mrb[0].mxu0 %v2723
      %v2725 = vpop.f32.mrb[0].mxu0
      %v2726 = vadd.f32 %v2470, %v2725
      %v2727 = vpop.f32.mrb[0].mxu0
      %v2728 = vand.u32 %v160, 4294901760
      %2729 = vmatprep.mubr.f32.mxu0 %v2728
      %v2730 = vand.u32 %v159, 4294901760
      %2731 = vmatmul.mubr.f32.gmra.mrb[0].mxu0 %v2730
      %v2732 = vpop.f32.mrb[0].mxu0
      %v2733 = vadd.f32 %v2481, %v2732
      %v2734 = vpop.f32.mrb[0].mxu0
      %v2735 = vand.u32 %v167, 4294901760
      %2736 = vmatprep.mubr.f32.mxu0 %v2735
      %v2737 = vand.u32 %v166, 4294901760
      %2738 = vmatmul.mubr.f32.gmra.mrb[0].mxu0 %v2737
      %v2739 = vpop.f32.mrb[0].mxu0
      %v2740 = vadd.f32 %v2492, %v2739
      %v2741 = vpop.f32.mrb[0].mxu0
      %v2742 = vand.u32 %v174, 4294901760
      %2743 = vmatprep.mubr.f32.mxu0 %v2742
      %v2744 = vand.u32 %v173, 4294901760
      %2745 = vmatmul.mubr.f32.gmra.mrb[0].mxu0 %v2744
      %v2746 = vpop.f32.mrb[0].mxu0
      %v2747 = vadd.f32 %v2503, %v2746
      %v2748 = vpop.f32.mrb[0].mxu0
      %v2749 = vand.u32 %v181, 4294901760
      %2750 = vmatprep.mubr.f32.mxu0 %v2749
      %v2751 = vand.u32 %v180, 4294901760
      %2752 = vmatmul.mubr.f32.gmra.mrb[0].mxu0 %v2751
      %v2753 = vpop.f32.mrb[0].mxu0
      %v2754 = vadd.f32 %v2514, %v2753
      %v2755 = vpop.f32.mrb[0].mxu0
      %v2756 = vand.u32 %v188, 4294901760
      %2757 = vmatprep.mubr.f32.mxu0 %v2756
      %v2758 = vand.u32 %v187, 4294901760
      %2759 = vmatmul.mubr.f32.gmra.mrb[0].mxu0 %v2758
      %v2760 = vpop.f32.mrb[0].mxu0
      %v2761 = vadd.f32 %v2525, %v2760
      %v2762 = vpop.f32.mrb[0].mxu0
      %v2763 = vand.u32 %v195, 4294901760
      %2764 = vmatprep.mubr.f32.mxu0 %v2763
      %v2765 = vand.u32 %v194, 4294901760
      %2766 = vmatmul.mubr.f32.gmra.mrb[0].mxu0 %v2765
      %v2767 = vpop.f32.mrb[0].mxu0
      %v2768 = vadd.f32 %v2536, %v2767
      %v2769 = vpop.f32.mrb[0].mxu0
      %v2770 = vand.u32 %v202, 4294901760
      %2771 = vmatprep.mubr.f32.mxu0 %v2770
      %v2772 = vand.u32 %v201, 4294901760
      %2773 = vmatmul.mubr.f32.gmra.mrb[0].mxu0 %v2772
      %v2774 = vpop.f32.mrb[0].mxu0
      %v2775 = vadd.f32 %v2547, %v2774
      %v2776 = vpop.f32.mrb[0].mxu0
      %v2777 = vand.u32 %v209, 4294901760
      %2778 = vmatprep.mubr.f32.mxu0 %v2777
      %v2779 = vand.u32 %v208, 4294901760
      %2780 = vmatmul.mubr.f32.gmra.mrb[0].mxu0 %v2779
      %v2781 = vpop.f32.mrb[0].mxu0
      %v2782 = vadd.f32 %v2558, %v2781
      %v2783 = vpop.f32.mrb[0].mxu0
      %2784 = vdwg.mxu0
      %2785 = vmatprep.subr.mxu0 0.0
      %v2786 = vand.u32 %v245, 4294901760
      %2787 = vmatpush1.msra.mxu0 %v2786
      %2788 = vmatprep.subr.mxu0 0.0
      %v2789 = vand.u32 %v246, 4294901760
      %2790 = vmatpush1.msra.mxu0 %v2789
      %2791 = vmatprep.subr.mxu0 0.0
      %v2792 = vand.u32 %v247, 4294901760
      %2793 = vmatpush1.msra.mxu0 %v2792
      %2794 = vmatprep.subr.mxu0 0.0
      %v2795 = vand.u32 %v248, 4294901760
      %2796 = vmatpush1.msra.mxu0 %v2795
      %2797 = vmatprep.subr.mxu0 0.0
      %v2798 = vand.u32 %v249, 4294901760
      %2799 = vmatpush1.msra.mxu0 %v2798
      %2800 = vmatprep.subr.mxu0 0.0
      %v2801 = vand.u32 %v250, 4294901760
      %2802 = vmatpush1.msra.mxu0 %v2801
      %2803 = vmatprep.subr.mxu0 0.0
      %v2804 = vand.u32 %v251, 4294901760
      %2805 = vmatpush1.msra.mxu0 %v2804
      %2806 = vmatprep.subr.mxu0 0.0
      %v2807 = vand.u32 %v252, 4294901760
      %2808 = vmatpush1.msra.mxu0 %v2807
      %2809 = vmatprep.subr.mxu0 0.0
      %v2810 = vand.u32 %v253, 4294901760
      %2811 = vmatpush1.msra.mxu0 %v2810
      %2812 = vmatprep.subr.mxu0 0.0
      %v2813 = vand.u32 %v254, 4294901760
      %2814 = vmatpush1.msra.mxu0 %v2813
      %2815 = vmatprep.subr.mxu0 0.0
      %v2816 = vand.u32 %v255, 4294901760
      %2817 = vmatpush1.msra.mxu0 %v2816
      %2818 = vmatprep.subr.mxu0 0.0
      %v2819 = vand.u32 %v256, 4294901760
      %2820 = vmatpush1.msra.mxu0 %v2819
      %2821 = vmatprep.subr.mxu0 0.0
      %v2822 = vand.u32 %v257, 4294901760
      %2823 = vmatpush1.msra.mxu0 %v2822
      %2824 = vmatprep.subr.mxu0 0.0
      %v2825 = vand.u32 %v258, 4294901760
      %2826 = vmatpush1.msra.mxu0 %v2825
      %2827 = vmatprep.subr.mxu0 0.0
      %v2828 = vand.u32 %v259, 4294901760
      %2829 = vmatpush1.msra.mxu0 %v2828
      %2830 = vmatprep.subr.mxu0 0.0
      %v2831 = vand.u32 %v260, 4294901760
      %2832 = vmatpush1.msra.mxu0 %v2831
      %2833 = vmatprep.subr.mxu0 0.0
      %v2834 = vand.u32 %v261, 4294901760
      %2835 = vmatpush1.msra.mxu0 %v2834
      %2836 = vmatprep.subr.mxu0 0.0
      %v2837 = vand.u32 %v262, 4294901760
      %2838 = vmatpush1.msra.mxu0 %v2837
      %2839 = vmatprep.subr.mxu0 0.0
      %v2840 = vand.u32 %v263, 4294901760
      %2841 = vmatpush1.msra.mxu0 %v2840
      %2842 = vmatprep.subr.mxu0 0.0
      %v2843 = vand.u32 %v264, 4294901760
      %2844 = vmatpush1.msra.mxu0 %v2843
      %2845 = vmatprep.subr.mxu0 0.0
      %v2846 = vand.u32 %v265, 4294901760
      %2847 = vmatpush1.msra.mxu0 %v2846
      %2848 = vmatprep.subr.mxu0 0.0
      %v2849 = vand.u32 %v266, 4294901760
      %2850 = vmatpush1.msra.mxu0 %v2849
      %2851 = vmatprep.subr.mxu0 0.0
      %v2852 = vand.u32 %v267, 4294901760
      %2853 = vmatpush1.msra.mxu0 %v2852
      %2854 = vmatprep.subr.mxu0 0.0
      %v2855 = vand.u32 %v268, 4294901760
      %2856 = vmatpush1.msra.mxu0 %v2855
      %2857 = vmatprep.subr.mxu0 0.0
      %v2858 = vand.u32 %v269, 4294901760
      %2859 = vmatpush1.msra.mxu0 %v2858
      %2860 = vmatprep.subr.mxu0 0.0
      %v2861 = vand.u32 %v270, 4294901760
      %2862 = vmatpush1.msra.mxu0 %v2861
      %2863 = vmatprep.subr.mxu0 0.0
      %v2864 = vand.u32 %v271, 4294901760
      %2865 = vmatpush1.msra.mxu0 %v2864
      %2866 = vmatprep.subr.mxu0 0.0
      %v2867 = vand.u32 %v272, 4294901760
      %2868 = vmatpush1.msra.mxu0 %v2867
      %2869 = vmatprep.subr.mxu0 0.0
      %v2870 = vand.u32 %v273, 4294901760
      %2871 = vmatpush1.msra.mxu0 %v2870
      %2872 = vmatprep.subr.mxu0 0.0
      %v2873 = vand.u32 %v274, 4294901760
      %2874 = vmatpush1.msra.mxu0 %v2873
      %2875 = vmatprep.subr.mxu0 0.0
      %v2876 = vand.u32 %v275, 4294901760
      %2877 = vmatpush1.msra.mxu0 %v2876
      %2878 = vmatprep.subr.mxu0 0.0
      %v2879 = vand.u32 %v276, 4294901760
      %2880 = vmatpush1.msra.mxu0 %v2879
      %v2881 = vand.u32 %v153, 4294901760
      %2882 = vmatprep.mubr.f32.mxu0 %v2881
      %v2883 = vand.u32 %v152, 4294901760
      %2884 = vmatmul.mubr.f32.gmra.mrb[0].mxu0 %v2883
      %v2885 = vpop.f32.mrb[0].mxu0
      %v2886 = vadd.f32 %v2726, %v2885
      %v2887 = vpop.f32.mrb[0].mxu0
      %v2888 = vand.u32 %v160, 4294901760
      %2889 = vmatprep.mubr.f32.mxu0 %v2888
      %v2890 = vand.u32 %v159, 4294901760
      %2891 = vmatmul.mubr.f32.gmra.mrb[0].mxu0 %v2890
      %v2892 = vpop.f32.mrb[0].mxu0
      %v2893 = vadd.f32 %v2733, %v2892
      %v2894 = vpop.f32.mrb[0].mxu0
      %v2895 = vand.u32 %v167, 4294901760
      %2896 = vmatprep.mubr.f32.mxu0 %v2895
      %v2897 = vand.u32 %v166, 4294901760
      %2898 = vmatmul.mubr.f32.gmra.mrb[0].mxu0 %v2897
      %v2899 = vpop.f32.mrb[0].mxu0
      %v2900 = vadd.f32 %v2740, %v2899
      %v2901 = vpop.f32.mrb[0].mxu0
      %v2902 = vand.u32 %v174, 4294901760
      %2903 = vmatprep.mubr.f32.mxu0 %v2902
      %v2904 = vand.u32 %v173, 4294901760
      %2905 = vmatmul.mubr.f32.gmra.mrb[0].mxu0 %v2904
      %v2906 = vpop.f32.mrb[0].mxu0
      %v2907 = vadd.f32 %v2747, %v2906
      %v2908 = vpop.f32.mrb[0].mxu0
      %v2909 = vand.u32 %v181, 4294901760
      %2910 = vmatprep.mubr.f32.mxu0 %v2909
      %v2911 = vand.u32 %v180, 4294901760
      %2912 = vmatmul.mubr.f32.gmra.mrb[0].mxu0 %v2911
      %v2913 = vpop.f32.mrb[0].mxu0
      %v2914 = vadd.f32 %v2754, %v2913
      %v2915 = vpop.f32.mrb[0].mxu0
      %v2916 = vand.u32 %v188, 4294901760
      %2917 = vmatprep.mubr.f32.mxu0 %v2916
      %v2918 = vand.u32 %v187, 4294901760
      %2919 = vmatmul.mubr.f32.gmra.mrb[0].mxu0 %v2918
      %v2920 = vpop.f32.mrb[0].mxu0
      %v2921 = vadd.f32 %v2761, %v2920
      %v2922 = vpop.f32.mrb[0].mxu0
      %v2923 = vand.u32 %v195, 4294901760
      %2924 = vmatprep.mubr.f32.mxu0 %v2923
      %v2925 = vand.u32 %v194, 4294901760
      %2926 = vmatmul.mubr.f32.gmra.mrb[0].mxu0 %v2925
      %v2927 = vpop.f32.mrb[0].mxu0
      %v2928 = vadd.f32 %v2768, %v2927
      %v2929 = vpop.f32.mrb[0].mxu0
      %v2930 = vand.u32 %v202, 4294901760
      %2931 = vmatprep.mubr.f32.mxu0 %v2930
      %v2932 = vand.u32 %v201, 4294901760
      %2933 = vmatmul.mubr.f32.gmra.mrb[0].mxu0 %v2932
      %v2934 = vpop.f32.mrb[0].mxu0
      %v2935 = vadd.f32 %v2775, %v2934
      %v2936 = vpop.f32.mrb[0].mxu0
      %v2937 = vand.u32 %v209, 4294901760
      %2938 = vmatprep.mubr.f32.mxu0 %v2937
      %v2939 = vand.u32 %v208, 4294901760
      %2940 = vmatmul.mubr.f32.gmra.mrb[0].mxu0 %v2939
      %v2941 = vpop.f32.mrb[0].mxu0
      %v2942 = vadd.f32 %v2782, %v2941
      %v2943 = vpop.f32.mrb[0].mxu0
      %2944 = vdwg.mxu0
      %2945 = vmatprep.subr.mxu0 0.0
      %v2946 = vand.u32 %v277, 4294901760
      %2947 = vmatpush1.msra.mxu0 %v2946
      %2948 = vmatprep.subr.mxu0 0.0
      %v2949 = vand.u32 %v278, 4294901760
      %2950 = vmatpush1.msra.mxu0 %v2949
      %2951 = vmatprep.subr.mxu0 0.0
      %v2952 = vand.u32 %v279, 4294901760
      %2953 = vmatpush1.msra.mxu0 %v2952
      %2954 = vmatprep.subr.mxu0 0.0
      %v2955 = vand.u32 %v280, 4294901760
      %2956 = vmatpush1.msra.mxu0 %v2955
      %2957 = vmatprep.subr.mxu0 0.0
      %v2958 = vand.u32 %v281, 4294901760
      %2959 = vmatpush1.msra.mxu0 %v2958
      %2960 = vmatprep.subr.mxu0 0.0
      %v2961 = vand.u32 %v282, 4294901760
      %2962 = vmatpush1.msra.mxu0 %v2961
      %2963 = vmatprep.subr.mxu0 0.0
      %v2964 = vand.u32 %v283, 4294901760
      %2965 = vmatpush1.msra.mxu0 %v2964
      %2966 = vmatprep.subr.mxu0 0.0
      %v2967 = vand.u32 %v284, 4294901760
      %2968 = vmatpush1.msra.mxu0 %v2967
      %2969 = vmatprep.subr.mxu0 0.0
      %v2970 = vand.u32 %v285, 4294901760
      %2971 = vmatpush1.msra.mxu0 %v2970
      %2972 = vmatprep.subr.mxu0 0.0
      %v2973 = vand.u32 %v286, 4294901760
      %2974 = vmatpush1.msra.mxu0 %v2973
      %2975 = vmatprep.subr.mxu0 0.0
      %v2976 = vand.u32 %v287, 4294901760
      %2977 = vmatpush1.msra.mxu0 %v2976
      %2978 = vmatprep.subr.mxu0 0.0
      %v2979 = vand.u32 %v288, 4294901760
      %2980 = vmatpush1.msra.mxu0 %v2979
      %2981 = vmatprep.subr.mxu0 0.0
      %v2982 = vand.u32 %v289, 4294901760
      %2983 = vmatpush1.msra.mxu0 %v2982
      %2984 = vmatprep.subr.mxu0 0.0
      %v2985 = vand.u32 %v290, 4294901760
      %2986 = vmatpush1.msra.mxu0 %v2985
      %2987 = vmatprep.subr.mxu0 0.0
      %v2988 = vand.u32 %v291, 4294901760
      %2989 = vmatpush1.msra.mxu0 %v2988
      %2990 = vmatprep.subr.mxu0 0.0
      %v2991 = vand.u32 %v292, 4294901760
      %2992 = vmatpush1.msra.mxu0 %v2991
      %2993 = vmatprep.subr.mxu0 0.0
      %v2994 = vand.u32 %v293, 4294901760
      %2995 = vmatpush1.msra.mxu0 %v2994
      %2996 = vmatprep.subr.mxu0 0.0
      %v2997 = vand.u32 %v294, 4294901760
      %2998 = vmatpush1.msra.mxu0 %v2997
      %2999 = vmatprep.subr.mxu0 0.0
      %v3000 = vand.u32 %v295, 4294901760
      %3001 = vmatpush1.msra.mxu0 %v3000
      %3002 = vmatprep.subr.mxu0 0.0
      %v3003 = vand.u32 %v296, 4294901760
      %3004 = vmatpush1.msra.mxu0 %v3003
      %3005 = vmatprep.subr.mxu0 0.0
      %v3006 = vand.u32 %v297, 4294901760
      %3007 = vmatpush1.msra.mxu0 %v3006
      %3008 = vmatprep.subr.mxu0 0.0
      %v3009 = vand.u32 %v298, 4294901760
      %3010 = vmatpush1.msra.mxu0 %v3009
      %3011 = vmatprep.subr.mxu0 0.0
      %v3012 = vand.u32 %v299, 4294901760
      %3013 = vmatpush1.msra.mxu0 %v3012
      %3014 = vmatprep.subr.mxu0 0.0
      %v3015 = vand.u32 %v300, 4294901760
      %3016 = vmatpush1.msra.mxu0 %v3015
      %3017 = vmatprep.subr.mxu0 0.0
      %v3018 = vand.u32 %v301, 4294901760
      %3019 = vmatpush1.msra.mxu0 %v3018
      %3020 = vmatprep.subr.mxu0 0.0
      %v3021 = vand.u32 %v302, 4294901760
      %3022 = vmatpush1.msra.mxu0 %v3021
      %3023 = vmatprep.subr.mxu0 0.0
      %v3024 = vand.u32 %v303, 4294901760
      %3025 = vmatpush1.msra.mxu0 %v3024
      %3026 = vmatprep.subr.mxu0 0.0
      %v3027 = vand.u32 %v304, 4294901760
      %3028 = vmatpush1.msra.mxu0 %v3027
      %3029 = vmatprep.subr.mxu0 0.0
      %v3030 = vand.u32 %v305, 4294901760
      %3031 = vmatpush1.msra.mxu0 %v3030
      %3032 = vmatprep.subr.mxu0 0.0
      %v3033 = vand.u32 %v306, 4294901760
      %3034 = vmatpush1.msra.mxu0 %v3033
      %3035 = vmatprep.subr.mxu0 0.0
      %v3036 = vand.u32 %v307, 4294901760
      %3037 = vmatpush1.msra.mxu0 %v3036
      %3038 = vmatprep.subr.mxu0 0.0
      %v3039 = vand.u32 %v308, 4294901760
      %3040 = vmatpush1.msra.mxu0 %v3039
      %v3041 = vand.u32 %v155, 4294901760
      %v3042 = vsub.f32 %v155, %v3041
      %v3043 = vand.u32 %v3042, 4294901760
      %v3044 = vsub.f32 %v3042, %v3043
      %v3045 = vand.u32 %v3044, 4294901760
      %3046 = vmatprep.mubr.f32.mxu0 %v3045
      %v3047 = vand.u32 %v154, 4294901760
      %v3048 = vsub.f32 %v154, %v3047
      %v3049 = vand.u32 %v3048, 4294901760
      %v3050 = vsub.f32 %v3048, %v3049
      %v3051 = vand.u32 %v3050, 4294901760
      %3052 = vmatmul.mubr.f32.gmra.mrb[0].mxu0 %v3051
      %v3053 = vpop.f32.mrb[0].mxu0
      %v3054 = vadd.f32 %v2886, %v3053
      %v3055 = vpop.f32.mrb[0].mxu0
      %v3056 = vand.u32 %v162, 4294901760
      %v3057 = vsub.f32 %v162, %v3056
      %v3058 = vand.u32 %v3057, 4294901760
      %v3059 = vsub.f32 %v3057, %v3058
      %v3060 = vand.u32 %v3059, 4294901760
      %3061 = vmatprep.mubr.f32.mxu0 %v3060
      %v3062 = vand.u32 %v161, 4294901760
      %v3063 = vsub.f32 %v161, %v3062
      %v3064 = vand.u32 %v3063, 4294901760
      %v3065 = vsub.f32 %v3063, %v3064
      %v3066 = vand.u32 %v3065, 4294901760
      %3067 = vmatmul.mubr.f32.gmra.mrb[0].mxu0 %v3066
      %v3068 = vpop.f32.mrb[0].mxu0
      %v3069 = vadd.f32 %v2893, %v3068
      %v3070 = vpop.f32.mrb[0].mxu0
      %v3071 = vand.u32 %v169, 4294901760
      %v3072 = vsub.f32 %v169, %v3071
      %v3073 = vand.u32 %v3072, 4294901760
      %v3074 = vsub.f32 %v3072, %v3073
      %v3075 = vand.u32 %v3074, 4294901760
      %3076 = vmatprep.mubr.f32.mxu0 %v3075
      %v3077 = vand.u32 %v168, 4294901760
      %v3078 = vsub.f32 %v168, %v3077
      %v3079 = vand.u32 %v3078, 4294901760
      %v3080 = vsub.f32 %v3078, %v3079
      %v3081 = vand.u32 %v3080, 4294901760
      %3082 = vmatmul.mubr.f32.gmra.mrb[0].mxu0 %v3081
      %v3083 = vpop.f32.mrb[0].mxu0
      %v3084 = vadd.f32 %v2900, %v3083
      %v3085 = vpop.f32.mrb[0].mxu0
      %v3086 = vand.u32 %v176, 4294901760
      %v3087 = vsub.f32 %v176, %v3086
      %v3088 = vand.u32 %v3087, 4294901760
      %v3089 = vsub.f32 %v3087, %v3088
      %v3090 = vand.u32 %v3089, 4294901760
      %3091 = vmatprep.mubr.f32.mxu0 %v3090
      %v3092 = vand.u32 %v175, 4294901760
      %v3093 = vsub.f32 %v175, %v3092
      %v3094 = vand.u32 %v3093, 4294901760
      %v3095 = vsub.f32 %v3093, %v3094
      %v3096 = vand.u32 %v3095, 4294901760
      %3097 = vmatmul.mubr.f32.gmra.mrb[0].mxu0 %v3096
      %v3098 = vpop.f32.mrb[0].mxu0
      %v3099 = vadd.f32 %v2907, %v3098
      %v3100 = vpop.f32.mrb[0].mxu0
      %v3101 = vand.u32 %v183, 4294901760
      %v3102 = vsub.f32 %v183, %v3101
      %v3103 = vand.u32 %v3102, 4294901760
      %v3104 = vsub.f32 %v3102, %v3103
      %v3105 = vand.u32 %v3104, 4294901760
      %3106 = vmatprep.mubr.f32.mxu0 %v3105
      %v3107 = vand.u32 %v182, 4294901760
      %v3108 = vsub.f32 %v182, %v3107
      %v3109 = vand.u32 %v3108, 4294901760
      %v3110 = vsub.f32 %v3108, %v3109
      %v3111 = vand.u32 %v3110, 4294901760
      %3112 = vmatmul.mubr.f32.gmra.mrb[0].mxu0 %v3111
      %v3113 = vpop.f32.mrb[0].mxu0
      %v3114 = vadd.f32 %v2914, %v3113
      %v3115 = vpop.f32.mrb[0].mxu0
      %v3116 = vand.u32 %v190, 4294901760
      %v3117 = vsub.f32 %v190, %v3116
      %v3118 = vand.u32 %v3117, 4294901760
      %v3119 = vsub.f32 %v3117, %v3118
      %v3120 = vand.u32 %v3119, 4294901760
      %3121 = vmatprep.mubr.f32.mxu0 %v3120
      %v3122 = vand.u32 %v189, 4294901760
      %v3123 = vsub.f32 %v189, %v3122
      %v3124 = vand.u32 %v3123, 4294901760
      %v3125 = vsub.f32 %v3123, %v3124
      %v3126 = vand.u32 %v3125, 4294901760
      %3127 = vmatmul.mubr.f32.gmra.mrb[0].mxu0 %v3126
      %v3128 = vpop.f32.mrb[0].mxu0
      %v3129 = vadd.f32 %v2921, %v3128
      %v3130 = vpop.f32.mrb[0].mxu0
      %v3131 = vand.u32 %v197, 4294901760
      %v3132 = vsub.f32 %v197, %v3131
      %v3133 = vand.u32 %v3132, 4294901760
      %v3134 = vsub.f32 %v3132, %v3133
      %v3135 = vand.u32 %v3134, 4294901760
      %3136 = vmatprep.mubr.f32.mxu0 %v3135
      %v3137 = vand.u32 %v196, 4294901760
      %v3138 = vsub.f32 %v196, %v3137
      %v3139 = vand.u32 %v3138, 4294901760
      %v3140 = vsub.f32 %v3138, %v3139
      %v3141 = vand.u32 %v3140, 4294901760
      %3142 = vmatmul.mubr.f32.gmra.mrb[0].mxu0 %v3141
      %v3143 = vpop.f32.mrb[0].mxu0
      %v3144 = vadd.f32 %v2928, %v3143
      %v3145 = vpop.f32.mrb[0].mxu0
      %v3146 = vand.u32 %v204, 4294901760
      %v3147 = vsub.f32 %v204, %v3146
      %v3148 = vand.u32 %v3147, 4294901760
      %v3149 = vsub.f32 %v3147, %v3148
      %v3150 = vand.u32 %v3149, 4294901760
      %3151 = vmatprep.mubr.f32.mxu0 %v3150
      %v3152 = vand.u32 %v203, 4294901760
      %v3153 = vsub.f32 %v203, %v3152
      %v3154 = vand.u32 %v3153, 4294901760
      %v3155 = vsub.f32 %v3153, %v3154
      %v3156 = vand.u32 %v3155, 4294901760
      %3157 = vmatmul.mubr.f32.gmra.mrb[0].mxu0 %v3156
      %v3158 = vpop.f32.mrb[0].mxu0
      %v3159 = vadd.f32 %v2935, %v3158
      %v3160 = vpop.f32.mrb[0].mxu0
      %v3161 = vand.u32 %v211, 4294901760
      %v3162 = vsub.f32 %v211, %v3161
      %v3163 = vand.u32 %v3162, 4294901760
      %v3164 = vsub.f32 %v3162, %v3163
      %v3165 = vand.u32 %v3164, 4294901760
      %3166 = vmatprep.mubr.f32.mxu0 %v3165
      %v3167 = vand.u32 %v210, 4294901760
      %v3168 = vsub.f32 %v210, %v3167
      %v3169 = vand.u32 %v3168, 4294901760
      %v3170 = vsub.f32 %v3168, %v3169
      %v3171 = vand.u32 %v3170, 4294901760
      %3172 = vmatmul.mubr.f32.gmra.mrb[0].mxu0 %v3171
      %v3173 = vpop.f32.mrb[0].mxu0
      %v3174 = vadd.f32 %v2942, %v3173
      %v3175 = vpop.f32.mrb[0].mxu0
      %3176 = vdwg.mxu0
      %3177 = vmatprep.subr.mxu0 0.0
      %v3178 = vand.u32 %v277, 4294901760
      %v3179 = vsub.f32 %v277, %v3178
      %v3180 = vand.u32 %v3179, 4294901760
      %v3181 = vsub.f32 %v3179, %v3180
      %v3182 = vand.u32 %v3181, 4294901760
      %3183 = vmatpush1.msra.mxu0 %v3182
      %3184 = vmatprep.subr.mxu0 0.0
      %v3185 = vand.u32 %v278, 4294901760
      %v3186 = vsub.f32 %v278, %v3185
      %v3187 = vand.u32 %v3186, 4294901760
      %v3188 = vsub.f32 %v3186, %v3187
      %v3189 = vand.u32 %v3188, 4294901760
      %3190 = vmatpush1.msra.mxu0 %v3189
      %3191 = vmatprep.subr.mxu0 0.0
      %v3192 = vand.u32 %v279, 4294901760
      %v3193 = vsub.f32 %v279, %v3192
      %v3194 = vand.u32 %v3193, 4294901760
      %v3195 = vsub.f32 %v3193, %v3194
      %v3196 = vand.u32 %v3195, 4294901760
      %3197 = vmatpush1.msra.mxu0 %v3196
      %3198 = vmatprep.subr.mxu0 0.0
      %v3199 = vand.u32 %v280, 4294901760
      %v3200 = vsub.f32 %v280, %v3199
      %v3201 = vand.u32 %v3200, 4294901760
      %v3202 = vsub.f32 %v3200, %v3201
      %v3203 = vand.u32 %v3202, 4294901760
      %3204 = vmatpush1.msra.mxu0 %v3203
      %3205 = vmatprep.subr.mxu0 0.0
      %v3206 = vand.u32 %v281, 4294901760
      %v3207 = vsub.f32 %v281, %v3206
      %v3208 = vand.u32 %v3207, 4294901760
      %v3209 = vsub.f32 %v3207, %v3208
      %v3210 = vand.u32 %v3209, 4294901760
      %3211 = vmatpush1.msra.mxu0 %v3210
      %3212 = vmatprep.subr.mxu0 0.0
      %v3213 = vand.u32 %v282, 4294901760
      %v3214 = vsub.f32 %v282, %v3213
      %v3215 = vand.u32 %v3214, 4294901760
      %v3216 = vsub.f32 %v3214, %v3215
      %v3217 = vand.u32 %v3216, 4294901760
      %3218 = vmatpush1.msra.mxu0 %v3217
      %3219 = vmatprep.subr.mxu0 0.0
      %v3220 = vand.u32 %v283, 4294901760
      %v3221 = vsub.f32 %v283, %v3220
      %v3222 = vand.u32 %v3221, 4294901760
      %v3223 = vsub.f32 %v3221, %v3222
      %v3224 = vand.u32 %v3223, 4294901760
      %3225 = vmatpush1.msra.mxu0 %v3224
      %3226 = vmatprep.subr.mxu0 0.0
      %v3227 = vand.u32 %v284, 4294901760
      %v3228 = vsub.f32 %v284, %v3227
      %v3229 = vand.u32 %v3228, 4294901760
      %v3230 = vsub.f32 %v3228, %v3229
      %v3231 = vand.u32 %v3230, 4294901760
      %3232 = vmatpush1.msra.mxu0 %v3231
      %3233 = vmatprep.subr.mxu0 0.0
      %v3234 = vand.u32 %v285, 4294901760
      %v3235 = vsub.f32 %v285, %v3234
      %v3236 = vand.u32 %v3235, 4294901760
      %v3237 = vsub.f32 %v3235, %v3236
      %v3238 = vand.u32 %v3237, 4294901760
      %3239 = vmatpush1.msra.mxu0 %v3238
      %3240 = vmatprep.subr.mxu0 0.0
      %v3241 = vand.u32 %v286, 4294901760
      %v3242 = vsub.f32 %v286, %v3241
      %v3243 = vand.u32 %v3242, 4294901760
      %v3244 = vsub.f32 %v3242, %v3243
      %v3245 = vand.u32 %v3244, 4294901760
      %3246 = vmatpush1.msra.mxu0 %v3245
      %3247 = vmatprep.subr.mxu0 0.0
      %v3248 = vand.u32 %v287, 4294901760
      %v3249 = vsub.f32 %v287, %v3248
      %v3250 = vand.u32 %v3249, 4294901760
      %v3251 = vsub.f32 %v3249, %v3250
      %v3252 = vand.u32 %v3251, 4294901760
      %3253 = vmatpush1.msra.mxu0 %v3252
      %3254 = vmatprep.subr.mxu0 0.0
      %v3255 = vand.u32 %v288, 4294901760
      %v3256 = vsub.f32 %v288, %v3255
      %v3257 = vand.u32 %v3256, 4294901760
      %v3258 = vsub.f32 %v3256, %v3257
      %v3259 = vand.u32 %v3258, 4294901760
      %3260 = vmatpush1.msra.mxu0 %v3259
      %3261 = vmatprep.subr.mxu0 0.0
      %v3262 = vand.u32 %v289, 4294901760
      %v3263 = vsub.f32 %v289, %v3262
      %v3264 = vand.u32 %v3263, 4294901760
      %v3265 = vsub.f32 %v3263, %v3264
      %v3266 = vand.u32 %v3265, 4294901760
      %3267 = vmatpush1.msra.mxu0 %v3266
      %3268 = vmatprep.subr.mxu0 0.0
      %v3269 = vand.u32 %v290, 4294901760
      %v3270 = vsub.f32 %v290, %v3269
      %v3271 = vand.u32 %v3270, 4294901760
      %v3272 = vsub.f32 %v3270, %v3271
      %v3273 = vand.u32 %v3272, 4294901760
      %3274 = vmatpush1.msra.mxu0 %v3273
      %3275 = vmatprep.subr.mxu0 0.0
      %v3276 = vand.u32 %v291, 4294901760
      %v3277 = vsub.f32 %v291, %v3276
      %v3278 = vand.u32 %v3277, 4294901760
      %v3279 = vsub.f32 %v3277, %v3278
      %v3280 = vand.u32 %v3279, 4294901760
      %3281 = vmatpush1.msra.mxu0 %v3280
      %3282 = vmatprep.subr.mxu0 0.0
      %v3283 = vand.u32 %v292, 4294901760
      %v3284 = vsub.f32 %v292, %v3283
      %v3285 = vand.u32 %v3284, 4294901760
      %v3286 = vsub.f32 %v3284, %v3285
      %v3287 = vand.u32 %v3286, 4294901760
      %3288 = vmatpush1.msra.mxu0 %v3287
      %3289 = vmatprep.subr.mxu0 0.0
      %v3290 = vand.u32 %v293, 4294901760
      %v3291 = vsub.f32 %v293, %v3290
      %v3292 = vand.u32 %v3291, 4294901760
      %v3293 = vsub.f32 %v3291, %v3292
      %v3294 = vand.u32 %v3293, 4294901760
      %3295 = vmatpush1.msra.mxu0 %v3294
      %3296 = vmatprep.subr.mxu0 0.0
      %v3297 = vand.u32 %v294, 4294901760
      %v3298 = vsub.f32 %v294, %v3297
      %v3299 = vand.u32 %v3298, 4294901760
      %v3300 = vsub.f32 %v3298, %v3299
      %v3301 = vand.u32 %v3300, 4294901760
      %3302 = vmatpush1.msra.mxu0 %v3301
      %3303 = vmatprep.subr.mxu0 0.0
      %v3304 = vand.u32 %v295, 4294901760
      %v3305 = vsub.f32 %v295, %v3304
      %v3306 = vand.u32 %v3305, 4294901760
      %v3307 = vsub.f32 %v3305, %v3306
      %v3308 = vand.u32 %v3307, 4294901760
      %3309 = vmatpush1.msra.mxu0 %v3308
      %3310 = vmatprep.subr.mxu0 0.0
      %v3311 = vand.u32 %v296, 4294901760
      %v3312 = vsub.f32 %v296, %v3311
      %v3313 = vand.u32 %v3312, 4294901760
      %v3314 = vsub.f32 %v3312, %v3313
      %v3315 = vand.u32 %v3314, 4294901760
      %3316 = vmatpush1.msra.mxu0 %v3315
      %3317 = vmatprep.subr.mxu0 0.0
      %v3318 = vand.u32 %v297, 4294901760
      %v3319 = vsub.f32 %v297, %v3318
      %v3320 = vand.u32 %v3319, 4294901760
      %v3321 = vsub.f32 %v3319, %v3320
      %v3322 = vand.u32 %v3321, 4294901760
      %3323 = vmatpush1.msra.mxu0 %v3322
      %3324 = vmatprep.subr.mxu0 0.0
      %v3325 = vand.u32 %v298, 4294901760
      %v3326 = vsub.f32 %v298, %v3325
      %v3327 = vand.u32 %v3326, 4294901760
      %v3328 = vsub.f32 %v3326, %v3327
      %v3329 = vand.u32 %v3328, 4294901760
      %3330 = vmatpush1.msra.mxu0 %v3329
      %3331 = vmatprep.subr.mxu0 0.0
      %v3332 = vand.u32 %v299, 4294901760
      %v3333 = vsub.f32 %v299, %v3332
      %v3334 = vand.u32 %v3333, 4294901760
      %v3335 = vsub.f32 %v3333, %v3334
      %v3336 = vand.u32 %v3335, 4294901760
      %3337 = vmatpush1.msra.mxu0 %v3336
      %3338 = vmatprep.subr.mxu0 0.0
      %v3339 = vand.u32 %v300, 4294901760
      %v3340 = vsub.f32 %v300, %v3339
      %v3341 = vand.u32 %v3340, 4294901760
      %v3342 = vsub.f32 %v3340, %v3341
      %v3343 = vand.u32 %v3342, 4294901760
      %3344 = vmatpush1.msra.mxu0 %v3343
      %3345 = vmatprep.subr.mxu0 0.0
      %v3346 = vand.u32 %v301, 4294901760
      %v3347 = vsub.f32 %v301, %v3346
      %v3348 = vand.u32 %v3347, 4294901760
      %v3349 = vsub.f32 %v3347, %v3348
      %v3350 = vand.u32 %v3349, 4294901760
      %3351 = vmatpush1.msra.mxu0 %v3350
      %3352 = vmatprep.subr.mxu0 0.0
      %v3353 = vand.u32 %v302, 4294901760
      %v3354 = vsub.f32 %v302, %v3353
      %v3355 = vand.u32 %v3354, 4294901760
      %v3356 = vsub.f32 %v3354, %v3355
      %v3357 = vand.u32 %v3356, 4294901760
      %3358 = vmatpush1.msra.mxu0 %v3357
      %3359 = vmatprep.subr.mxu0 0.0
      %v3360 = vand.u32 %v303, 4294901760
      %v3361 = vsub.f32 %v303, %v3360
      %v3362 = vand.u32 %v3361, 4294901760
      %v3363 = vsub.f32 %v3361, %v3362
      %v3364 = vand.u32 %v3363, 4294901760
      %3365 = vmatpush1.msra.mxu0 %v3364
      %3366 = vmatprep.subr.mxu0 0.0
      %v3367 = vand.u32 %v304, 4294901760
      %v3368 = vsub.f32 %v304, %v3367
      %v3369 = vand.u32 %v3368, 4294901760
      %v3370 = vsub.f32 %v3368, %v3369
      %v3371 = vand.u32 %v3370, 4294901760
      %3372 = vmatpush1.msra.mxu0 %v3371
      %3373 = vmatprep.subr.mxu0 0.0
      %v3374 = vand.u32 %v305, 4294901760
      %v3375 = vsub.f32 %v305, %v3374
      %v3376 = vand.u32 %v3375, 4294901760
      %v3377 = vsub.f32 %v3375, %v3376
      %v3378 = vand.u32 %v3377, 4294901760
      %3379 = vmatpush1.msra.mxu0 %v3378
      %3380 = vmatprep.subr.mxu0 0.0
      %v3381 = vand.u32 %v306, 4294901760
      %v3382 = vsub.f32 %v306, %v3381
      %v3383 = vand.u32 %v3382, 4294901760
      %v3384 = vsub.f32 %v3382, %v3383
      %v3385 = vand.u32 %v3384, 4294901760
      %3386 = vmatpush1.msra.mxu0 %v3385
      %3387 = vmatprep.subr.mxu0 0.0
      %v3388 = vand.u32 %v307, 4294901760
      %v3389 = vsub.f32 %v307, %v3388
      %v3390 = vand.u32 %v3389, 4294901760
      %v3391 = vsub.f32 %v3389, %v3390
      %v3392 = vand.u32 %v3391, 4294901760
      %3393 = vmatpush1.msra.mxu0 %v3392
      %3394 = vmatprep.subr.mxu0 0.0
      %v3395 = vand.u32 %v308, 4294901760
      %v3396 = vsub.f32 %v308, %v3395
      %v3397 = vand.u32 %v3396, 4294901760
      %v3398 = vsub.f32 %v3396, %v3397
      %v3399 = vand.u32 %v3398, 4294901760
      %3400 = vmatpush1.msra.mxu0 %v3399
      %v3401 = vand.u32 %v155, 4294901760
      %3402 = vmatprep.mubr.f32.mxu0 %v3401
      %v3403 = vand.u32 %v154, 4294901760
      %3404 = vmatmul.mubr.f32.gmra.mrb[0].mxu0 %v3403
      %v3405 = vpop.f32.mrb[0].mxu0
      %v3406 = vadd.f32 %v3054, %v3405
      %v3407 = vpop.f32.mrb[0].mxu0
      %v3408 = vand.u32 %v162, 4294901760
      %3409 = vmatprep.mubr.f32.mxu0 %v3408
      %v3410 = vand.u32 %v161, 4294901760
      %3411 = vmatmul.mubr.f32.gmra.mrb[0].mxu0 %v3410
      %v3412 = vpop.f32.mrb[0].mxu0
      %v3413 = vadd.f32 %v3069, %v3412
      %v3414 = vpop.f32.mrb[0].mxu0
      %v3415 = vand.u32 %v169, 4294901760
      %3416 = vmatprep.mubr.f32.mxu0 %v3415
      %v3417 = vand.u32 %v168, 4294901760
      %3418 = vmatmul.mubr.f32.gmra.mrb[0].mxu0 %v3417
      %v3419 = vpop.f32.mrb[0].mxu0
      %v3420 = vadd.f32 %v3084, %v3419
      %v3421 = vpop.f32.mrb[0].mxu0
      %v3422 = vand.u32 %v176, 4294901760
      %3423 = vmatprep.mubr.f32.mxu0 %v3422
      %v3424 = vand.u32 %v175, 4294901760
      %3425 = vmatmul.mubr.f32.gmra.mrb[0].mxu0 %v3424
      %v3426 = vpop.f32.mrb[0].mxu0
      %v3427 = vadd.f32 %v3099, %v3426
      %v3428 = vpop.f32.mrb[0].mxu0
      %v3429 = vand.u32 %v183, 4294901760
      %3430 = vmatprep.mubr.f32.mxu0 %v3429
      %v3431 = vand.u32 %v182, 4294901760
      %3432 = vmatmul.mubr.f32.gmra.mrb[0].mxu0 %v3431
      %v3433 = vpop.f32.mrb[0].mxu0
      %v3434 = vadd.f32 %v3114, %v3433
      %v3435 = vpop.f32.mrb[0].mxu0
      %v3436 = vand.u32 %v190, 4294901760
      %3437 = vmatprep.mubr.f32.mxu0 %v3436
      %v3438 = vand.u32 %v189, 4294901760
      %3439 = vmatmul.mubr.f32.gmra.mrb[0].mxu0 %v3438
      %v3440 = vpop.f32.mrb[0].mxu0
      %v3441 = vadd.f32 %v3129, %v3440
      %v3442 = vpop.f32.mrb[0].mxu0
      %v3443 = vand.u32 %v197, 4294901760
      %3444 = vmatprep.mubr.f32.mxu0 %v3443
      %v3445 = vand.u32 %v196, 4294901760
      %3446 = vmatmul.mubr.f32.gmra.mrb[0].mxu0 %v3445
      %v3447 = vpop.f32.mrb[0].mxu0
      %v3448 = vadd.f32 %v3144, %v3447
      %v3449 = vpop.f32.mrb[0].mxu0
      %v3450 = vand.u32 %v204, 4294901760
      %3451 = vmatprep.mubr.f32.mxu0 %v3450
      %v3452 = vand.u32 %v203, 4294901760
      %3453 = vmatmul.mubr.f32.gmra.mrb[0].mxu0 %v3452
      %v3454 = vpop.f32.mrb[0].mxu0
      %v3455 = vadd.f32 %v3159, %v3454
      %v3456 = vpop.f32.mrb[0].mxu0
      %v3457 = vand.u32 %v211, 4294901760
      %3458 = vmatprep.mubr.f32.mxu0 %v3457
      %v3459 = vand.u32 %v210, 4294901760
      %3460 = vmatmul.mubr.f32.gmra.mrb[0].mxu0 %v3459
      %v3461 = vpop.f32.mrb[0].mxu0
      %v3462 = vadd.f32 %v3174, %v3461
      %v3463 = vpop.f32.mrb[0].mxu0
      %3464 = vdwg.mxu0
      %3465 = vmatprep.subr.mxu0 0.0
      %v3466 = vand.u32 %v277, 4294901760
      %v3467 = vsub.f32 %v277, %v3466
      %3468 = vmatpush1.msra.mxu0 %v3467
      %3469 = vmatprep.subr.mxu0 0.0
      %v3470 = vand.u32 %v278, 4294901760
      %v3471 = vsub.f32 %v278, %v3470
      %3472 = vmatpush1.msra.mxu0 %v3471
      %3473 = vmatprep.subr.mxu0 0.0
      %v3474 = vand.u32 %v279, 4294901760
      %v3475 = vsub.f32 %v279, %v3474
      %3476 = vmatpush1.msra.mxu0 %v3475
      %3477 = vmatprep.subr.mxu0 0.0
      %v3478 = vand.u32 %v280, 4294901760
      %v3479 = vsub.f32 %v280, %v3478
      %3480 = vmatpush1.msra.mxu0 %v3479
      %3481 = vmatprep.subr.mxu0 0.0
      %v3482 = vand.u32 %v281, 4294901760
      %v3483 = vsub.f32 %v281, %v3482
      %3484 = vmatpush1.msra.mxu0 %v3483
      %3485 = vmatprep.subr.mxu0 0.0
      %v3486 = vand.u32 %v282, 4294901760
      %v3487 = vsub.f32 %v282, %v3486
      %3488 = vmatpush1.msra.mxu0 %v3487
      %3489 = vmatprep.subr.mxu0 0.0
      %v3490 = vand.u32 %v283, 4294901760
      %v3491 = vsub.f32 %v283, %v3490
      %3492 = vmatpush1.msra.mxu0 %v3491
      %3493 = vmatprep.subr.mxu0 0.0
      %v3494 = vand.u32 %v284, 4294901760
      %v3495 = vsub.f32 %v284, %v3494
      %3496 = vmatpush1.msra.mxu0 %v3495
      %3497 = vmatprep.subr.mxu0 0.0
      %v3498 = vand.u32 %v285, 4294901760
      %v3499 = vsub.f32 %v285, %v3498
      %3500 = vmatpush1.msra.mxu0 %v3499
      %3501 = vmatprep.subr.mxu0 0.0
      %v3502 = vand.u32 %v286, 4294901760
      %v3503 = vsub.f32 %v286, %v3502
      %3504 = vmatpush1.msra.mxu0 %v3503
      %3505 = vmatprep.subr.mxu0 0.0
      %v3506 = vand.u32 %v287, 4294901760
      %v3507 = vsub.f32 %v287, %v3506
      %3508 = vmatpush1.msra.mxu0 %v3507
      %3509 = vmatprep.subr.mxu0 0.0
      %v3510 = vand.u32 %v288, 4294901760
      %v3511 = vsub.f32 %v288, %v3510
      %3512 = vmatpush1.msra.mxu0 %v3511
      %3513 = vmatprep.subr.mxu0 0.0
      %v3514 = vand.u32 %v289, 4294901760
      %v3515 = vsub.f32 %v289, %v3514
      %3516 = vmatpush1.msra.mxu0 %v3515
      %3517 = vmatprep.subr.mxu0 0.0
      %v3518 = vand.u32 %v290, 4294901760
      %v3519 = vsub.f32 %v290, %v3518
      %3520 = vmatpush1.msra.mxu0 %v3519
      %3521 = vmatprep.subr.mxu0 0.0
      %v3522 = vand.u32 %v291, 4294901760
      %v3523 = vsub.f32 %v291, %v3522
      %3524 = vmatpush1.msra.mxu0 %v3523
      %3525 = vmatprep.subr.mxu0 0.0
      %v3526 = vand.u32 %v292, 4294901760
      %v3527 = vsub.f32 %v292, %v3526
      %3528 = vmatpush1.msra.mxu0 %v3527
      %3529 = vmatprep.subr.mxu0 0.0
      %v3530 = vand.u32 %v293, 4294901760
      %v3531 = vsub.f32 %v293, %v3530
      %3532 = vmatpush1.msra.mxu0 %v3531
      %3533 = vmatprep.subr.mxu0 0.0
      %v3534 = vand.u32 %v294, 4294901760
      %v3535 = vsub.f32 %v294, %v3534
      %3536 = vmatpush1.msra.mxu0 %v3535
      %3537 = vmatprep.subr.mxu0 0.0
      %v3538 = vand.u32 %v295, 4294901760
      %v3539 = vsub.f32 %v295, %v3538
      %3540 = vmatpush1.msra.mxu0 %v3539
      %3541 = vmatprep.subr.mxu0 0.0
      %v3542 = vand.u32 %v296, 4294901760
      %v3543 = vsub.f32 %v296, %v3542
      %3544 = vmatpush1.msra.mxu0 %v3543
      %3545 = vmatprep.subr.mxu0 0.0
      %v3546 = vand.u32 %v297, 4294901760
      %v3547 = vsub.f32 %v297, %v3546
      %3548 = vmatpush1.msra.mxu0 %v3547
      %3549 = vmatprep.subr.mxu0 0.0
      %v3550 = vand.u32 %v298, 4294901760
      %v3551 = vsub.f32 %v298, %v3550
      %3552 = vmatpush1.msra.mxu0 %v3551
      %3553 = vmatprep.subr.mxu0 0.0
      %v3554 = vand.u32 %v299, 4294901760
      %v3555 = vsub.f32 %v299, %v3554
      %3556 = vmatpush1.msra.mxu0 %v3555
      %3557 = vmatprep.subr.mxu0 0.0
      %v3558 = vand.u32 %v300, 4294901760
      %v3559 = vsub.f32 %v300, %v3558
      %3560 = vmatpush1.msra.mxu0 %v3559
      %3561 = vmatprep.subr.mxu0 0.0
      %v3562 = vand.u32 %v301, 4294901760
      %v3563 = vsub.f32 %v301, %v3562
      %3564 = vmatpush1.msra.mxu0 %v3563
      %3565 = vmatprep.subr.mxu0 0.0
      %v3566 = vand.u32 %v302, 4294901760
      %v3567 = vsub.f32 %v302, %v3566
      %3568 = vmatpush1.msra.mxu0 %v3567
      %3569 = vmatprep.subr.mxu0 0.0
      %v3570 = vand.u32 %v303, 4294901760
      %v3571 = vsub.f32 %v303, %v3570
      %3572 = vmatpush1.msra.mxu0 %v3571
      %3573 = vmatprep.subr.mxu0 0.0
      %v3574 = vand.u32 %v304, 4294901760
      %v3575 = vsub.f32 %v304, %v3574
      %3576 = vmatpush1.msra.mxu0 %v3575
      %3577 = vmatprep.subr.mxu0 0.0
      %v3578 = vand.u32 %v305, 4294901760
      %v3579 = vsub.f32 %v305, %v3578
      %3580 = vmatpush1.msra.mxu0 %v3579
      %3581 = vmatprep.subr.mxu0 0.0
      %v3582 = vand.u32 %v306, 4294901760
      %v3583 = vsub.f32 %v306, %v3582
      %3584 = vmatpush1.msra.mxu0 %v3583
      %3585 = vmatprep.subr.mxu0 0.0
      %v3586 = vand.u32 %v307, 4294901760
      %v3587 = vsub.f32 %v307, %v3586
      %3588 = vmatpush1.msra.mxu0 %v3587
      %3589 = vmatprep.subr.mxu0 0.0
      %v3590 = vand.u32 %v308, 4294901760
      %v3591 = vsub.f32 %v308, %v3590
      %3592 = vmatpush1.msra.mxu0 %v3591
      %v3593 = vand.u32 %v155, 4294901760
      %v3594 = vsub.f32 %v155, %v3593
      %3595 = vmatprep.mubr.f32.mxu0 %v3594
      %v3596 = vand.u32 %v154, 4294901760
      %v3597 = vsub.f32 %v154, %v3596
      %3598 = vmatmul.mubr.f32.gmra.mrb[0].mxu0 %v3597
      %v3599 = vpop.f32.mrb[0].mxu0
      %v3600 = vadd.f32 %v3406, %v3599
      %v3601 = vpop.f32.mrb[0].mxu0
      %v3602 = vand.u32 %v162, 4294901760
      %v3603 = vsub.f32 %v162, %v3602
      %3604 = vmatprep.mubr.f32.mxu0 %v3603
      %v3605 = vand.u32 %v161, 4294901760
      %v3606 = vsub.f32 %v161, %v3605
      %3607 = vmatmul.mubr.f32.gmra.mrb[0].mxu0 %v3606
      %v3608 = vpop.f32.mrb[0].mxu0
      %v3609 = vadd.f32 %v3413, %v3608
      %v3610 = vpop.f32.mrb[0].mxu0
      %v3611 = vand.u32 %v169, 4294901760
      %v3612 = vsub.f32 %v169, %v3611
      %3613 = vmatprep.mubr.f32.mxu0 %v3612
      %v3614 = vand.u32 %v168, 4294901760
      %v3615 = vsub.f32 %v168, %v3614
      %3616 = vmatmul.mubr.f32.gmra.mrb[0].mxu0 %v3615
      %v3617 = vpop.f32.mrb[0].mxu0
      %v3618 = vadd.f32 %v3420, %v3617
      %v3619 = vpop.f32.mrb[0].mxu0
      %v3620 = vand.u32 %v176, 4294901760
      %v3621 = vsub.f32 %v176, %v3620
      %3622 = vmatprep.mubr.f32.mxu0 %v3621
      %v3623 = vand.u32 %v175, 4294901760
      %v3624 = vsub.f32 %v175, %v3623
      %3625 = vmatmul.mubr.f32.gmra.mrb[0].mxu0 %v3624
      %v3626 = vpop.f32.mrb[0].mxu0
      %v3627 = vadd.f32 %v3427, %v3626
      %v3628 = vpop.f32.mrb[0].mxu0
      %v3629 = vand.u32 %v183, 4294901760
      %v3630 = vsub.f32 %v183, %v3629
      %3631 = vmatprep.mubr.f32.mxu0 %v3630
      %v3632 = vand.u32 %v182, 4294901760
      %v3633 = vsub.f32 %v182, %v3632
      %3634 = vmatmul.mubr.f32.gmra.mrb[0].mxu0 %v3633
      %v3635 = vpop.f32.mrb[0].mxu0
      %v3636 = vadd.f32 %v3434, %v3635
      %v3637 = vpop.f32.mrb[0].mxu0
      %v3638 = vand.u32 %v190, 4294901760
      %v3639 = vsub.f32 %v190, %v3638
      %3640 = vmatprep.mubr.f32.mxu0 %v3639
      %v3641 = vand.u32 %v189, 4294901760
      %v3642 = vsub.f32 %v189, %v3641
      %3643 = vmatmul.mubr.f32.gmra.mrb[0].mxu0 %v3642
      %v3644 = vpop.f32.mrb[0].mxu0
      %v3645 = vadd.f32 %v3441, %v3644
      %v3646 = vpop.f32.mrb[0].mxu0
      %v3647 = vand.u32 %v197, 4294901760
      %v3648 = vsub.f32 %v197, %v3647
      %3649 = vmatprep.mubr.f32.mxu0 %v3648
      %v3650 = vand.u32 %v196, 4294901760
      %v3651 = vsub.f32 %v196, %v3650
      %3652 = vmatmul.mubr.f32.gmra.mrb[0].mxu0 %v3651
      %v3653 = vpop.f32.mrb[0].mxu0
      %v3654 = vadd.f32 %v3448, %v3653
      %v3655 = vpop.f32.mrb[0].mxu0
      %v3656 = vand.u32 %v204, 4294901760
      %v3657 = vsub.f32 %v204, %v3656
      %3658 = vmatprep.mubr.f32.mxu0 %v3657
      %v3659 = vand.u32 %v203, 4294901760
      %v3660 = vsub.f32 %v203, %v3659
      %3661 = vmatmul.mubr.f32.gmra.mrb[0].mxu0 %v3660
      %v3662 = vpop.f32.mrb[0].mxu0
      %v3663 = vadd.f32 %v3455, %v3662
      %v3664 = vpop.f32.mrb[0].mxu0
      %v3665 = vand.u32 %v211, 4294901760
      %v3666 = vsub.f32 %v211, %v3665
      %3667 = vmatprep.mubr.f32.mxu0 %v3666
      %v3668 = vand.u32 %v210, 4294901760
      %v3669 = vsub.f32 %v210, %v3668
      %3670 = vmatmul.mubr.f32.gmra.mrb[0].mxu0 %v3669
      %v3671 = vpop.f32.mrb[0].mxu0
      %v3672 = vadd.f32 %v3462, %v3671
      %v3673 = vpop.f32.mrb[0].mxu0
      %3674 = vdwg.mxu0
      %3675 = vmatprep.subr.mxu0 0.0
      %v3676 = vand.u32 %v277, 4294901760
      %3677 = vmatpush1.msra.mxu0 %v3676
      %3678 = vmatprep.subr.mxu0 0.0
      %v3679 = vand.u32 %v278, 4294901760
      %3680 = vmatpush1.msra.mxu0 %v3679
      %3681 = vmatprep.subr.mxu0 0.0
      %v3682 = vand.u32 %v279, 4294901760
      %3683 = vmatpush1.msra.mxu0 %v3682
      %3684 = vmatprep.subr.mxu0 0.0
      %v3685 = vand.u32 %v280, 4294901760
      %3686 = vmatpush1.msra.mxu0 %v3685
      %3687 = vmatprep.subr.mxu0 0.0
      %v3688 = vand.u32 %v281, 4294901760
      %3689 = vmatpush1.msra.mxu0 %v3688
      %3690 = vmatprep.subr.mxu0 0.0
      %v3691 = vand.u32 %v282, 4294901760
      %3692 = vmatpush1.msra.mxu0 %v3691
      %3693 = vmatprep.subr.mxu0 0.0
      %v3694 = vand.u32 %v283, 4294901760
      %3695 = vmatpush1.msra.mxu0 %v3694
      %3696 = vmatprep.subr.mxu0 0.0
      %v3697 = vand.u32 %v284, 4294901760
      %3698 = vmatpush1.msra.mxu0 %v3697
      %3699 = vmatprep.subr.mxu0 0.0
      %v3700 = vand.u32 %v285, 4294901760
      %3701 = vmatpush1.msra.mxu0 %v3700
      %3702 = vmatprep.subr.mxu0 0.0
      %v3703 = vand.u32 %v286, 4294901760
      %3704 = vmatpush1.msra.mxu0 %v3703
      %3705 = vmatprep.subr.mxu0 0.0
      %v3706 = vand.u32 %v287, 4294901760
      %3707 = vmatpush1.msra.mxu0 %v3706
      %3708 = vmatprep.subr.mxu0 0.0
      %v3709 = vand.u32 %v288, 4294901760
      %3710 = vmatpush1.msra.mxu0 %v3709
      %3711 = vmatprep.subr.mxu0 0.0
      %v3712 = vand.u32 %v289, 4294901760
      %3713 = vmatpush1.msra.mxu0 %v3712
      %3714 = vmatprep.subr.mxu0 0.0
      %v3715 = vand.u32 %v290, 4294901760
      %3716 = vmatpush1.msra.mxu0 %v3715
      %3717 = vmatprep.subr.mxu0 0.0
      %v3718 = vand.u32 %v291, 4294901760
      %3719 = vmatpush1.msra.mxu0 %v3718
      %3720 = vmatprep.subr.mxu0 0.0
      %v3721 = vand.u32 %v292, 4294901760
      %3722 = vmatpush1.msra.mxu0 %v3721
      %3723 = vmatprep.subr.mxu0 0.0
      %v3724 = vand.u32 %v293, 4294901760
      %3725 = vmatpush1.msra.mxu0 %v3724
      %3726 = vmatprep.subr.mxu0 0.0
      %v3727 = vand.u32 %v294, 4294901760
      %3728 = vmatpush1.msra.mxu0 %v3727
      %3729 = vmatprep.subr.mxu0 0.0
      %v3730 = vand.u32 %v295, 4294901760
      %3731 = vmatpush1.msra.mxu0 %v3730
      %3732 = vmatprep.subr.mxu0 0.0
      %v3733 = vand.u32 %v296, 4294901760
      %3734 = vmatpush1.msra.mxu0 %v3733
      %3735 = vmatprep.subr.mxu0 0.0
      %v3736 = vand.u32 %v297, 4294901760
      %3737 = vmatpush1.msra.mxu0 %v3736
      %3738 = vmatprep.subr.mxu0 0.0
      %v3739 = vand.u32 %v298, 4294901760
      %3740 = vmatpush1.msra.mxu0 %v3739
      %3741 = vmatprep.subr.mxu0 0.0
      %v3742 = vand.u32 %v299, 4294901760
      %3743 = vmatpush1.msra.mxu0 %v3742
      %3744 = vmatprep.subr.mxu0 0.0
      %v3745 = vand.u32 %v300, 4294901760
      %3746 = vmatpush1.msra.mxu0 %v3745
      %3747 = vmatprep.subr.mxu0 0.0
      %v3748 = vand.u32 %v301, 4294901760
      %3749 = vmatpush1.msra.mxu0 %v3748
      %3750 = vmatprep.subr.mxu0 0.0
      %v3751 = vand.u32 %v302, 4294901760
      %3752 = vmatpush1.msra.mxu0 %v3751
      %3753 = vmatprep.subr.mxu0 0.0
      %v3754 = vand.u32 %v303, 4294901760
      %3755 = vmatpush1.msra.mxu0 %v3754
      %3756 = vmatprep.subr.mxu0 0.0
      %v3757 = vand.u32 %v304, 4294901760
      %3758 = vmatpush1.msra.mxu0 %v3757
      %3759 = vmatprep.subr.mxu0 0.0
      %v3760 = vand.u32 %v305, 4294901760
      %3761 = vmatpush1.msra.mxu0 %v3760
      %3762 = vmatprep.subr.mxu0 0.0
      %v3763 = vand.u32 %v306, 4294901760
      %3764 = vmatpush1.msra.mxu0 %v3763
      %3765 = vmatprep.subr.mxu0 0.0
      %v3766 = vand.u32 %v307, 4294901760
      %3767 = vmatpush1.msra.mxu0 %v3766
      %3768 = vmatprep.subr.mxu0 0.0
      %v3769 = vand.u32 %v308, 4294901760
      %3770 = vmatpush1.msra.mxu0 %v3769
      %v3771 = vand.u32 %v155, 4294901760
      %v3772 = vsub.f32 %v155, %v3771
      %v3773 = vand.u32 %v3772, 4294901760
      %3774 = vmatprep.mubr.f32.mxu0 %v3773
      %v3775 = vand.u32 %v154, 4294901760
      %v3776 = vsub.f32 %v154, %v3775
      %v3777 = vand.u32 %v3776, 4294901760
      %3778 = vmatmul.mubr.f32.gmra.mrb[0].mxu0 %v3777
      %v3779 = vpop.f32.mrb[0].mxu0
      %v3780 = vadd.f32 %v3600, %v3779
      %v3781 = vpop.f32.mrb[0].mxu0
      %v3782 = vand.u32 %v162, 4294901760
      %v3783 = vsub.f32 %v162, %v3782
      %v3784 = vand.u32 %v3783, 4294901760
      %3785 = vmatprep.mubr.f32.mxu0 %v3784
      %v3786 = vand.u32 %v161, 4294901760
      %v3787 = vsub.f32 %v161, %v3786
      %v3788 = vand.u32 %v3787, 4294901760
      %3789 = vmatmul.mubr.f32.gmra.mrb[0].mxu0 %v3788
      %v3790 = vpop.f32.mrb[0].mxu0
      %v3791 = vadd.f32 %v3609, %v3790
      %v3792 = vpop.f32.mrb[0].mxu0
      %v3793 = vand.u32 %v169, 4294901760
      %v3794 = vsub.f32 %v169, %v3793
      %v3795 = vand.u32 %v3794, 4294901760
      %3796 = vmatprep.mubr.f32.mxu0 %v3795
      %v3797 = vand.u32 %v168, 4294901760
      %v3798 = vsub.f32 %v168, %v3797
      %v3799 = vand.u32 %v3798, 4294901760
      %3800 = vmatmul.mubr.f32.gmra.mrb[0].mxu0 %v3799
      %v3801 = vpop.f32.mrb[0].mxu0
      %v3802 = vadd.f32 %v3618, %v3801
      %v3803 = vpop.f32.mrb[0].mxu0
      %v3804 = vand.u32 %v176, 4294901760
      %v3805 = vsub.f32 %v176, %v3804
      %v3806 = vand.u32 %v3805, 4294901760
      %3807 = vmatprep.mubr.f32.mxu0 %v3806
      %v3808 = vand.u32 %v175, 4294901760
      %v3809 = vsub.f32 %v175, %v3808
      %v3810 = vand.u32 %v3809, 4294901760
      %3811 = vmatmul.mubr.f32.gmra.mrb[0].mxu0 %v3810
      %v3812 = vpop.f32.mrb[0].mxu0
      %v3813 = vadd.f32 %v3627, %v3812
      %v3814 = vpop.f32.mrb[0].mxu0
      %v3815 = vand.u32 %v183, 4294901760
      %v3816 = vsub.f32 %v183, %v3815
      %v3817 = vand.u32 %v3816, 4294901760
      %3818 = vmatprep.mubr.f32.mxu0 %v3817
      %v3819 = vand.u32 %v182, 4294901760
      %v3820 = vsub.f32 %v182, %v3819
      %v3821 = vand.u32 %v3820, 4294901760
      %3822 = vmatmul.mubr.f32.gmra.mrb[0].mxu0 %v3821
      %v3823 = vpop.f32.mrb[0].mxu0
      %v3824 = vadd.f32 %v3636, %v3823
      %v3825 = vpop.f32.mrb[0].mxu0
      %v3826 = vand.u32 %v190, 4294901760
      %v3827 = vsub.f32 %v190, %v3826
      %v3828 = vand.u32 %v3827, 4294901760
      %3829 = vmatprep.mubr.f32.mxu0 %v3828
      %v3830 = vand.u32 %v189, 4294901760
      %v3831 = vsub.f32 %v189, %v3830
      %v3832 = vand.u32 %v3831, 4294901760
      %3833 = vmatmul.mubr.f32.gmra.mrb[0].mxu0 %v3832
      %v3834 = vpop.f32.mrb[0].mxu0
      %v3835 = vadd.f32 %v3645, %v3834
      %v3836 = vpop.f32.mrb[0].mxu0
      %v3837 = vand.u32 %v197, 4294901760
      %v3838 = vsub.f32 %v197, %v3837
      %v3839 = vand.u32 %v3838, 4294901760
      %3840 = vmatprep.mubr.f32.mxu0 %v3839
      %v3841 = vand.u32 %v196, 4294901760
      %v3842 = vsub.f32 %v196, %v3841
      %v3843 = vand.u32 %v3842, 4294901760
      %3844 = vmatmul.mubr.f32.gmra.mrb[0].mxu0 %v3843
      %v3845 = vpop.f32.mrb[0].mxu0
      %v3846 = vadd.f32 %v3654, %v3845
      %v3847 = vpop.f32.mrb[0].mxu0
      %v3848 = vand.u32 %v204, 4294901760
      %v3849 = vsub.f32 %v204, %v3848
      %v3850 = vand.u32 %v3849, 4294901760
      %3851 = vmatprep.mubr.f32.mxu0 %v3850
      %v3852 = vand.u32 %v203, 4294901760
      %v3853 = vsub.f32 %v203, %v3852
      %v3854 = vand.u32 %v3853, 4294901760
      %3855 = vmatmul.mubr.f32.gmra.mrb[0].mxu0 %v3854
      %v3856 = vpop.f32.mrb[0].mxu0
      %v3857 = vadd.f32 %v3663, %v3856
      %v3858 = vpop.f32.mrb[0].mxu0
      %v3859 = vand.u32 %v211, 4294901760
      %v3860 = vsub.f32 %v211, %v3859
      %v3861 = vand.u32 %v3860, 4294901760
      %3862 = vmatprep.mubr.f32.mxu0 %v3861
      %v3863 = vand.u32 %v210, 4294901760
      %v3864 = vsub.f32 %v210, %v3863
      %v3865 = vand.u32 %v3864, 4294901760
      %3866 = vmatmul.mubr.f32.gmra.mrb[0].mxu0 %v3865
      %v3867 = vpop.f32.mrb[0].mxu0
      %v3868 = vadd.f32 %v3672, %v3867
      %v3869 = vpop.f32.mrb[0].mxu0
      %3870 = vdwg.mxu0
      %3871 = vmatprep.subr.mxu0 0.0
      %v3872 = vand.u32 %v277, 4294901760
      %v3873 = vsub.f32 %v277, %v3872
      %v3874 = vand.u32 %v3873, 4294901760
      %3875 = vmatpush1.msra.mxu0 %v3874
      %3876 = vmatprep.subr.mxu0 0.0
      %v3877 = vand.u32 %v278, 4294901760
      %v3878 = vsub.f32 %v278, %v3877
      %v3879 = vand.u32 %v3878, 4294901760
      %3880 = vmatpush1.msra.mxu0 %v3879
      %3881 = vmatprep.subr.mxu0 0.0
      %v3882 = vand.u32 %v279, 4294901760
      %v3883 = vsub.f32 %v279, %v3882
      %v3884 = vand.u32 %v3883, 4294901760
      %3885 = vmatpush1.msra.mxu0 %v3884
      %3886 = vmatprep.subr.mxu0 0.0
      %v3887 = vand.u32 %v280, 4294901760
      %v3888 = vsub.f32 %v280, %v3887
      %v3889 = vand.u32 %v3888, 4294901760
      %3890 = vmatpush1.msra.mxu0 %v3889
      %3891 = vmatprep.subr.mxu0 0.0
      %v3892 = vand.u32 %v281, 4294901760
      %v3893 = vsub.f32 %v281, %v3892
      %v3894 = vand.u32 %v3893, 4294901760
      %3895 = vmatpush1.msra.mxu0 %v3894
      %3896 = vmatprep.subr.mxu0 0.0
      %v3897 = vand.u32 %v282, 4294901760
      %v3898 = vsub.f32 %v282, %v3897
      %v3899 = vand.u32 %v3898, 4294901760
      %3900 = vmatpush1.msra.mxu0 %v3899
      %3901 = vmatprep.subr.mxu0 0.0
      %v3902 = vand.u32 %v283, 4294901760
      %v3903 = vsub.f32 %v283, %v3902
      %v3904 = vand.u32 %v3903, 4294901760
      %3905 = vmatpush1.msra.mxu0 %v3904
      %3906 = vmatprep.subr.mxu0 0.0
      %v3907 = vand.u32 %v284, 4294901760
      %v3908 = vsub.f32 %v284, %v3907
      %v3909 = vand.u32 %v3908, 4294901760
      %3910 = vmatpush1.msra.mxu0 %v3909
      %3911 = vmatprep.subr.mxu0 0.0
      %v3912 = vand.u32 %v285, 4294901760
      %v3913 = vsub.f32 %v285, %v3912
      %v3914 = vand.u32 %v3913, 4294901760
      %3915 = vmatpush1.msra.mxu0 %v3914
      %3916 = vmatprep.subr.mxu0 0.0
      %v3917 = vand.u32 %v286, 4294901760
      %v3918 = vsub.f32 %v286, %v3917
      %v3919 = vand.u32 %v3918, 4294901760
      %3920 = vmatpush1.msra.mxu0 %v3919
      %3921 = vmatprep.subr.mxu0 0.0
      %v3922 = vand.u32 %v287, 4294901760
      %v3923 = vsub.f32 %v287, %v3922
      %v3924 = vand.u32 %v3923, 4294901760
      %3925 = vmatpush1.msra.mxu0 %v3924
      %3926 = vmatprep.subr.mxu0 0.0
      %v3927 = vand.u32 %v288, 4294901760
      %v3928 = vsub.f32 %v288, %v3927
      %v3929 = vand.u32 %v3928, 4294901760
      %3930 = vmatpush1.msra.mxu0 %v3929
      %3931 = vmatprep.subr.mxu0 0.0
      %v3932 = vand.u32 %v289, 4294901760
      %v3933 = vsub.f32 %v289, %v3932
      %v3934 = vand.u32 %v3933, 4294901760
      %3935 = vmatpush1.msra.mxu0 %v3934
      %3936 = vmatprep.subr.mxu0 0.0
      %v3937 = vand.u32 %v290, 4294901760
      %v3938 = vsub.f32 %v290, %v3937
      %v3939 = vand.u32 %v3938, 4294901760
      %3940 = vmatpush1.msra.mxu0 %v3939
      %3941 = vmatprep.subr.mxu0 0.0
      %v3942 = vand.u32 %v291, 4294901760
      %v3943 = vsub.f32 %v291, %v3942
      %v3944 = vand.u32 %v3943, 4294901760
      %3945 = vmatpush1.msra.mxu0 %v3944
      %3946 = vmatprep.subr.mxu0 0.0
      %v3947 = vand.u32 %v292, 4294901760
      %v3948 = vsub.f32 %v292, %v3947
      %v3949 = vand.u32 %v3948, 4294901760
      %3950 = vmatpush1.msra.mxu0 %v3949
      %3951 = vmatprep.subr.mxu0 0.0
      %v3952 = vand.u32 %v293, 4294901760
      %v3953 = vsub.f32 %v293, %v3952
      %v3954 = vand.u32 %v3953, 4294901760
      %3955 = vmatpush1.msra.mxu0 %v3954
      %3956 = vmatprep.subr.mxu0 0.0
      %v3957 = vand.u32 %v294, 4294901760
      %v3958 = vsub.f32 %v294, %v3957
      %v3959 = vand.u32 %v3958, 4294901760
      %3960 = vmatpush1.msra.mxu0 %v3959
      %3961 = vmatprep.subr.mxu0 0.0
      %v3962 = vand.u32 %v295, 4294901760
      %v3963 = vsub.f32 %v295, %v3962
      %v3964 = vand.u32 %v3963, 4294901760
      %3965 = vmatpush1.msra.mxu0 %v3964
      %3966 = vmatprep.subr.mxu0 0.0
      %v3967 = vand.u32 %v296, 4294901760
      %v3968 = vsub.f32 %v296, %v3967
      %v3969 = vand.u32 %v3968, 4294901760
      %3970 = vmatpush1.msra.mxu0 %v3969
      %3971 = vmatprep.subr.mxu0 0.0
      %v3972 = vand.u32 %v297, 4294901760
      %v3973 = vsub.f32 %v297, %v3972
      %v3974 = vand.u32 %v3973, 4294901760
      %3975 = vmatpush1.msra.mxu0 %v3974
      %3976 = vmatprep.subr.mxu0 0.0
      %v3977 = vand.u32 %v298, 4294901760
      %v3978 = vsub.f32 %v298, %v3977
      %v3979 = vand.u32 %v3978, 4294901760
      %3980 = vmatpush1.msra.mxu0 %v3979
      %3981 = vmatprep.subr.mxu0 0.0
      %v3982 = vand.u32 %v299, 4294901760
      %v3983 = vsub.f32 %v299, %v3982
      %v3984 = vand.u32 %v3983, 4294901760
      %3985 = vmatpush1.msra.mxu0 %v3984
      %3986 = vmatprep.subr.mxu0 0.0
      %v3987 = vand.u32 %v300, 4294901760
      %v3988 = vsub.f32 %v300, %v3987
      %v3989 = vand.u32 %v3988, 4294901760
      %3990 = vmatpush1.msra.mxu0 %v3989
      %3991 = vmatprep.subr.mxu0 0.0
      %v3992 = vand.u32 %v301, 4294901760
      %v3993 = vsub.f32 %v301, %v3992
      %v3994 = vand.u32 %v3993, 4294901760
      %3995 = vmatpush1.msra.mxu0 %v3994
      %3996 = vmatprep.subr.mxu0 0.0
      %v3997 = vand.u32 %v302, 4294901760
      %v3998 = vsub.f32 %v302, %v3997
      %v3999 = vand.u32 %v3998, 4294901760
      %4000 = vmatpush1.msra.mxu0 %v3999
      %4001 = vmatprep.subr.mxu0 0.0
      %v4002 = vand.u32 %v303, 4294901760
      %v4003 = vsub.f32 %v303, %v4002
      %v4004 = vand.u32 %v4003, 4294901760
      %4005 = vmatpush1.msra.mxu0 %v4004
      %4006 = vmatprep.subr.mxu0 0.0
      %v4007 = vand.u32 %v304, 4294901760
      %v4008 = vsub.f32 %v304, %v4007
      %v4009 = vand.u32 %v4008, 4294901760
      %4010 = vmatpush1.msra.mxu0 %v4009
      %4011 = vmatprep.subr.mxu0 0.0
      %v4012 = vand.u32 %v305, 4294901760
      %v4013 = vsub.f32 %v305, %v4012
      %v4014 = vand.u32 %v4013, 4294901760
      %4015 = vmatpush1.msra.mxu0 %v4014
      %4016 = vmatprep.subr.mxu0 0.0
      %v4017 = vand.u32 %v306, 4294901760
      %v4018 = vsub.f32 %v306, %v4017
      %v4019 = vand.u32 %v4018, 4294901760
      %4020 = vmatpush1.msra.mxu0 %v4019
      %4021 = vmatprep.subr.mxu0 0.0
      %v4022 = vand.u32 %v307, 4294901760
      %v4023 = vsub.f32 %v307, %v4022
      %v4024 = vand.u32 %v4023, 4294901760
      %4025 = vmatpush1.msra.mxu0 %v4024
      %4026 = vmatprep.subr.mxu0 0.0
      %v4027 = vand.u32 %v308, 4294901760
      %v4028 = vsub.f32 %v308, %v4027
      %v4029 = vand.u32 %v4028, 4294901760
      %4030 = vmatpush1.msra.mxu0 %v4029
      %v4031 = vand.u32 %v155, 4294901760
      %4032 = vmatprep.mubr.f32.mxu0 %v4031
      %v4033 = vand.u32 %v154, 4294901760
      %4034 = vmatmul.mubr.f32.gmra.mrb[0].mxu0 %v4033
      %v4035 = vpop.f32.mrb[0].mxu0
      %v4036 = vadd.f32 %v3780, %v4035
      %v4037 = vpop.f32.mrb[0].mxu0
      %v4038 = vand.u32 %v162, 4294901760
      %4039 = vmatprep.mubr.f32.mxu0 %v4038
      %v4040 = vand.u32 %v161, 4294901760
      %4041 = vmatmul.mubr.f32.gmra.mrb[0].mxu0 %v4040
      %v4042 = vpop.f32.mrb[0].mxu0
      %v4043 = vadd.f32 %v3791, %v4042
      %v4044 = vpop.f32.mrb[0].mxu0
      %v4045 = vand.u32 %v169, 4294901760
      %4046 = vmatprep.mubr.f32.mxu0 %v4045
      %v4047 = vand.u32 %v168, 4294901760
      %4048 = vmatmul.mubr.f32.gmra.mrb[0].mxu0 %v4047
      %v4049 = vpop.f32.mrb[0].mxu0
      %v4050 = vadd.f32 %v3802, %v4049
      %v4051 = vpop.f32.mrb[0].mxu0
      %v4052 = vand.u32 %v176, 4294901760
      %4053 = vmatprep.mubr.f32.mxu0 %v4052
      %v4054 = vand.u32 %v175, 4294901760
      %4055 = vmatmul.mubr.f32.gmra.mrb[0].mxu0 %v4054
      %v4056 = vpop.f32.mrb[0].mxu0
      %v4057 = vadd.f32 %v3813, %v4056
      %v4058 = vpop.f32.mrb[0].mxu0
      %v4059 = vand.u32 %v183, 4294901760
      %4060 = vmatprep.mubr.f32.mxu0 %v4059
      %v4061 = vand.u32 %v182, 4294901760
      %4062 = vmatmul.mubr.f32.gmra.mrb[0].mxu0 %v4061
      %v4063 = vpop.f32.mrb[0].mxu0
      %v4064 = vadd.f32 %v3824, %v4063
      %v4065 = vpop.f32.mrb[0].mxu0
      %v4066 = vand.u32 %v190, 4294901760
      %4067 = vmatprep.mubr.f32.mxu0 %v4066
      %v4068 = vand.u32 %v189, 4294901760
      %4069 = vmatmul.mubr.f32.gmra.mrb[0].mxu0 %v4068
      %v4070 = vpop.f32.mrb[0].mxu0
      %v4071 = vadd.f32 %v3835, %v4070
      %v4072 = vpop.f32.mrb[0].mxu0
      %v4073 = vand.u32 %v197, 4294901760
      %4074 = vmatprep.mubr.f32.mxu0 %v4073
      %v4075 = vand.u32 %v196, 4294901760
      %4076 = vmatmul.mubr.f32.gmra.mrb[0].mxu0 %v4075
      %v4077 = vpop.f32.mrb[0].mxu0
      %v4078 = vadd.f32 %v3846, %v4077
      %v4079 = vpop.f32.mrb[0].mxu0
      %v4080 = vand.u32 %v204, 4294901760
      %4081 = vmatprep.mubr.f32.mxu0 %v4080
      %v4082 = vand.u32 %v203, 4294901760
      %4083 = vmatmul.mubr.f32.gmra.mrb[0].mxu0 %v4082
      %v4084 = vpop.f32.mrb[0].mxu0
      %v4085 = vadd.f32 %v3857, %v4084
      %v4086 = vpop.f32.mrb[0].mxu0
      %v4087 = vand.u32 %v211, 4294901760
      %4088 = vmatprep.mubr.f32.mxu0 %v4087
      %v4089 = vand.u32 %v210, 4294901760
      %4090 = vmatmul.mubr.f32.gmra.mrb[0].mxu0 %v4089
      %v4091 = vpop.f32.mrb[0].mxu0
      %v4092 = vadd.f32 %v3868, %v4091
      %v4093 = vpop.f32.mrb[0].mxu0
      %4094 = vdwg.mxu0
      %4095 = vmatprep.subr.mxu0 0.0
      %v4096 = vand.u32 %v277, 4294901760
      %4097 = vmatpush1.msra.mxu0 %v4096
      %4098 = vmatprep.subr.mxu0 0.0
      %v4099 = vand.u32 %v278, 4294901760
      %4100 = vmatpush1.msra.mxu0 %v4099
      %4101 = vmatprep.subr.mxu0 0.0
      %v4102 = vand.u32 %v279, 4294901760
      %4103 = vmatpush1.msra.mxu0 %v4102
      %4104 = vmatprep.subr.mxu0 0.0
      %v4105 = vand.u32 %v280, 4294901760
      %4106 = vmatpush1.msra.mxu0 %v4105
      %4107 = vmatprep.subr.mxu0 0.0
      %v4108 = vand.u32 %v281, 4294901760
      %4109 = vmatpush1.msra.mxu0 %v4108
      %4110 = vmatprep.subr.mxu0 0.0
      %v4111 = vand.u32 %v282, 4294901760
      %4112 = vmatpush1.msra.mxu0 %v4111
      %4113 = vmatprep.subr.mxu0 0.0
      %v4114 = vand.u32 %v283, 4294901760
      %4115 = vmatpush1.msra.mxu0 %v4114
      %4116 = vmatprep.subr.mxu0 0.0
      %v4117 = vand.u32 %v284, 4294901760
      %4118 = vmatpush1.msra.mxu0 %v4117
      %4119 = vmatprep.subr.mxu0 0.0
      %v4120 = vand.u32 %v285, 4294901760
      %4121 = vmatpush1.msra.mxu0 %v4120
      %4122 = vmatprep.subr.mxu0 0.0
      %v4123 = vand.u32 %v286, 4294901760
      %4124 = vmatpush1.msra.mxu0 %v4123
      %4125 = vmatprep.subr.mxu0 0.0
      %v4126 = vand.u32 %v287, 4294901760
      %4127 = vmatpush1.msra.mxu0 %v4126
      %4128 = vmatprep.subr.mxu0 0.0
      %v4129 = vand.u32 %v288, 4294901760
      %4130 = vmatpush1.msra.mxu0 %v4129
      %4131 = vmatprep.subr.mxu0 0.0
      %v4132 = vand.u32 %v289, 4294901760
      %4133 = vmatpush1.msra.mxu0 %v4132
      %4134 = vmatprep.subr.mxu0 0.0
      %v4135 = vand.u32 %v290, 4294901760
      %4136 = vmatpush1.msra.mxu0 %v4135
      %4137 = vmatprep.subr.mxu0 0.0
      %v4138 = vand.u32 %v291, 4294901760
      %4139 = vmatpush1.msra.mxu0 %v4138
      %4140 = vmatprep.subr.mxu0 0.0
      %v4141 = vand.u32 %v292, 4294901760
      %4142 = vmatpush1.msra.mxu0 %v4141
      %4143 = vmatprep.subr.mxu0 0.0
      %v4144 = vand.u32 %v293, 4294901760
      %4145 = vmatpush1.msra.mxu0 %v4144
      %4146 = vmatprep.subr.mxu0 0.0
      %v4147 = vand.u32 %v294, 4294901760
      %4148 = vmatpush1.msra.mxu0 %v4147
      %4149 = vmatprep.subr.mxu0 0.0
      %v4150 = vand.u32 %v295, 4294901760
      %4151 = vmatpush1.msra.mxu0 %v4150
      %4152 = vmatprep.subr.mxu0 0.0
      %v4153 = vand.u32 %v296, 4294901760
      %4154 = vmatpush1.msra.mxu0 %v4153
      %4155 = vmatprep.subr.mxu0 0.0
      %v4156 = vand.u32 %v297, 4294901760
      %4157 = vmatpush1.msra.mxu0 %v4156
      %4158 = vmatprep.subr.mxu0 0.0
      %v4159 = vand.u32 %v298, 4294901760
      %4160 = vmatpush1.msra.mxu0 %v4159
      %4161 = vmatprep.subr.mxu0 0.0
      %v4162 = vand.u32 %v299, 4294901760
      %4163 = vmatpush1.msra.mxu0 %v4162
      %4164 = vmatprep.subr.mxu0 0.0
      %v4165 = vand.u32 %v300, 4294901760
      %4166 = vmatpush1.msra.mxu0 %v4165
      %4167 = vmatprep.subr.mxu0 0.0
      %v4168 = vand.u32 %v301, 4294901760
      %4169 = vmatpush1.msra.mxu0 %v4168
      %4170 = vmatprep.subr.mxu0 0.0
      %v4171 = vand.u32 %v302, 4294901760
      %4172 = vmatpush1.msra.mxu0 %v4171
      %4173 = vmatprep.subr.mxu0 0.0
      %v4174 = vand.u32 %v303, 4294901760
      %4175 = vmatpush1.msra.mxu0 %v4174
      %4176 = vmatprep.subr.mxu0 0.0
      %v4177 = vand.u32 %v304, 4294901760
      %4178 = vmatpush1.msra.mxu0 %v4177
      %4179 = vmatprep.subr.mxu0 0.0
      %v4180 = vand.u32 %v305, 4294901760
      %4181 = vmatpush1.msra.mxu0 %v4180
      %4182 = vmatprep.subr.mxu0 0.0
      %v4183 = vand.u32 %v306, 4294901760
      %4184 = vmatpush1.msra.mxu0 %v4183
      %4185 = vmatprep.subr.mxu0 0.0
      %v4186 = vand.u32 %v307, 4294901760
      %4187 = vmatpush1.msra.mxu0 %v4186
      %4188 = vmatprep.subr.mxu0 0.0
      %v4189 = vand.u32 %v308, 4294901760
      %4190 = vmatpush1.msra.mxu0 %v4189
      %v4191 = vand.u32 %v155, 4294901760
      %4192 = vmatprep.mubr.f32.mxu0 %v4191
      %v4193 = vand.u32 %v154, 4294901760
      %4194 = vmatmul.mubr.f32.gmra.mrb[0].mxu0 %v4193
      %v4195 = vpop.f32.mrb[0].mxu0
      %v4196 = vadd.f32 %v4036, %v4195
      %v4197 = vpop.f32.mrb[0].mxu0
      %v4198 = vand.u32 %v162, 4294901760
      %4199 = vmatprep.mubr.f32.mxu0 %v4198
      %v4200 = vand.u32 %v161, 4294901760
      %4201 = vmatmul.mubr.f32.gmra.mrb[0].mxu0 %v4200
      %v4202 = vpop.f32.mrb[0].mxu0
      %v4203 = vadd.f32 %v4043, %v4202
      %v4204 = vpop.f32.mrb[0].mxu0
      %v4205 = vand.u32 %v169, 4294901760
      %4206 = vmatprep.mubr.f32.mxu0 %v4205
      %v4207 = vand.u32 %v168, 4294901760
      %4208 = vmatmul.mubr.f32.gmra.mrb[0].mxu0 %v4207
      %v4209 = vpop.f32.mrb[0].mxu0
      %v4210 = vadd.f32 %v4050, %v4209
      %v4211 = vpop.f32.mrb[0].mxu0
      %v4212 = vand.u32 %v176, 4294901760
      %4213 = vmatprep.mubr.f32.mxu0 %v4212
      %v4214 = vand.u32 %v175, 4294901760
      %4215 = vmatmul.mubr.f32.gmra.mrb[0].mxu0 %v4214
      %v4216 = vpop.f32.mrb[0].mxu0
      %v4217 = vadd.f32 %v4057, %v4216
      %v4218 = vpop.f32.mrb[0].mxu0
      %v4219 = vand.u32 %v183, 4294901760
      %4220 = vmatprep.mubr.f32.mxu0 %v4219
      %v4221 = vand.u32 %v182, 4294901760
      %4222 = vmatmul.mubr.f32.gmra.mrb[0].mxu0 %v4221
      %v4223 = vpop.f32.mrb[0].mxu0
      %v4224 = vadd.f32 %v4064, %v4223
      %v4225 = vpop.f32.mrb[0].mxu0
      %v4226 = vand.u32 %v190, 4294901760
      %4227 = vmatprep.mubr.f32.mxu0 %v4226
      %v4228 = vand.u32 %v189, 4294901760
      %4229 = vmatmul.mubr.f32.gmra.mrb[0].mxu0 %v4228
      %v4230 = vpop.f32.mrb[0].mxu0
      %v4231 = vadd.f32 %v4071, %v4230
      %v4232 = vpop.f32.mrb[0].mxu0
      %v4233 = vand.u32 %v197, 4294901760
      %4234 = vmatprep.mubr.f32.mxu0 %v4233
      %v4235 = vand.u32 %v196, 4294901760
      %4236 = vmatmul.mubr.f32.gmra.mrb[0].mxu0 %v4235
      %v4237 = vpop.f32.mrb[0].mxu0
      %v4238 = vadd.f32 %v4078, %v4237
      %v4239 = vpop.f32.mrb[0].mxu0
      %v4240 = vand.u32 %v204, 4294901760
      %4241 = vmatprep.mubr.f32.mxu0 %v4240
      %v4242 = vand.u32 %v203, 4294901760
      %4243 = vmatmul.mubr.f32.gmra.mrb[0].mxu0 %v4242
      %v4244 = vpop.f32.mrb[0].mxu0
      %v4245 = vadd.f32 %v4085, %v4244
      %v4246 = vpop.f32.mrb[0].mxu0
      %v4247 = vand.u32 %v211, 4294901760
      %4248 = vmatprep.mubr.f32.mxu0 %v4247
      %v4249 = vand.u32 %v210, 4294901760
      %4250 = vmatmul.mubr.f32.gmra.mrb[0].mxu0 %v4249
      %v4251 = vpop.f32.mrb[0].mxu0
      %v4252 = vadd.f32 %v4092, %v4251
      %v4253 = vpop.f32.mrb[0].mxu0
      %4254 = vdwg.mxu0
      %4255 = vmatprep.subr.mxu0 0.0
      %v4256 = vand.u32 %v309, 4294901760
      %4257 = vmatpush1.msra.mxu0 %v4256
      %4258 = vmatprep.subr.mxu0 0.0
      %v4259 = vand.u32 %v310, 4294901760
      %4260 = vmatpush1.msra.mxu0 %v4259
      %4261 = vmatprep.subr.mxu0 0.0
      %v4262 = vand.u32 %v311, 4294901760
      %4263 = vmatpush1.msra.mxu0 %v4262
      %4264 = vmatprep.subr.mxu0 0.0
      %v4265 = vand.u32 %v312, 4294901760
      %4266 = vmatpush1.msra.mxu0 %v4265
      %4267 = vmatprep.subr.mxu0 0.0
      %v4268 = vand.u32 %v313, 4294901760
      %4269 = vmatpush1.msra.mxu0 %v4268
      %4270 = vmatprep.subr.mxu0 0.0
      %v4271 = vand.u32 %v314, 4294901760
      %4272 = vmatpush1.msra.mxu0 %v4271
      %4273 = vmatprep.subr.mxu0 0.0
      %v4274 = vand.u32 %v315, 4294901760
      %4275 = vmatpush1.msra.mxu0 %v4274
      %4276 = vmatprep.subr.mxu0 0.0
      %v4277 = vand.u32 %v316, 4294901760
      %4278 = vmatpush1.msra.mxu0 %v4277
      %4279 = vmatprep.subr.mxu0 0.0
      %v4280 = vand.u32 %v317, 4294901760
      %4281 = vmatpush1.msra.mxu0 %v4280
      %4282 = vmatprep.subr.mxu0 0.0
      %v4283 = vand.u32 %v318, 4294901760
      %4284 = vmatpush1.msra.mxu0 %v4283
      %4285 = vmatprep.subr.mxu0 0.0
      %v4286 = vand.u32 %v319, 4294901760
      %4287 = vmatpush1.msra.mxu0 %v4286
      %4288 = vmatprep.subr.mxu0 0.0
      %v4289 = vand.u32 %v320, 4294901760
      %4290 = vmatpush1.msra.mxu0 %v4289
      %4291 = vmatprep.subr.mxu0 0.0
      %v4292 = vand.u32 %v321, 4294901760
      %4293 = vmatpush1.msra.mxu0 %v4292
      %4294 = vmatprep.subr.mxu0 0.0
      %v4295 = vand.u32 %v322, 4294901760
      %4296 = vmatpush1.msra.mxu0 %v4295
      %4297 = vmatprep.subr.mxu0 0.0
      %v4298 = vand.u32 %v323, 4294901760
      %4299 = vmatpush1.msra.mxu0 %v4298
      %4300 = vmatprep.subr.mxu0 0.0
      %v4301 = vand.u32 %v324, 4294901760
      %4302 = vmatpush1.msra.mxu0 %v4301
      %4303 = vmatprep.subr.mxu0 0.0
      %4304 = vmatpush1.msra.mxu0 0.0
      %4305 = vmatprep.subr.mxu0 0.0
      %4306 = vmatpush1.msra.mxu0 0.0
      %4307 = vmatprep.subr.mxu0 0.0
      %4308 = vmatpush1.msra.mxu0 0.0
      %4309 = vmatprep.subr.mxu0 0.0
      %4310 = vmatpush1.msra.mxu0 0.0
      %4311 = vmatprep.subr.mxu0 0.0
      %4312 = vmatpush1.msra.mxu0 0.0
      %4313 = vmatprep.subr.mxu0 0.0
      %4314 = vmatpush1.msra.mxu0 0.0
      %4315 = vmatprep.subr.mxu0 0.0
      %4316 = vmatpush1.msra.mxu0 0.0
      %4317 = vmatprep.subr.mxu0 0.0
      %4318 = vmatpush1.msra.mxu0 0.0
      %4319 = vmatprep.subr.mxu0 0.0
      %4320 = vmatpush1.msra.mxu0 0.0
      %4321 = vmatprep.subr.mxu0 0.0
      %4322 = vmatpush1.msra.mxu0 0.0
      %4323 = vmatprep.subr.mxu0 0.0
      %4324 = vmatpush1.msra.mxu0 0.0
      %4325 = vmatprep.subr.mxu0 0.0
      %4326 = vmatpush1.msra.mxu0 0.0
      %4327 = vmatprep.subr.mxu0 0.0
      %4328 = vmatpush1.msra.mxu0 0.0
      %4329 = vmatprep.subr.mxu0 0.0
      %4330 = vmatpush1.msra.mxu0 0.0
      %4331 = vmatprep.subr.mxu0 0.0
      %4332 = vmatpush1.msra.mxu0 0.0
      %4333 = vmatprep.subr.mxu0 0.0
      %4334 = vmatpush1.msra.mxu0 0.0
      %4335 = vmatprep.mubr.f32.mxu0 0.0
      %v4336 = vand.u32 %v156, 4294901760
      %v4337 = vsub.f32 %v156, %v4336
      %v4338 = vand.u32 %v4337, 4294901760
      %v4339 = vsub.f32 %v4337, %v4338
      %v4340 = vand.u32 %v4339, 4294901760
      %4341 = vmatmul.mubr.f32.gmra.mrb[0].mxu0 %v4340
      %v4342 = vpop.f32.mrb[0].mxu0
      %v4343 = vadd.f32 %v4196, %v4342
      %v4344 = vpop.f32.mrb[0].mxu0
      %4345 = vmatprep.mubr.f32.mxu0 0.0
      %v4346 = vand.u32 %v163, 4294901760
      %v4347 = vsub.f32 %v163, %v4346
      %v4348 = vand.u32 %v4347, 4294901760
      %v4349 = vsub.f32 %v4347, %v4348
      %v4350 = vand.u32 %v4349, 4294901760
      %4351 = vmatmul.mubr.f32.gmra.mrb[0].mxu0 %v4350
      %v4352 = vpop.f32.mrb[0].mxu0
      %v4353 = vadd.f32 %v4203, %v4352
      %v4354 = vpop.f32.mrb[0].mxu0
      %4355 = vmatprep.mubr.f32.mxu0 0.0
      %v4356 = vand.u32 %v170, 4294901760
      %v4357 = vsub.f32 %v170, %v4356
      %v4358 = vand.u32 %v4357, 4294901760
      %v4359 = vsub.f32 %v4357, %v4358
      %v4360 = vand.u32 %v4359, 4294901760
      %4361 = vmatmul.mubr.f32.gmra.mrb[0].mxu0 %v4360
      %v4362 = vpop.f32.mrb[0].mxu0
      %v4363 = vadd.f32 %v4210, %v4362
      %v4364 = vpop.f32.mrb[0].mxu0
      %4365 = vmatprep.mubr.f32.mxu0 0.0
      %v4366 = vand.u32 %v177, 4294901760
      %v4367 = vsub.f32 %v177, %v4366
      %v4368 = vand.u32 %v4367, 4294901760
      %v4369 = vsub.f32 %v4367, %v4368
      %v4370 = vand.u32 %v4369, 4294901760
      %4371 = vmatmul.mubr.f32.gmra.mrb[0].mxu0 %v4370
      %v4372 = vpop.f32.mrb[0].mxu0
      %v4373 = vadd.f32 %v4217, %v4372
      %v4374 = vpop.f32.mrb[0].mxu0
      %4375 = vmatprep.mubr.f32.mxu0 0.0
      %v4376 = vand.u32 %v184, 4294901760
      %v4377 = vsub.f32 %v184, %v4376
      %v4378 = vand.u32 %v4377, 4294901760
      %v4379 = vsub.f32 %v4377, %v4378
      %v4380 = vand.u32 %v4379, 4294901760
      %4381 = vmatmul.mubr.f32.gmra.mrb[0].mxu0 %v4380
      %v4382 = vpop.f32.mrb[0].mxu0
      %v4383 = vadd.f32 %v4224, %v4382
      %v4384 = vpop.f32.mrb[0].mxu0
      %4385 = vmatprep.mubr.f32.mxu0 0.0
      %v4386 = vand.u32 %v191, 4294901760
      %v4387 = vsub.f32 %v191, %v4386
      %v4388 = vand.u32 %v4387, 4294901760
      %v4389 = vsub.f32 %v4387, %v4388
      %v4390 = vand.u32 %v4389, 4294901760
      %4391 = vmatmul.mubr.f32.gmra.mrb[0].mxu0 %v4390
      %v4392 = vpop.f32.mrb[0].mxu0
      %v4393 = vadd.f32 %v4231, %v4392
      %v4394 = vpop.f32.mrb[0].mxu0
      %4395 = vmatprep.mubr.f32.mxu0 0.0
      %v4396 = vand.u32 %v198, 4294901760
      %v4397 = vsub.f32 %v198, %v4396
      %v4398 = vand.u32 %v4397, 4294901760
      %v4399 = vsub.f32 %v4397, %v4398
      %v4400 = vand.u32 %v4399, 4294901760
      %4401 = vmatmul.mubr.f32.gmra.mrb[0].mxu0 %v4400
      %v4402 = vpop.f32.mrb[0].mxu0
      %v4403 = vadd.f32 %v4238, %v4402
      %v4404 = vpop.f32.mrb[0].mxu0
      %4405 = vmatprep.mubr.f32.mxu0 0.0
      %v4406 = vand.u32 %v205, 4294901760
      %v4407 = vsub.f32 %v205, %v4406
      %v4408 = vand.u32 %v4407, 4294901760
      %v4409 = vsub.f32 %v4407, %v4408
      %v4410 = vand.u32 %v4409, 4294901760
      %4411 = vmatmul.mubr.f32.gmra.mrb[0].mxu0 %v4410
      %v4412 = vpop.f32.mrb[0].mxu0
      %v4413 = vadd.f32 %v4245, %v4412
      %v4414 = vpop.f32.mrb[0].mxu0
      %4415 = vmatprep.mubr.f32.mxu0 0.0
      %v4416 = vand.u32 %v212, 4294901760
      %v4417 = vsub.f32 %v212, %v4416
      %v4418 = vand.u32 %v4417, 4294901760
      %v4419 = vsub.f32 %v4417, %v4418
      %v4420 = vand.u32 %v4419, 4294901760
      %4421 = vmatmul.mubr.f32.gmra.mrb[0].mxu0 %v4420
      %v4422 = vpop.f32.mrb[0].mxu0
      %v4423 = vadd.f32 %v4252, %v4422
      %v4424 = vpop.f32.mrb[0].mxu0
      %4425 = vdwg.mxu0
      %4426 = vmatprep.subr.mxu0 0.0
      %v4427 = vand.u32 %v309, 4294901760
      %v4428 = vsub.f32 %v309, %v4427
      %v4429 = vand.u32 %v4428, 4294901760
      %v4430 = vsub.f32 %v4428, %v4429
      %v4431 = vand.u32 %v4430, 4294901760
      %4432 = vmatpush1.msra.mxu0 %v4431
      %4433 = vmatprep.subr.mxu0 0.0
      %v4434 = vand.u32 %v310, 4294901760
      %v4435 = vsub.f32 %v310, %v4434
      %v4436 = vand.u32 %v4435, 4294901760
      %v4437 = vsub.f32 %v4435, %v4436
      %v4438 = vand.u32 %v4437, 4294901760
      %4439 = vmatpush1.msra.mxu0 %v4438
      %4440 = vmatprep.subr.mxu0 0.0
      %v4441 = vand.u32 %v311, 4294901760
      %v4442 = vsub.f32 %v311, %v4441
      %v4443 = vand.u32 %v4442, 4294901760
      %v4444 = vsub.f32 %v4442, %v4443
      %v4445 = vand.u32 %v4444, 4294901760
      %4446 = vmatpush1.msra.mxu0 %v4445
      %4447 = vmatprep.subr.mxu0 0.0
      %v4448 = vand.u32 %v312, 4294901760
      %v4449 = vsub.f32 %v312, %v4448
      %v4450 = vand.u32 %v4449, 4294901760
      %v4451 = vsub.f32 %v4449, %v4450
      %v4452 = vand.u32 %v4451, 4294901760
      %4453 = vmatpush1.msra.mxu0 %v4452
      %4454 = vmatprep.subr.mxu0 0.0
      %v4455 = vand.u32 %v313, 4294901760
      %v4456 = vsub.f32 %v313, %v4455
      %v4457 = vand.u32 %v4456, 4294901760
      %v4458 = vsub.f32 %v4456, %v4457
      %v4459 = vand.u32 %v4458, 4294901760
      %4460 = vmatpush1.msra.mxu0 %v4459
      %4461 = vmatprep.subr.mxu0 0.0
      %v4462 = vand.u32 %v314, 4294901760
      %v4463 = vsub.f32 %v314, %v4462
      %v4464 = vand.u32 %v4463, 4294901760
      %v4465 = vsub.f32 %v4463, %v4464
      %v4466 = vand.u32 %v4465, 4294901760
      %4467 = vmatpush1.msra.mxu0 %v4466
      %4468 = vmatprep.subr.mxu0 0.0
      %v4469 = vand.u32 %v315, 4294901760
      %v4470 = vsub.f32 %v315, %v4469
      %v4471 = vand.u32 %v4470, 4294901760
      %v4472 = vsub.f32 %v4470, %v4471
      %v4473 = vand.u32 %v4472, 4294901760
      %4474 = vmatpush1.msra.mxu0 %v4473
      %4475 = vmatprep.subr.mxu0 0.0
      %v4476 = vand.u32 %v316, 4294901760
      %v4477 = vsub.f32 %v316, %v4476
      %v4478 = vand.u32 %v4477, 4294901760
      %v4479 = vsub.f32 %v4477, %v4478
      %v4480 = vand.u32 %v4479, 4294901760
      %4481 = vmatpush1.msra.mxu0 %v4480
      %4482 = vmatprep.subr.mxu0 0.0
      %v4483 = vand.u32 %v317, 4294901760
      %v4484 = vsub.f32 %v317, %v4483
      %v4485 = vand.u32 %v4484, 4294901760
      %v4486 = vsub.f32 %v4484, %v4485
      %v4487 = vand.u32 %v4486, 4294901760
      %4488 = vmatpush1.msra.mxu0 %v4487
      %4489 = vmatprep.subr.mxu0 0.0
      %v4490 = vand.u32 %v318, 4294901760
      %v4491 = vsub.f32 %v318, %v4490
      %v4492 = vand.u32 %v4491, 4294901760
      %v4493 = vsub.f32 %v4491, %v4492
      %v4494 = vand.u32 %v4493, 4294901760
      %4495 = vmatpush1.msra.mxu0 %v4494
      %4496 = vmatprep.subr.mxu0 0.0
      %v4497 = vand.u32 %v319, 4294901760
      %v4498 = vsub.f32 %v319, %v4497
      %v4499 = vand.u32 %v4498, 4294901760
      %v4500 = vsub.f32 %v4498, %v4499
      %v4501 = vand.u32 %v4500, 4294901760
      %4502 = vmatpush1.msra.mxu0 %v4501
      %4503 = vmatprep.subr.mxu0 0.0
      %v4504 = vand.u32 %v320, 4294901760
      %v4505 = vsub.f32 %v320, %v4504
      %v4506 = vand.u32 %v4505, 4294901760
      %v4507 = vsub.f32 %v4505, %v4506
      %v4508 = vand.u32 %v4507, 4294901760
      %4509 = vmatpush1.msra.mxu0 %v4508
      %4510 = vmatprep.subr.mxu0 0.0
      %v4511 = vand.u32 %v321, 4294901760
      %v4512 = vsub.f32 %v321, %v4511
      %v4513 = vand.u32 %v4512, 4294901760
      %v4514 = vsub.f32 %v4512, %v4513
      %v4515 = vand.u32 %v4514, 4294901760
      %4516 = vmatpush1.msra.mxu0 %v4515
      %4517 = vmatprep.subr.mxu0 0.0
      %v4518 = vand.u32 %v322, 4294901760
      %v4519 = vsub.f32 %v322, %v4518
      %v4520 = vand.u32 %v4519, 4294901760
      %v4521 = vsub.f32 %v4519, %v4520
      %v4522 = vand.u32 %v4521, 4294901760
      %4523 = vmatpush1.msra.mxu0 %v4522
      %4524 = vmatprep.subr.mxu0 0.0
      %v4525 = vand.u32 %v323, 4294901760
      %v4526 = vsub.f32 %v323, %v4525
      %v4527 = vand.u32 %v4526, 4294901760
      %v4528 = vsub.f32 %v4526, %v4527
      %v4529 = vand.u32 %v4528, 4294901760
      %4530 = vmatpush1.msra.mxu0 %v4529
      %4531 = vmatprep.subr.mxu0 0.0
      %v4532 = vand.u32 %v324, 4294901760
      %v4533 = vsub.f32 %v324, %v4532
      %v4534 = vand.u32 %v4533, 4294901760
      %v4535 = vsub.f32 %v4533, %v4534
      %v4536 = vand.u32 %v4535, 4294901760
      %4537 = vmatpush1.msra.mxu0 %v4536
      %4538 = vmatprep.subr.mxu0 0.0
      %4539 = vmatpush1.msra.mxu0 0.0
      %4540 = vmatprep.subr.mxu0 0.0
      %4541 = vmatpush1.msra.mxu0 0.0
      %4542 = vmatprep.subr.mxu0 0.0
      %4543 = vmatpush1.msra.mxu0 0.0
      %4544 = vmatprep.subr.mxu0 0.0
      %4545 = vmatpush1.msra.mxu0 0.0
      %4546 = vmatprep.subr.mxu0 0.0
      %4547 = vmatpush1.msra.mxu0 0.0
      %4548 = vmatprep.subr.mxu0 0.0
      %4549 = vmatpush1.msra.mxu0 0.0
      %4550 = vmatprep.subr.mxu0 0.0
      %4551 = vmatpush1.msra.mxu0 0.0
      %4552 = vmatprep.subr.mxu0 0.0
      %4553 = vmatpush1.msra.mxu0 0.0
      %4554 = vmatprep.subr.mxu0 0.0
      %4555 = vmatpush1.msra.mxu0 0.0
      %4556 = vmatprep.subr.mxu0 0.0
      %4557 = vmatpush1.msra.mxu0 0.0
      %4558 = vmatprep.subr.mxu0 0.0
      %4559 = vmatpush1.msra.mxu0 0.0
      %4560 = vmatprep.subr.mxu0 0.0
      %4561 = vmatpush1.msra.mxu0 0.0
      %4562 = vmatprep.subr.mxu0 0.0
      %4563 = vmatpush1.msra.mxu0 0.0
      %4564 = vmatprep.subr.mxu0 0.0
      %4565 = vmatpush1.msra.mxu0 0.0
      %4566 = vmatprep.subr.mxu0 0.0
      %4567 = vmatpush1.msra.mxu0 0.0
      %4568 = vmatprep.subr.mxu0 0.0
      %4569 = vmatpush1.msra.mxu0 0.0
      %4570 = vmatprep.mubr.f32.mxu0 0.0
      %v4571 = vand.u32 %v156, 4294901760
      %4572 = vmatmul.mubr.f32.gmra.mrb[0].mxu0 %v4571
      %v4573 = vpop.f32.mrb[0].mxu0
      %v4574 = vadd.f32 %v4343, %v4573
      %v4575 = vpop.f32.mrb[0].mxu0
      %4576 = vmatprep.mubr.f32.mxu0 0.0
      %v4577 = vand.u32 %v163, 4294901760
      %4578 = vmatmul.mubr.f32.gmra.mrb[0].mxu0 %v4577
      %v4579 = vpop.f32.mrb[0].mxu0
      %v4580 = vadd.f32 %v4353, %v4579
      %v4581 = vpop.f32.mrb[0].mxu0
      %4582 = vmatprep.mubr.f32.mxu0 0.0
      %v4583 = vand.u32 %v170, 4294901760
      %4584 = vmatmul.mubr.f32.gmra.mrb[0].mxu0 %v4583
      %v4585 = vpop.f32.mrb[0].mxu0
      %v4586 = vadd.f32 %v4363, %v4585
      %v4587 = vpop.f32.mrb[0].mxu0
      %4588 = vmatprep.mubr.f32.mxu0 0.0
      %v4589 = vand.u32 %v177, 4294901760
      %4590 = vmatmul.mubr.f32.gmra.mrb[0].mxu0 %v4589
      %v4591 = vpop.f32.mrb[0].mxu0
      %v4592 = vadd.f32 %v4373, %v4591
      %v4593 = vpop.f32.mrb[0].mxu0
      %4594 = vmatprep.mubr.f32.mxu0 0.0
      %v4595 = vand.u32 %v184, 4294901760
      %4596 = vmatmul.mubr.f32.gmra.mrb[0].mxu0 %v4595
      %v4597 = vpop.f32.mrb[0].mxu0
      %v4598 = vadd.f32 %v4383, %v4597
      %v4599 = vpop.f32.mrb[0].mxu0
      %4600 = vmatprep.mubr.f32.mxu0 0.0
      %v4601 = vand.u32 %v191, 4294901760
      %4602 = vmatmul.mubr.f32.gmra.mrb[0].mxu0 %v4601
      %v4603 = vpop.f32.mrb[0].mxu0
      %v4604 = vadd.f32 %v4393, %v4603
      %v4605 = vpop.f32.mrb[0].mxu0
      %4606 = vmatprep.mubr.f32.mxu0 0.0
      %v4607 = vand.u32 %v198, 4294901760
      %4608 = vmatmul.mubr.f32.gmra.mrb[0].mxu0 %v4607
      %v4609 = vpop.f32.mrb[0].mxu0
      %v4610 = vadd.f32 %v4403, %v4609
      %v4611 = vpop.f32.mrb[0].mxu0
      %4612 = vmatprep.mubr.f32.mxu0 0.0
      %v4613 = vand.u32 %v205, 4294901760
      %4614 = vmatmul.mubr.f32.gmra.mrb[0].mxu0 %v4613
      %v4615 = vpop.f32.mrb[0].mxu0
      %v4616 = vadd.f32 %v4413, %v4615
      %v4617 = vpop.f32.mrb[0].mxu0
      %4618 = vmatprep.mubr.f32.mxu0 0.0
      %v4619 = vand.u32 %v212, 4294901760
      %4620 = vmatmul.mubr.f32.gmra.mrb[0].mxu0 %v4619
      %v4621 = vpop.f32.mrb[0].mxu0
      %v4622 = vadd.f32 %v4423, %v4621
      %v4623 = vpop.f32.mrb[0].mxu0
      %4624 = vdwg.mxu0
      %4625 = vmatprep.subr.mxu0 0.0
      %v4626 = vand.u32 %v309, 4294901760
      %v4627 = vsub.f32 %v309, %v4626
      %4628 = vmatpush1.msra.mxu0 %v4627
      %4629 = vmatprep.subr.mxu0 0.0
      %v4630 = vand.u32 %v310, 4294901760
      %v4631 = vsub.f32 %v310, %v4630
      %4632 = vmatpush1.msra.mxu0 %v4631
      %4633 = vmatprep.subr.mxu0 0.0
      %v4634 = vand.u32 %v311, 4294901760
      %v4635 = vsub.f32 %v311, %v4634
      %4636 = vmatpush1.msra.mxu0 %v4635
      %4637 = vmatprep.subr.mxu0 0.0
      %v4638 = vand.u32 %v312, 4294901760
      %v4639 = vsub.f32 %v312, %v4638
      %4640 = vmatpush1.msra.mxu0 %v4639
      %4641 = vmatprep.subr.mxu0 0.0
      %v4642 = vand.u32 %v313, 4294901760
      %v4643 = vsub.f32 %v313, %v4642
      %4644 = vmatpush1.msra.mxu0 %v4643
      %4645 = vmatprep.subr.mxu0 0.0
      %v4646 = vand.u32 %v314, 4294901760
      %v4647 = vsub.f32 %v314, %v4646
      %4648 = vmatpush1.msra.mxu0 %v4647
      %4649 = vmatprep.subr.mxu0 0.0
      %v4650 = vand.u32 %v315, 4294901760
      %v4651 = vsub.f32 %v315, %v4650
      %4652 = vmatpush1.msra.mxu0 %v4651
      %4653 = vmatprep.subr.mxu0 0.0
      %v4654 = vand.u32 %v316, 4294901760
      %v4655 = vsub.f32 %v316, %v4654
      %4656 = vmatpush1.msra.mxu0 %v4655
      %4657 = vmatprep.subr.mxu0 0.0
      %v4658 = vand.u32 %v317, 4294901760
      %v4659 = vsub.f32 %v317, %v4658
      %4660 = vmatpush1.msra.mxu0 %v4659
      %4661 = vmatprep.subr.mxu0 0.0
      %v4662 = vand.u32 %v318, 4294901760
      %v4663 = vsub.f32 %v318, %v4662
      %4664 = vmatpush1.msra.mxu0 %v4663
      %4665 = vmatprep.subr.mxu0 0.0
      %v4666 = vand.u32 %v319, 4294901760
      %v4667 = vsub.f32 %v319, %v4666
      %4668 = vmatpush1.msra.mxu0 %v4667
      %4669 = vmatprep.subr.mxu0 0.0
      %v4670 = vand.u32 %v320, 4294901760
      %v4671 = vsub.f32 %v320, %v4670
      %4672 = vmatpush1.msra.mxu0 %v4671
      %4673 = vmatprep.subr.mxu0 0.0
      %v4674 = vand.u32 %v321, 4294901760
      %v4675 = vsub.f32 %v321, %v4674
      %4676 = vmatpush1.msra.mxu0 %v4675
      %4677 = vmatprep.subr.mxu0 0.0
      %v4678 = vand.u32 %v322, 4294901760
      %v4679 = vsub.f32 %v322, %v4678
      %4680 = vmatpush1.msra.mxu0 %v4679
      %4681 = vmatprep.subr.mxu0 0.0
      %v4682 = vand.u32 %v323, 4294901760
      %v4683 = vsub.f32 %v323, %v4682
      %4684 = vmatpush1.msra.mxu0 %v4683
      %4685 = vmatprep.subr.mxu0 0.0
      %v4686 = vand.u32 %v324, 4294901760
      %v4687 = vsub.f32 %v324, %v4686
      %4688 = vmatpush1.msra.mxu0 %v4687
      %4689 = vmatprep.subr.mxu0 0.0
      %4690 = vmatpush1.msra.mxu0 0.0
      %4691 = vmatprep.subr.mxu0 0.0
      %4692 = vmatpush1.msra.mxu0 0.0
      %4693 = vmatprep.subr.mxu0 0.0
      %4694 = vmatpush1.msra.mxu0 0.0
      %4695 = vmatprep.subr.mxu0 0.0
      %4696 = vmatpush1.msra.mxu0 0.0
      %4697 = vmatprep.subr.mxu0 0.0
      %4698 = vmatpush1.msra.mxu0 0.0
      %4699 = vmatprep.subr.mxu0 0.0
      %4700 = vmatpush1.msra.mxu0 0.0
      %4701 = vmatprep.subr.mxu0 0.0
      %4702 = vmatpush1.msra.mxu0 0.0
      %4703 = vmatprep.subr.mxu0 0.0
      %4704 = vmatpush1.msra.mxu0 0.0
      %4705 = vmatprep.subr.mxu0 0.0
      %4706 = vmatpush1.msra.mxu0 0.0
      %4707 = vmatprep.subr.mxu0 0.0
      %4708 = vmatpush1.msra.mxu0 0.0
      %4709 = vmatprep.subr.mxu0 0.0
      %4710 = vmatpush1.msra.mxu0 0.0
      %4711 = vmatprep.subr.mxu0 0.0
      %4712 = vmatpush1.msra.mxu0 0.0
      %4713 = vmatprep.subr.mxu0 0.0
      %4714 = vmatpush1.msra.mxu0 0.0
      %4715 = vmatprep.subr.mxu0 0.0
      %4716 = vmatpush1.msra.mxu0 0.0
      %4717 = vmatprep.subr.mxu0 0.0
      %4718 = vmatpush1.msra.mxu0 0.0
      %4719 = vmatprep.subr.mxu0 0.0
      %4720 = vmatpush1.msra.mxu0 0.0
      %4721 = vmatprep.mubr.f32.mxu0 0.0
      %v4722 = vand.u32 %v156, 4294901760
      %v4723 = vsub.f32 %v156, %v4722
      %4724 = vmatmul.mubr.f32.gmra.mrb[0].mxu0 %v4723
      %v4725 = vpop.f32.mrb[0].mxu0
      %v4726 = vadd.f32 %v4574, %v4725
      %v4727 = vpop.f32.mrb[0].mxu0
      %4728 = vmatprep.mubr.f32.mxu0 0.0
      %v4729 = vand.u32 %v163, 4294901760
      %v4730 = vsub.f32 %v163, %v4729
      %4731 = vmatmul.mubr.f32.gmra.mrb[0].mxu0 %v4730
      %v4732 = vpop.f32.mrb[0].mxu0
      %v4733 = vadd.f32 %v4580, %v4732
      %v4734 = vpop.f32.mrb[0].mxu0
      %4735 = vmatprep.mubr.f32.mxu0 0.0
      %v4736 = vand.u32 %v170, 4294901760
      %v4737 = vsub.f32 %v170, %v4736
      %4738 = vmatmul.mubr.f32.gmra.mrb[0].mxu0 %v4737
      %v4739 = vpop.f32.mrb[0].mxu0
      %v4740 = vadd.f32 %v4586, %v4739
      %v4741 = vpop.f32.mrb[0].mxu0
      %4742 = vmatprep.mubr.f32.mxu0 0.0
      %v4743 = vand.u32 %v177, 4294901760
      %v4744 = vsub.f32 %v177, %v4743
      %4745 = vmatmul.mubr.f32.gmra.mrb[0].mxu0 %v4744
      %v4746 = vpop.f32.mrb[0].mxu0
      %v4747 = vadd.f32 %v4592, %v4746
      %v4748 = vpop.f32.mrb[0].mxu0
      %4749 = vmatprep.mubr.f32.mxu0 0.0
      %v4750 = vand.u32 %v184, 4294901760
      %v4751 = vsub.f32 %v184, %v4750
      %4752 = vmatmul.mubr.f32.gmra.mrb[0].mxu0 %v4751
      %v4753 = vpop.f32.mrb[0].mxu0
      %v4754 = vadd.f32 %v4598, %v4753
      %v4755 = vpop.f32.mrb[0].mxu0
      %4756 = vmatprep.mubr.f32.mxu0 0.0
      %v4757 = vand.u32 %v191, 4294901760
      %v4758 = vsub.f32 %v191, %v4757
      %4759 = vmatmul.mubr.f32.gmra.mrb[0].mxu0 %v4758
      %v4760 = vpop.f32.mrb[0].mxu0
      %v4761 = vadd.f32 %v4604, %v4760
      %v4762 = vpop.f32.mrb[0].mxu0
      %4763 = vmatprep.mubr.f32.mxu0 0.0
      %v4764 = vand.u32 %v198, 4294901760
      %v4765 = vsub.f32 %v198, %v4764
      %4766 = vmatmul.mubr.f32.gmra.mrb[0].mxu0 %v4765
      %v4767 = vpop.f32.mrb[0].mxu0
      %v4768 = vadd.f32 %v4610, %v4767
      %v4769 = vpop.f32.mrb[0].mxu0
      %4770 = vmatprep.mubr.f32.mxu0 0.0
      %v4771 = vand.u32 %v205, 4294901760
      %v4772 = vsub.f32 %v205, %v4771
      %4773 = vmatmul.mubr.f32.gmra.mrb[0].mxu0 %v4772
      %v4774 = vpop.f32.mrb[0].mxu0
      %v4775 = vadd.f32 %v4616, %v4774
      %v4776 = vpop.f32.mrb[0].mxu0
      %4777 = vmatprep.mubr.f32.mxu0 0.0
      %v4778 = vand.u32 %v212, 4294901760
      %v4779 = vsub.f32 %v212, %v4778
      %4780 = vmatmul.mubr.f32.gmra.mrb[0].mxu0 %v4779
      %v4781 = vpop.f32.mrb[0].mxu0
      %v4782 = vadd.f32 %v4622, %v4781
      %v4783 = vpop.f32.mrb[0].mxu0
      %4784 = vdwg.mxu0
      %4785 = vmatprep.subr.mxu0 0.0
      %v4786 = vand.u32 %v309, 4294901760
      %4787 = vmatpush1.msra.mxu0 %v4786
      %4788 = vmatprep.subr.mxu0 0.0
      %v4789 = vand.u32 %v310, 4294901760
      %4790 = vmatpush1.msra.mxu0 %v4789
      %4791 = vmatprep.subr.mxu0 0.0
      %v4792 = vand.u32 %v311, 4294901760
      %4793 = vmatpush1.msra.mxu0 %v4792
      %4794 = vmatprep.subr.mxu0 0.0
      %v4795 = vand.u32 %v312, 4294901760
      %4796 = vmatpush1.msra.mxu0 %v4795
      %4797 = vmatprep.subr.mxu0 0.0
      %v4798 = vand.u32 %v313, 4294901760
      %4799 = vmatpush1.msra.mxu0 %v4798
      %4800 = vmatprep.subr.mxu0 0.0
      %v4801 = vand.u32 %v314, 4294901760
      %4802 = vmatpush1.msra.mxu0 %v4801
      %4803 = vmatprep.subr.mxu0 0.0
      %v4804 = vand.u32 %v315, 4294901760
      %4805 = vmatpush1.msra.mxu0 %v4804
      %4806 = vmatprep.subr.mxu0 0.0
      %v4807 = vand.u32 %v316, 4294901760
      %4808 = vmatpush1.msra.mxu0 %v4807
      %4809 = vmatprep.subr.mxu0 0.0
      %v4810 = vand.u32 %v317, 4294901760
      %4811 = vmatpush1.msra.mxu0 %v4810
      %4812 = vmatprep.subr.mxu0 0.0
      %v4813 = vand.u32 %v318, 4294901760
      %4814 = vmatpush1.msra.mxu0 %v4813
      %4815 = vmatprep.subr.mxu0 0.0
      %v4816 = vand.u32 %v319, 4294901760
      %4817 = vmatpush1.msra.mxu0 %v4816
      %4818 = vmatprep.subr.mxu0 0.0
      %v4819 = vand.u32 %v320, 4294901760
      %4820 = vmatpush1.msra.mxu0 %v4819
      %4821 = vmatprep.subr.mxu0 0.0
      %v4822 = vand.u32 %v321, 4294901760
      %4823 = vmatpush1.msra.mxu0 %v4822
      %4824 = vmatprep.subr.mxu0 0.0
      %v4825 = vand.u32 %v322, 4294901760
      %4826 = vmatpush1.msra.mxu0 %v4825
      %4827 = vmatprep.subr.mxu0 0.0
      %v4828 = vand.u32 %v323, 4294901760
      %4829 = vmatpush1.msra.mxu0 %v4828
      %4830 = vmatprep.subr.mxu0 0.0
      %v4831 = vand.u32 %v324, 4294901760
      %4832 = vmatpush1.msra.mxu0 %v4831
      %4833 = vmatprep.subr.mxu0 0.0
      %4834 = vmatpush1.msra.mxu0 0.0
      %4835 = vmatprep.subr.mxu0 0.0
      %4836 = vmatpush1.msra.mxu0 0.0
      %4837 = vmatprep.subr.mxu0 0.0
      %4838 = vmatpush1.msra.mxu0 0.0
      %4839 = vmatprep.subr.mxu0 0.0
      %4840 = vmatpush1.msra.mxu0 0.0
      %4841 = vmatprep.subr.mxu0 0.0
      %4842 = vmatpush1.msra.mxu0 0.0
      %4843 = vmatprep.subr.mxu0 0.0
      %4844 = vmatpush1.msra.mxu0 0.0
      %4845 = vmatprep.subr.mxu0 0.0
      %4846 = vmatpush1.msra.mxu0 0.0
      %4847 = vmatprep.subr.mxu0 0.0
      %4848 = vmatpush1.msra.mxu0 0.0
      %4849 = vmatprep.subr.mxu0 0.0
      %4850 = vmatpush1.msra.mxu0 0.0
      %4851 = vmatprep.subr.mxu0 0.0
      %4852 = vmatpush1.msra.mxu0 0.0
      %4853 = vmatprep.subr.mxu0 0.0
      %4854 = vmatpush1.msra.mxu0 0.0
      %4855 = vmatprep.subr.mxu0 0.0
      %4856 = vmatpush1.msra.mxu0 0.0
      %4857 = vmatprep.subr.mxu0 0.0
      %4858 = vmatpush1.msra.mxu0 0.0
      %4859 = vmatprep.subr.mxu0 0.0
      %4860 = vmatpush1.msra.mxu0 0.0
      %4861 = vmatprep.subr.mxu0 0.0
      %4862 = vmatpush1.msra.mxu0 0.0
      %4863 = vmatprep.subr.mxu0 0.0
      %4864 = vmatpush1.msra.mxu0 0.0
      %4865 = vmatprep.mubr.f32.mxu0 0.0
      %v4866 = vand.u32 %v156, 4294901760
      %v4867 = vsub.f32 %v156, %v4866
      %v4868 = vand.u32 %v4867, 4294901760
      %4869 = vmatmul.mubr.f32.gmra.mrb[0].mxu0 %v4868
      %v4870 = vpop.f32.mrb[0].mxu0
      %v4871 = vadd.f32 %v4726, %v4870
      %v4872 = vpop.f32.mrb[0].mxu0
      %4873 = vmatprep.mubr.f32.mxu0 0.0
      %v4874 = vand.u32 %v163, 4294901760
      %v4875 = vsub.f32 %v163, %v4874
      %v4876 = vand.u32 %v4875, 4294901760
      %4877 = vmatmul.mubr.f32.gmra.mrb[0].mxu0 %v4876
      %v4878 = vpop.f32.mrb[0].mxu0
      %v4879 = vadd.f32 %v4733, %v4878
      %v4880 = vpop.f32.mrb[0].mxu0
      %4881 = vmatprep.mubr.f32.mxu0 0.0
      %v4882 = vand.u32 %v170, 4294901760
      %v4883 = vsub.f32 %v170, %v4882
      %v4884 = vand.u32 %v4883, 4294901760
      %4885 = vmatmul.mubr.f32.gmra.mrb[0].mxu0 %v4884
      %v4886 = vpop.f32.mrb[0].mxu0
      %v4887 = vadd.f32 %v4740, %v4886
      %v4888 = vpop.f32.mrb[0].mxu0
      %4889 = vmatprep.mubr.f32.mxu0 0.0
      %v4890 = vand.u32 %v177, 4294901760
      %v4891 = vsub.f32 %v177, %v4890
      %v4892 = vand.u32 %v4891, 4294901760
      %4893 = vmatmul.mubr.f32.gmra.mrb[0].mxu0 %v4892
      %v4894 = vpop.f32.mrb[0].mxu0
      %v4895 = vadd.f32 %v4747, %v4894
      %v4896 = vpop.f32.mrb[0].mxu0
      %4897 = vmatprep.mubr.f32.mxu0 0.0
      %v4898 = vand.u32 %v184, 4294901760
      %v4899 = vsub.f32 %v184, %v4898
      %v4900 = vand.u32 %v4899, 4294901760
      %4901 = vmatmul.mubr.f32.gmra.mrb[0].mxu0 %v4900
      %v4902 = vpop.f32.mrb[0].mxu0
      %v4903 = vadd.f32 %v4754, %v4902
      %v4904 = vpop.f32.mrb[0].mxu0
      %4905 = vmatprep.mubr.f32.mxu0 0.0
      %v4906 = vand.u32 %v191, 4294901760
      %v4907 = vsub.f32 %v191, %v4906
      %v4908 = vand.u32 %v4907, 4294901760
      %4909 = vmatmul.mubr.f32.gmra.mrb[0].mxu0 %v4908
      %v4910 = vpop.f32.mrb[0].mxu0
      %v4911 = vadd.f32 %v4761, %v4910
      %v4912 = vpop.f32.mrb[0].mxu0
      %4913 = vmatprep.mubr.f32.mxu0 0.0
      %v4914 = vand.u32 %v198, 4294901760
      %v4915 = vsub.f32 %v198, %v4914
      %v4916 = vand.u32 %v4915, 4294901760
      %4917 = vmatmul.mubr.f32.gmra.mrb[0].mxu0 %v4916
      %v4918 = vpop.f32.mrb[0].mxu0
      %v4919 = vadd.f32 %v4768, %v4918
      %v4920 = vpop.f32.mrb[0].mxu0
      %4921 = vmatprep.mubr.f32.mxu0 0.0
      %v4922 = vand.u32 %v205, 4294901760
      %v4923 = vsub.f32 %v205, %v4922
      %v4924 = vand.u32 %v4923, 4294901760
      %4925 = vmatmul.mubr.f32.gmra.mrb[0].mxu0 %v4924
      %v4926 = vpop.f32.mrb[0].mxu0
      %v4927 = vadd.f32 %v4775, %v4926
      %v4928 = vpop.f32.mrb[0].mxu0
      %4929 = vmatprep.mubr.f32.mxu0 0.0
      %v4930 = vand.u32 %v212, 4294901760
      %v4931 = vsub.f32 %v212, %v4930
      %v4932 = vand.u32 %v4931, 4294901760
      %4933 = vmatmul.mubr.f32.gmra.mrb[0].mxu0 %v4932
      %v4934 = vpop.f32.mrb[0].mxu0
      %v4935 = vadd.f32 %v4782, %v4934
      %v4936 = vpop.f32.mrb[0].mxu0
      %4937 = vdwg.mxu0
      %4938 = vmatprep.subr.mxu0 0.0
      %v4939 = vand.u32 %v309, 4294901760
      %v4940 = vsub.f32 %v309, %v4939
      %v4941 = vand.u32 %v4940, 4294901760
      %4942 = vmatpush1.msra.mxu0 %v4941
      %4943 = vmatprep.subr.mxu0 0.0
      %v4944 = vand.u32 %v310, 4294901760
      %v4945 = vsub.f32 %v310, %v4944
      %v4946 = vand.u32 %v4945, 4294901760
      %4947 = vmatpush1.msra.mxu0 %v4946
      %4948 = vmatprep.subr.mxu0 0.0
      %v4949 = vand.u32 %v311, 4294901760
      %v4950 = vsub.f32 %v311, %v4949
      %v4951 = vand.u32 %v4950, 4294901760
      %4952 = vmatpush1.msra.mxu0 %v4951
      %4953 = vmatprep.subr.mxu0 0.0
      %v4954 = vand.u32 %v312, 4294901760
      %v4955 = vsub.f32 %v312, %v4954
      %v4956 = vand.u32 %v4955, 4294901760
      %4957 = vmatpush1.msra.mxu0 %v4956
      %4958 = vmatprep.subr.mxu0 0.0
      %v4959 = vand.u32 %v313, 4294901760
      %v4960 = vsub.f32 %v313, %v4959
      %v4961 = vand.u32 %v4960, 4294901760
      %4962 = vmatpush1.msra.mxu0 %v4961
      %4963 = vmatprep.subr.mxu0 0.0
      %v4964 = vand.u32 %v314, 4294901760
      %v4965 = vsub.f32 %v314, %v4964
      %v4966 = vand.u32 %v4965, 4294901760
      %4967 = vmatpush1.msra.mxu0 %v4966
      %4968 = vmatprep.subr.mxu0 0.0
      %v4969 = vand.u32 %v315, 4294901760
      %v4970 = vsub.f32 %v315, %v4969
      %v4971 = vand.u32 %v4970, 4294901760
      %4972 = vmatpush1.msra.mxu0 %v4971
      %4973 = vmatprep.subr.mxu0 0.0
      %v4974 = vand.u32 %v316, 4294901760
      %v4975 = vsub.f32 %v316, %v4974
      %v4976 = vand.u32 %v4975, 4294901760
      %4977 = vmatpush1.msra.mxu0 %v4976
      %4978 = vmatprep.subr.mxu0 0.0
      %v4979 = vand.u32 %v317, 4294901760
      %v4980 = vsub.f32 %v317, %v4979
      %v4981 = vand.u32 %v4980, 4294901760
      %4982 = vmatpush1.msra.mxu0 %v4981
      %4983 = vmatprep.subr.mxu0 0.0
      %v4984 = vand.u32 %v318, 4294901760
      %v4985 = vsub.f32 %v318, %v4984
      %v4986 = vand.u32 %v4985, 4294901760
      %4987 = vmatpush1.msra.mxu0 %v4986
      %4988 = vmatprep.subr.mxu0 0.0
      %v4989 = vand.u32 %v319, 4294901760
      %v4990 = vsub.f32 %v319, %v4989
      %v4991 = vand.u32 %v4990, 4294901760
      %4992 = vmatpush1.msra.mxu0 %v4991
      %4993 = vmatprep.subr.mxu0 0.0
      %v4994 = vand.u32 %v320, 4294901760
      %v4995 = vsub.f32 %v320, %v4994
      %v4996 = vand.u32 %v4995, 4294901760
      %4997 = vmatpush1.msra.mxu0 %v4996
      %4998 = vmatprep.subr.mxu0 0.0
      %v4999 = vand.u32 %v321, 4294901760
      %v5000 = vsub.f32 %v321, %v4999
      %v5001 = vand.u32 %v5000, 4294901760
      %5002 = vmatpush1.msra.mxu0 %v5001
      %5003 = vmatprep.subr.mxu0 0.0
      %v5004 = vand.u32 %v322, 4294901760
      %v5005 = vsub.f32 %v322, %v5004
      %v5006 = vand.u32 %v5005, 4294901760
      %5007 = vmatpush1.msra.mxu0 %v5006
      %5008 = vmatprep.subr.mxu0 0.0
      %v5009 = vand.u32 %v323, 4294901760
      %v5010 = vsub.f32 %v323, %v5009
      %v5011 = vand.u32 %v5010, 4294901760
      %5012 = vmatpush1.msra.mxu0 %v5011
      %5013 = vmatprep.subr.mxu0 0.0
      %v5014 = vand.u32 %v324, 4294901760
      %v5015 = vsub.f32 %v324, %v5014
      %v5016 = vand.u32 %v5015, 4294901760
      %5017 = vmatpush1.msra.mxu0 %v5016
      %5018 = vmatprep.subr.mxu0 0.0
      %5019 = vmatpush1.msra.mxu0 0.0
      %5020 = vmatprep.subr.mxu0 0.0
      %5021 = vmatpush1.msra.mxu0 0.0
      %5022 = vmatprep.subr.mxu0 0.0
      %5023 = vmatpush1.msra.mxu0 0.0
      %5024 = vmatprep.subr.mxu0 0.0
      %5025 = vmatpush1.msra.mxu0 0.0
      %5026 = vmatprep.subr.mxu0 0.0
      %5027 = vmatpush1.msra.mxu0 0.0
      %5028 = vmatprep.subr.mxu0 0.0
      %5029 = vmatpush1.msra.mxu0 0.0
      %5030 = vmatprep.subr.mxu0 0.0
      %5031 = vmatpush1.msra.mxu0 0.0
      %5032 = vmatprep.subr.mxu0 0.0
      %5033 = vmatpush1.msra.mxu0 0.0
      %5034 = vmatprep.subr.mxu0 0.0
      %5035 = vmatpush1.msra.mxu0 0.0
      %5036 = vmatprep.subr.mxu0 0.0
      %5037 = vmatpush1.msra.mxu0 0.0
      %5038 = vmatprep.subr.mxu0 0.0
      %5039 = vmatpush1.msra.mxu0 0.0
      %5040 = vmatprep.subr.mxu0 0.0
      %5041 = vmatpush1.msra.mxu0 0.0
      %5042 = vmatprep.subr.mxu0 0.0
      %5043 = vmatpush1.msra.mxu0 0.0
      %5044 = vmatprep.subr.mxu0 0.0
      %5045 = vmatpush1.msra.mxu0 0.0
      %5046 = vmatprep.subr.mxu0 0.0
      %5047 = vmatpush1.msra.mxu0 0.0
      %5048 = vmatprep.subr.mxu0 0.0
      %5049 = vmatpush1.msra.mxu0 0.0
      %5050 = vmatprep.mubr.f32.mxu0 0.0
      %v5051 = vand.u32 %v156, 4294901760
      %5052 = vmatmul.mubr.f32.gmra.mrb[0].mxu0 %v5051
      %v5053 = vpop.f32.mrb[0].mxu0
      %v5054 = vadd.f32 %v4871, %v5053
      %v5055 = vpop.f32.mrb[0].mxu0
      %5056 = vmatprep.mubr.f32.mxu0 0.0
      %v5057 = vand.u32 %v163, 4294901760
      %5058 = vmatmul.mubr.f32.gmra.mrb[0].mxu0 %v5057
      %v5059 = vpop.f32.mrb[0].mxu0
      %v5060 = vadd.f32 %v4879, %v5059
      %v5061 = vpop.f32.mrb[0].mxu0
      %5062 = vmatprep.mubr.f32.mxu0 0.0
      %v5063 = vand.u32 %v170, 4294901760
      %5064 = vmatmul.mubr.f32.gmra.mrb[0].mxu0 %v5063
      %v5065 = vpop.f32.mrb[0].mxu0
      %v5066 = vadd.f32 %v4887, %v5065
      %v5067 = vpop.f32.mrb[0].mxu0
      %5068 = vmatprep.mubr.f32.mxu0 0.0
      %v5069 = vand.u32 %v177, 4294901760
      %5070 = vmatmul.mubr.f32.gmra.mrb[0].mxu0 %v5069
      %v5071 = vpop.f32.mrb[0].mxu0
      %v5072 = vadd.f32 %v4895, %v5071
      %v5073 = vpop.f32.mrb[0].mxu0
      %5074 = vmatprep.mubr.f32.mxu0 0.0
      %v5075 = vand.u32 %v184, 4294901760
      %5076 = vmatmul.mubr.f32.gmra.mrb[0].mxu0 %v5075
      %v5077 = vpop.f32.mrb[0].mxu0
      %v5078 = vadd.f32 %v4903, %v5077
      %v5079 = vpop.f32.mrb[0].mxu0
      %5080 = vmatprep.mubr.f32.mxu0 0.0
      %v5081 = vand.u32 %v191, 4294901760
      %5082 = vmatmul.mubr.f32.gmra.mrb[0].mxu0 %v5081
      %v5083 = vpop.f32.mrb[0].mxu0
      %v5084 = vadd.f32 %v4911, %v5083
      %v5085 = vpop.f32.mrb[0].mxu0
      %5086 = vmatprep.mubr.f32.mxu0 0.0
      %v5087 = vand.u32 %v198, 4294901760
      %5088 = vmatmul.mubr.f32.gmra.mrb[0].mxu0 %v5087
      %v5089 = vpop.f32.mrb[0].mxu0
      %v5090 = vadd.f32 %v4919, %v5089
      %v5091 = vpop.f32.mrb[0].mxu0
      %5092 = vmatprep.mubr.f32.mxu0 0.0
      %v5093 = vand.u32 %v205, 4294901760
      %5094 = vmatmul.mubr.f32.gmra.mrb[0].mxu0 %v5093
      %v5095 = vpop.f32.mrb[0].mxu0
      %v5096 = vadd.f32 %v4927, %v5095
      %v5097 = vpop.f32.mrb[0].mxu0
      %5098 = vmatprep.mubr.f32.mxu0 0.0
      %v5099 = vand.u32 %v212, 4294901760
      %5100 = vmatmul.mubr.f32.gmra.mrb[0].mxu0 %v5099
      %v5101 = vpop.f32.mrb[0].mxu0
      %v5102 = vadd.f32 %v4935, %v5101
      %v5103 = vpop.f32.mrb[0].mxu0
      %5104 = vdwg.mxu0
      %5105 = vmatprep.subr.mxu0 0.0
      %v5106 = vand.u32 %v309, 4294901760
      %5107 = vmatpush1.msra.mxu0 %v5106
      %5108 = vmatprep.subr.mxu0 0.0
      %v5109 = vand.u32 %v310, 4294901760
      %5110 = vmatpush1.msra.mxu0 %v5109
      %5111 = vmatprep.subr.mxu0 0.0
      %v5112 = vand.u32 %v311, 4294901760
      %5113 = vmatpush1.msra.mxu0 %v5112
      %5114 = vmatprep.subr.mxu0 0.0
      %v5115 = vand.u32 %v312, 4294901760
      %5116 = vmatpush1.msra.mxu0 %v5115
      %5117 = vmatprep.subr.mxu0 0.0
      %v5118 = vand.u32 %v313, 4294901760
      %5119 = vmatpush1.msra.mxu0 %v5118
      %5120 = vmatprep.subr.mxu0 0.0
      %v5121 = vand.u32 %v314, 4294901760
      %5122 = vmatpush1.msra.mxu0 %v5121
      %5123 = vmatprep.subr.mxu0 0.0
      %v5124 = vand.u32 %v315, 4294901760
      %5125 = vmatpush1.msra.mxu0 %v5124
      %5126 = vmatprep.subr.mxu0 0.0
      %v5127 = vand.u32 %v316, 4294901760
      %5128 = vmatpush1.msra.mxu0 %v5127
      %5129 = vmatprep.subr.mxu0 0.0
      %v5130 = vand.u32 %v317, 4294901760
      %5131 = vmatpush1.msra.mxu0 %v5130
      %5132 = vmatprep.subr.mxu0 0.0
      %v5133 = vand.u32 %v318, 4294901760
      %5134 = vmatpush1.msra.mxu0 %v5133
      %5135 = vmatprep.subr.mxu0 0.0
      %v5136 = vand.u32 %v319, 4294901760
      %5137 = vmatpush1.msra.mxu0 %v5136
      %5138 = vmatprep.subr.mxu0 0.0
      %v5139 = vand.u32 %v320, 4294901760
      %5140 = vmatpush1.msra.mxu0 %v5139
      %5141 = vmatprep.subr.mxu0 0.0
      %v5142 = vand.u32 %v321, 4294901760
      %5143 = vmatpush1.msra.mxu0 %v5142
      %5144 = vmatprep.subr.mxu0 0.0
      %v5145 = vand.u32 %v322, 4294901760
      %5146 = vmatpush1.msra.mxu0 %v5145
      %5147 = vmatprep.subr.mxu0 0.0
      %v5148 = vand.u32 %v323, 4294901760
      %5149 = vmatpush1.msra.mxu0 %v5148
      %5150 = vmatprep.subr.mxu0 0.0
      %v5151 = vand.u32 %v324, 4294901760
      %5152 = vmatpush1.msra.mxu0 %v5151
      %5153 = vmatprep.subr.mxu0 0.0
      %5154 = vmatpush1.msra.mxu0 0.0
      %5155 = vmatprep.subr.mxu0 0.0
      %5156 = vmatpush1.msra.mxu0 0.0
      %5157 = vmatprep.subr.mxu0 0.0
      %5158 = vmatpush1.msra.mxu0 0.0
      %5159 = vmatprep.subr.mxu0 0.0
      %5160 = vmatpush1.msra.mxu0 0.0
      %5161 = vmatprep.subr.mxu0 0.0
      %5162 = vmatpush1.msra.mxu0 0.0
      %5163 = vmatprep.subr.mxu0 0.0
      %5164 = vmatpush1.msra.mxu0 0.0
      %5165 = vmatprep.subr.mxu0 0.0
      %5166 = vmatpush1.msra.mxu0 0.0
      %5167 = vmatprep.subr.mxu0 0.0
      %5168 = vmatpush1.msra.mxu0 0.0
      %5169 = vmatprep.subr.mxu0 0.0
      %5170 = vmatpush1.msra.mxu0 0.0
      %5171 = vmatprep.subr.mxu0 0.0
      %5172 = vmatpush1.msra.mxu0 0.0
      %5173 = vmatprep.subr.mxu0 0.0
      %5174 = vmatpush1.msra.mxu0 0.0
      %5175 = vmatprep.subr.mxu0 0.0
      %5176 = vmatpush1.msra.mxu0 0.0
      %5177 = vmatprep.subr.mxu0 0.0
      %5178 = vmatpush1.msra.mxu0 0.0
      %5179 = vmatprep.subr.mxu0 0.0
      %5180 = vmatpush1.msra.mxu0 0.0
      %5181 = vmatprep.subr.mxu0 0.0
      %5182 = vmatpush1.msra.mxu0 0.0
      %5183 = vmatprep.subr.mxu0 0.0
      %5184 = vmatpush1.msra.mxu0 0.0
      %5185 = vmatprep.mubr.f32.mxu0 0.0
      %v5186 = vand.u32 %v156, 4294901760
      %5187 = vmatmul.mubr.f32.gmra.mrb[0].mxu0 %v5186
      %v5188 = vpop.f32.mrb[0].mxu0
      %v5189 = vadd.f32 %v5054, %v5188
      %v5190 = vpop.f32.mrb[0].mxu0
      %5191 = vmatprep.mubr.f32.mxu0 0.0
      %v5192 = vand.u32 %v163, 4294901760
      %5193 = vmatmul.mubr.f32.gmra.mrb[0].mxu0 %v5192
      %v5194 = vpop.f32.mrb[0].mxu0
      %v5195 = vadd.f32 %v5060, %v5194
      %v5196 = vpop.f32.mrb[0].mxu0
      %5197 = vmatprep.mubr.f32.mxu0 0.0
      %v5198 = vand.u32 %v170, 4294901760
      %5199 = vmatmul.mubr.f32.gmra.mrb[0].mxu0 %v5198
      %v5200 = vpop.f32.mrb[0].mxu0
      %v5201 = vadd.f32 %v5066, %v5200
      %v5202 = vpop.f32.mrb[0].mxu0
      %5203 = vmatprep.mubr.f32.mxu0 0.0
      %v5204 = vand.u32 %v177, 4294901760
      %5205 = vmatmul.mubr.f32.gmra.mrb[0].mxu0 %v5204
      %v5206 = vpop.f32.mrb[0].mxu0
      %v5207 = vadd.f32 %v5072, %v5206
      %v5208 = vpop.f32.mrb[0].mxu0
      %5209 = vmatprep.mubr.f32.mxu0 0.0
      %v5210 = vand.u32 %v184, 4294901760
      %5211 = vmatmul.mubr.f32.gmra.mrb[0].mxu0 %v5210
      %v5212 = vpop.f32.mrb[0].mxu0
      %v5213 = vadd.f32 %v5078, %v5212
      %v5214 = vpop.f32.mrb[0].mxu0
      %5215 = vmatprep.mubr.f32.mxu0 0.0
      %v5216 = vand.u32 %v191, 4294901760
      %5217 = vmatmul.mubr.f32.gmra.mrb[0].mxu0 %v5216
      %v5218 = vpop.f32.mrb[0].mxu0
      %v5219 = vadd.f32 %v5084, %v5218
      %v5220 = vpop.f32.mrb[0].mxu0
      %5221 = vmatprep.mubr.f32.mxu0 0.0
      %v5222 = vand.u32 %v198, 4294901760
      %5223 = vmatmul.mubr.f32.gmra.mrb[0].mxu0 %v5222
      %v5224 = vpop.f32.mrb[0].mxu0
      %v5225 = vadd.f32 %v5090, %v5224
      %v5226 = vpop.f32.mrb[0].mxu0
      %5227 = vmatprep.mubr.f32.mxu0 0.0
      %v5228 = vand.u32 %v205, 4294901760
      %5229 = vmatmul.mubr.f32.gmra.mrb[0].mxu0 %v5228
      %v5230 = vpop.f32.mrb[0].mxu0
      %v5231 = vadd.f32 %v5096, %v5230
      %v5232 = vpop.f32.mrb[0].mxu0
      %5233 = vmatprep.mubr.f32.mxu0 0.0
      %v5234 = vand.u32 %v212, 4294901760
      %5235 = vmatmul.mubr.f32.gmra.mrb[0].mxu0 %v5234
      %v5236 = vpop.f32.mrb[0].mxu0
      %v5237 = vadd.f32 %v5102, %v5236
      %v5238 = vpop.f32.mrb[0].mxu0
      %5239 = vdwg.mxu0
      %vm5240 = vcmask 457728
      %5241 = vst.msk [vmem:[%s148] sm:$0xff] %vm5240, %v5189
      %5242 = vst.msk [vmem:[%s148 + $0x8] sm:$0xff] %vm5240, %v5195
      %5243 = vst.msk [vmem:[%s148 + $0x10] sm:$0xff] %vm5240, %v5201
      %5244 = vst.msk [vmem:[%s148 + $0x18] sm:$0xff] %vm5240, %v5207
      %5245 = vst.msk [vmem:[%s148 + $0x20] sm:$0xff] %vm5240, %v5213
      %5246 = vst.msk [vmem:[%s148 + $0x28] sm:$0xff] %vm5240, %v5219
      %5247 = vst.msk [vmem:[%s148 + $0x30] sm:$0xff] %vm5240, %v5225
      %5248 = vst.msk [vmem:[%s148 + $0x38] sm:$0xff] %vm5240, %v5231
      %5249 = vst.msk [vmem:[%s148 + $0x40] sm:$0xff] %vm5240, %v5237
      %s5250 = smul.u32 9, %s13
      %p5251 = scmp.lt.s32.totalorder %s5250, 17
      %s5252 = scalar_select %p5251, %s5250, 17
      %s5253 = smul.addr %s5252, 8
      %s5254 = scalar_lea.vmem %s2, %s5253
      // Predicated region
      $region29: #{tpu_custom_call.1} parent=27 // pred_check
        %p5255 = pneg %p78
      $region30: #{tpu_custom_call.1} parent=27 // pred_check_branch
        %5257 = sbr.rel (%p5255) target = $region32
      $region31: #{tpu_custom_call.1} parent=27 // pred_region
        %s5258 = smul.u32 9, %s13
      $region32: #{tpu_custom_call.1} parent=27 // pred_fallthru
        _
    $region28: #{tpu_custom_call.1} parent=5 // pred_fallthru
      _
    %p5259 = scmp.le.s32.totalorder 2, %s8
    // Predicated region
    $region33: #{tpu_custom_call.1} parent=5 // pred_check
      %p5260 = pneg %p5259
    $region34: #{tpu_custom_call.1} parent=5 // pred_check_branch
      %5262 = sbr.rel (%p5260) target = $region36
    $region35: #{tpu_custom_call.1} parent=5 // pred_region
      %s5263 = ssub.s32 %s8, 2
      // Predicated region
      $region37: #{tpu_custom_call.1} parent=35 // pred_check
        %p5264 = pneg %p84
      $region38: #{tpu_custom_call.1} parent=35 // pred_check_branch
        %5266 = sbr.rel (%p5264) target = $region40
      $region39: #{tpu_custom_call.1} parent=35 // pred_region
        %s5267 = smul.u32 9, %s14
        %p5268 = scmp.lt.s32.totalorder %s5267, 17
        %s5269 = scalar_select %p5268, %s5267, 17
        %s5270 = smul.addr %s5269, 8
        %s5271 = scalar_lea.vmem %s2, %s5270
      $region40: #{tpu_custom_call.1} parent=35 // pred_fallthru
        _
    $region36: #{tpu_custom_call.1} parent=5 // pred_fallthru
      _
  $region6: #{tpu_custom_call.1} parent=0 // loop_footer
    %s12 = sadd.s32 1, %s8
  $region7: #{tpu_custom_call.1} parent=0 // loop_footer_branch
    %7 = sbr.rel target = $region3
  $region8: #{tpu_custom_call.1} parent=0 // loop_exit
    _

</llo_original>
